<compile_context>
chip_gen: v6e
topology: v6e:2x2x1
jax: 0.10.0
libtpu: 0.0.40
codegen_flags: <defaults>
</compile_context>

<pallas_src>
import functools

import jax
import jax.numpy as jnp
from jax.experimental import pallas as pl
from jax.experimental.pallas import tpu as pltpu

INPUT_SIZE = 6      # len(cols)
HIDDEN_SIZE = 50
OUTPUT_SIZE = 6     # len(cols)
LAST_N = 10         # fc applied to out[:, -10:, :]
GATE_STRIDE = 128   # per-gate lane block (v6e/v7x friendly; on v5e a 256-wide layout with two
                    # gates per 128-lane block would avoid extra MXU passes over zero columns,
                    # but at B=2 the MXU cost is negligible either way)


# ----------------------------- Pallas kernel ------------------------------- #

def lstm_fused_kernel(x_ref, h0_ref, c0_ref, wih_ref, whh_ref, b_ref,
                      wfc_ref, bfc_ref, out_ref, hn_ref, cn_ref, hbuf,
                      *, seq_len, last_n, hidden_size, gate_stride):
    """Full LSTM recurrence + last-N Linear projection in a single invocation.

    x_ref   : (T*B, I)        time-major flattened input
    wih_ref : (I, 4*GS)       W_ih^T, gate k at columns [k*GS, k*GS + H), zero-padded
    whh_ref : (H, 4*GS)       W_hh^T, same layout
    b_ref   : (1, 4*GS)       b_ih + b_hh, same layout
    wfc_ref : (H, O), bfc_ref : (1, O)
    out_ref : (last_n*B, O)   time-major projected outputs for the last `last_n` steps
    hn_ref, cn_ref : (B, H)   final hidden / cell state
    hbuf    : VMEM scratch (last_n*B, H) staging hidden states for the fused FC
    """
    B = h0_ref.shape[0]
    H = hidden_size
    GS = gate_stride

    # Input projection for ALL timesteps in one MXU pass: (T*B, I) @ (I, 4*GS) + bias.
    gx = (jnp.dot(x_ref[...], wih_ref[...], preferred_element_type=jnp.float32)
          + b_ref[...])

    whh = whh_ref[...]
    h = h0_ref[...]
    c = c0_ref[...]
    start = seq_len - last_n

    # Fully unrolled recurrence (seq_len is a static Python int -> all slices/branches static).
    for t in range(seq_len):
        gates = gx[t * B:(t + 1) * B, :] + jnp.dot(
            h, whh, preferred_element_type=jnp.float32)          # (B, 4*GS)
        # Lane-tile-aligned gate slices (start at k*128), PyTorch gate order i, f, g, o.
        i = jax.nn.sigmoid(gates[:, 0 * GS:0 * GS + H])
        f = jax.nn.sigmoid(gates[:, 1 * GS:1 * GS + H])
        g = jnp.tanh(gates[:, 2 * GS:2 * GS + H])
        o = jax.nn.sigmoid(gates[:, 3 * GS:3 * GS + H])
        c = f * c + i * g
        h = o * jnp.tanh(c)
        if t >= start:                          # static condition (loop is unrolled)
            j = t - start
            hbuf[j * B:(j + 1) * B, :] = h      # stage hidden state for the fused FC

    hn_ref[...] = h
    cn_ref[...] = c
    # Fused Linear(H -> O) over the last `last_n` steps: one (last_n*B, H) @ (H, O) matmul.
    out_ref[...] = (jnp.dot(hbuf[...], wfc_ref[...],
                            preferred_element_type=jnp.float32) + bfc_ref[...])


# ------------------------------ JAX wrapper -------------------------------- #

def _pad_gate_weight_t(w, hidden, gate_stride):
    """(4H, K) PyTorch gate-stacked weight -> (K, 4*gate_stride) transposed; gate k occupies
    columns [k*gate_stride, k*gate_stride + hidden); padded columns are zero."""
    K = w.shape[1]
    wt = jnp.transpose(w)                                    # (K, 4H)
    out = jnp.zeros((K, 4 * gate_stride), w.dtype)
    for k in range(4):
        out = out.at[:, k * gate_stride:k * gate_stride + hidden].set(
            wt[:, k * hidden:(k + 1) * hidden])
    return out


def _pad_gate_bias(b_ih, b_hh, hidden, gate_stride):
    b = b_ih + b_hh                                          # (4H,)
    out = jnp.zeros((1, 4 * gate_stride), b.dtype)
    for k in range(4):
        out = out.at[0, k * gate_stride:k * gate_stride + hidden].set(
            b[k * hidden:(k + 1) * hidden])
    return out


@jax.jit
def lstm_model_backwards_forward(x, h0, c0, params):
    """x: (B, T, I) batch_first; h0/c0: (1, B, H).
    Returns (out (B, LAST_N, O), h_n (1, B, H), c_n (1, B, H))."""
    B, T, I = x.shape
    H = params["w_hh"].shape[1]
    O = params["w_fc"].shape[0]

    # Time-major flattening so the gx rows of step t are contiguous: (T*B, I).  Tiny relayout.
    x_flat = jnp.transpose(x, (1, 0, 2)).reshape(T * B, I)

    wih_p = _pad_gate_weight_t(params["w_ih"], H, GATE_STRIDE)   # (I, 4*GS)
    whh_p = _pad_gate_weight_t(params["w_hh"], H, GATE_STRIDE)   # (H, 4*GS)
    bias_p = _pad_gate_bias(params["b_ih"], params["b_hh"], H, GATE_STRIDE)
    wfc_t = jnp.transpose(params["w_fc"])                        # (H, O)
    bfc = params["b_fc"].reshape(1, O)

    kernel = functools.partial(
        lstm_fused_kernel, seq_len=T, last_n=LAST_N,
        hidden_size=H, gate_stride=GATE_STRIDE)

    # No grid: everything (inputs, weights, state, outputs) lives in VMEM for the whole call.
    out_flat, h_n, c_n = pl.pallas_call(
        kernel,
        out_shape=(jax.ShapeDtypeStruct((LAST_N * B, O), jnp.float32),
                   jax.ShapeDtypeStruct((B, H), jnp.float32),
                   jax.ShapeDtypeStruct((B, H), jnp.float32)),
        scratch_shapes=[pltpu.VMEM((LAST_N * B, H), jnp.float32)],
    )(x_flat, h0[0], c0[0], wih_p, whh_p, bias_p, wfc_t, bfc)

    # Dropout is identity at inference time; no-op here.
    out = jnp.transpose(out_flat.reshape(LAST_N, B, O), (1, 0, 2))   # (B, LAST_N, O)
    return out, h_n[None], c_n[None]


# ----------------------------- pure-JAX reference --------------------------- #

def ref_forward(x, h0, c0, params):
    def step(carry, x_t):
        h, c = carry
        gates = (x_t @ params["w_ih"].T + h @ params["w_hh"].T
                 + params["b_ih"] + params["b_hh"])
        i, f, g, o = jnp.split(gates, 4, axis=-1)
        i = jax.nn.sigmoid(i)
        f = jax.nn.sigmoid(f)
        g = jnp.tanh(g)
        o = jax.nn.sigmoid(o)
        c = f * c + i * g
        h = o * jnp.tanh(c)
        return (h, c), h

    (h_n, c_n), outs = jax.lax.scan(step, (h0[0], c0[0]),
                                    jnp.transpose(x, (1, 0, 2)))
    outs = jnp.transpose(outs, (1, 0, 2))
    out = outs[:, -LAST_N:, :] @ params["w_fc"].T + params["b_fc"]
    return out, h_n[None], c_n[None]


# ---------------------------------- main ------------------------------------ #

if __name__ == "__main__":
    B, T = 2, 12
    key = jax.random.PRNGKey(0)
    ks = jax.random.split(key, 9)
    scale = 1.0 / jnp.sqrt(HIDDEN_SIZE)

    # Deterministic parameter init (shapes match nn.LSTM / nn.Linear).
    params = {
        "w_ih": jax.random.uniform(ks[0], (4 * HIDDEN_SIZE, INPUT_SIZE),
                                   jnp.float32, -scale, scale),
        "w_hh": jax.random.uniform(ks[1], (4 * HIDDEN_SIZE, HIDDEN_SIZE),
                                   jnp.float32, -scale, scale),
        "b_ih": jax.random.uniform(ks[2], (4 * HIDDEN_SIZE,),
                                   jnp.float32, -scale, scale),
        "b_hh": jax.random.uniform(ks[3], (4 * HIDDEN_SIZE,),
                                   jnp.float32, -scale, scale),
        "w_fc": jax.random.uniform(ks[4], (OUTPUT_SIZE, HIDDEN_SIZE),
                                   jnp.float32, -scale, scale),
        "b_fc": jax.random.uniform(ks[5], (OUTPUT_SIZE,),
                                   jnp.float32, -scale, scale),
    }

    x = jax.random.normal(ks[6], (B, T, INPUT_SIZE), jnp.float32)
    h0 = jax.random.normal(ks[7], (1, B, HIDDEN_SIZE), jnp.float32)
    c0 = jax.random.normal(ks[8], (1, B, HIDDEN_SIZE), jnp.float32)

    out, h_n, c_n = lstm_model_backwards_forward(x, h0, c0, params)
    jax.block_until_ready((out, h_n, c_n))

    out_r, h_r, c_r = ref_forward(x, h0, c0, params)
    assert out.shape == (B, LAST_N, OUTPUT_SIZE)
    assert h_n.shape == (1, B, HIDDEN_SIZE) and c_n.shape == (1, B, HIDDEN_SIZE)
    assert jnp.allclose(out, out_r, atol=2e-5, rtol=2e-5)
    assert jnp.allclose(h_n, h_r, atol=2e-5, rtol=2e-5)
    assert jnp.allclose(c_n, c_r, atol=2e-5, rtol=2e-5)

    print("KERNEL_OK")
</pallas_src>

<mosaic_0001>
module attributes {stable_mosaic.version = 11 : i64} {
  func.func @lstm_fused_kernel(%arg0: memref<24x6xf32, #tpu.memory_space<vmem>>, %arg1: memref<2x50xf32, #tpu.memory_space<vmem>>, %arg2: memref<2x50xf32, #tpu.memory_space<vmem>>, %arg3: memref<6x512xf32, #tpu.memory_space<vmem>>, %arg4: memref<50x512xf32, #tpu.memory_space<vmem>>, %arg5: memref<1x512xf32, #tpu.memory_space<vmem>>, %arg6: memref<50x6xf32, #tpu.memory_space<vmem>>, %arg7: memref<1x6xf32, #tpu.memory_space<vmem>>, %arg8: memref<20x6xf32, #tpu.memory_space<vmem>>, %arg9: memref<2x50xf32, #tpu.memory_space<vmem>>, %arg10: memref<2x50xf32, #tpu.memory_space<vmem>>, %arg11: memref<20x50xf32, #tpu.memory_space<vmem>>) attributes {dimension_semantics = [], scalar_prefetch = 0 : i64, scratch_operands = 1 : i64, tpu.core_type = #tpu.core_type<tc>} {
    %c0 = arith.constant 0 : index
    %c0_0 = arith.constant 0 : index
    %0 = vector.load %arg0[%c0, %c0_0] : memref<24x6xf32, #tpu.memory_space<vmem>>, vector<24x6xf32>
    %c0_1 = arith.constant 0 : index
    %c0_2 = arith.constant 0 : index
    %1 = vector.load %arg3[%c0_1, %c0_2] : memref<6x512xf32, #tpu.memory_space<vmem>>, vector<6x512xf32>
    %cst = arith.constant dense<0.000000e+00> : vector<24x512xf32>
    %2 = tpu.matmul %0, %1, %cst {dimension_numbers = #tpu.dot_dimension_numbers<[1], [0], [0], [1], [0, 0, 1, 1], [], []>} : vector<24x6xf32>, vector<6x512xf32>, vector<24x512xf32> -> vector<24x512xf32>
    %c0_3 = arith.constant 0 : index
    %c0_4 = arith.constant 0 : index
    %3 = vector.load %arg5[%c0_3, %c0_4] : memref<1x512xf32, #tpu.memory_space<vmem>>, vector<1x512xf32>
    %4 = vector.broadcast %3 : vector<1x512xf32> to vector<24x512xf32>
    %5 = arith.addf %2, %4 : vector<24x512xf32>
    %c0_5 = arith.constant 0 : index
    %c0_6 = arith.constant 0 : index
    %6 = vector.load %arg4[%c0_5, %c0_6] : memref<50x512xf32, #tpu.memory_space<vmem>>, vector<50x512xf32>
    %c0_7 = arith.constant 0 : index
    %c0_8 = arith.constant 0 : index
    %7 = vector.load %arg1[%c0_7, %c0_8] : memref<2x50xf32, #tpu.memory_space<vmem>>, vector<2x50xf32>
    %c0_9 = arith.constant 0 : index
    %c0_10 = arith.constant 0 : index
    %8 = vector.load %arg2[%c0_9, %c0_10] : memref<2x50xf32, #tpu.memory_space<vmem>>, vector<2x50xf32>
    %9 = vector.extract_strided_slice %5 {offsets = [0, 0], sizes = [2, 512], strides = [1, 1]} : vector<24x512xf32> to vector<2x512xf32>
    %cst_11 = arith.constant dense<0.000000e+00> : vector<2x512xf32>
    %10 = tpu.matmul %7, %6, %cst_11 {dimension_numbers = #tpu.dot_dimension_numbers<[1], [0], [0], [1], [0, 0, 1, 1], [], []>} : vector<2x50xf32>, vector<50x512xf32>, vector<2x512xf32> -> vector<2x512xf32>
    %11 = arith.addf %9, %10 : vector<2x512xf32>
    %12 = vector.extract_strided_slice %11 {offsets = [0, 0], sizes = [2, 50], strides = [1, 1]} : vector<2x512xf32> to vector<2x50xf32>
    %13 = arith.negf %12 : vector<2x50xf32>
    %14 = math.exp %13 : vector<2x50xf32>
    %cst_12 = arith.constant 1.000000e+00 : f32
    %15 = vector.broadcast %cst_12 : f32 to vector<2x50xf32>
    %16 = arith.addf %15, %14 : vector<2x50xf32>
    %17 = arith.divf %15, %16 : vector<2x50xf32>
    %18 = vector.extract_strided_slice %11 {offsets = [0, 128], sizes = [2, 50], strides = [1, 1]} : vector<2x512xf32> to vector<2x50xf32>
    %19 = arith.negf %18 : vector<2x50xf32>
    %20 = math.exp %19 : vector<2x50xf32>
    %cst_13 = arith.constant 1.000000e+00 : f32
    %21 = vector.broadcast %cst_13 : f32 to vector<2x50xf32>
    %22 = arith.addf %21, %20 : vector<2x50xf32>
    %23 = arith.divf %21, %22 : vector<2x50xf32>
    %24 = vector.extract_strided_slice %11 {offsets = [0, 256], sizes = [2, 50], strides = [1, 1]} : vector<2x512xf32> to vector<2x50xf32>
    %25 = math.tanh %24 : vector<2x50xf32>
    %26 = vector.extract_strided_slice %11 {offsets = [0, 384], sizes = [2, 50], strides = [1, 1]} : vector<2x512xf32> to vector<2x50xf32>
    %27 = arith.negf %26 : vector<2x50xf32>
    %28 = math.exp %27 : vector<2x50xf32>
    %cst_14 = arith.constant 1.000000e+00 : f32
    %29 = vector.broadcast %cst_14 : f32 to vector<2x50xf32>
    %30 = arith.addf %29, %28 : vector<2x50xf32>
    %31 = arith.divf %29, %30 : vector<2x50xf32>
    %32 = arith.mulf %23, %8 : vector<2x50xf32>
    %33 = arith.mulf %17, %25 : vector<2x50xf32>
    %34 = arith.addf %32, %33 : vector<2x50xf32>
    %35 = math.tanh %34 : vector<2x50xf32>
    %36 = arith.mulf %31, %35 : vector<2x50xf32>
    %37 = vector.extract_strided_slice %5 {offsets = [2, 0], sizes = [2, 512], strides = [1, 1]} : vector<24x512xf32> to vector<2x512xf32>
    %cst_15 = arith.constant dense<0.000000e+00> : vector<2x512xf32>
    %38 = tpu.matmul %36, %6, %cst_15 {dimension_numbers = #tpu.dot_dimension_numbers<[1], [0], [0], [1], [0, 0, 1, 1], [], []>} : vector<2x50xf32>, vector<50x512xf32>, vector<2x512xf32> -> vector<2x512xf32>
    %39 = arith.addf %37, %38 : vector<2x512xf32>
    %40 = vector.extract_strided_slice %39 {offsets = [0, 0], sizes = [2, 50], strides = [1, 1]} : vector<2x512xf32> to vector<2x50xf32>
    %41 = arith.negf %40 : vector<2x50xf32>
    %42 = math.exp %41 : vector<2x50xf32>
    %cst_16 = arith.constant 1.000000e+00 : f32
    %43 = vector.broadcast %cst_16 : f32 to vector<2x50xf32>
    %44 = arith.addf %43, %42 : vector<2x50xf32>
    %45 = arith.divf %43, %44 : vector<2x50xf32>
    %46 = vector.extract_strided_slice %39 {offsets = [0, 128], sizes = [2, 50], strides = [1, 1]} : vector<2x512xf32> to vector<2x50xf32>
    %47 = arith.negf %46 : vector<2x50xf32>
    %48 = math.exp %47 : vector<2x50xf32>
    %cst_17 = arith.constant 1.000000e+00 : f32
    %49 = vector.broadcast %cst_17 : f32 to vector<2x50xf32>
    %50 = arith.addf %49, %48 : vector<2x50xf32>
    %51 = arith.divf %49, %50 : vector<2x50xf32>
    %52 = vector.extract_strided_slice %39 {offsets = [0, 256], sizes = [2, 50], strides = [1, 1]} : vector<2x512xf32> to vector<2x50xf32>
    %53 = math.tanh %52 : vector<2x50xf32>
    %54 = vector.extract_strided_slice %39 {offsets = [0, 384], sizes = [2, 50], strides = [1, 1]} : vector<2x512xf32> to vector<2x50xf32>
    %55 = arith.negf %54 : vector<2x50xf32>
    %56 = math.exp %55 : vector<2x50xf32>
    %cst_18 = arith.constant 1.000000e+00 : f32
    %57 = vector.broadcast %cst_18 : f32 to vector<2x50xf32>
    %58 = arith.addf %57, %56 : vector<2x50xf32>
    %59 = arith.divf %57, %58 : vector<2x50xf32>
    %60 = arith.mulf %51, %34 : vector<2x50xf32>
    %61 = arith.mulf %45, %53 : vector<2x50xf32>
    %62 = arith.addf %60, %61 : vector<2x50xf32>
    %63 = math.tanh %62 : vector<2x50xf32>
    %64 = arith.mulf %59, %63 : vector<2x50xf32>
    %65 = vector.extract_strided_slice %5 {offsets = [4, 0], sizes = [2, 512], strides = [1, 1]} : vector<24x512xf32> to vector<2x512xf32>
    %cst_19 = arith.constant dense<0.000000e+00> : vector<2x512xf32>
    %66 = tpu.matmul %64, %6, %cst_19 {dimension_numbers = #tpu.dot_dimension_numbers<[1], [0], [0], [1], [0, 0, 1, 1], [], []>} : vector<2x50xf32>, vector<50x512xf32>, vector<2x512xf32> -> vector<2x512xf32>
    %67 = arith.addf %65, %66 : vector<2x512xf32>
    %68 = vector.extract_strided_slice %67 {offsets = [0, 0], sizes = [2, 50], strides = [1, 1]} : vector<2x512xf32> to vector<2x50xf32>
    %69 = arith.negf %68 : vector<2x50xf32>
    %70 = math.exp %69 : vector<2x50xf32>
    %cst_20 = arith.constant 1.000000e+00 : f32
    %71 = vector.broadcast %cst_20 : f32 to vector<2x50xf32>
    %72 = arith.addf %71, %70 : vector<2x50xf32>
    %73 = arith.divf %71, %72 : vector<2x50xf32>
    %74 = vector.extract_strided_slice %67 {offsets = [0, 128], sizes = [2, 50], strides = [1, 1]} : vector<2x512xf32> to vector<2x50xf32>
    %75 = arith.negf %74 : vector<2x50xf32>
    %76 = math.exp %75 : vector<2x50xf32>
    %cst_21 = arith.constant 1.000000e+00 : f32
    %77 = vector.broadcast %cst_21 : f32 to vector<2x50xf32>
    %78 = arith.addf %77, %76 : vector<2x50xf32>
    %79 = arith.divf %77, %78 : vector<2x50xf32>
    %80 = vector.extract_strided_slice %67 {offsets = [0, 256], sizes = [2, 50], strides = [1, 1]} : vector<2x512xf32> to vector<2x50xf32>
    %81 = math.tanh %80 : vector<2x50xf32>
    %82 = vector.extract_strided_slice %67 {offsets = [0, 384], sizes = [2, 50], strides = [1, 1]} : vector<2x512xf32> to vector<2x50xf32>
    %83 = arith.negf %82 : vector<2x50xf32>
    %84 = math.exp %83 : vector<2x50xf32>
    %cst_22 = arith.constant 1.000000e+00 : f32
    %85 = vector.broadcast %cst_22 : f32 to vector<2x50xf32>
    %86 = arith.addf %85, %84 : vector<2x50xf32>
    %87 = arith.divf %85, %86 : vector<2x50xf32>
    %88 = arith.mulf %79, %62 : vector<2x50xf32>
    %89 = arith.mulf %73, %81 : vector<2x50xf32>
    %90 = arith.addf %88, %89 : vector<2x50xf32>
    %91 = math.tanh %90 : vector<2x50xf32>
    %92 = arith.mulf %87, %91 : vector<2x50xf32>
    %c0_23 = arith.constant 0 : index
    %c0_24 = arith.constant 0 : index
    %93 = vector.load %arg11[%c0_23, %c0_24] : memref<20x50xf32, #tpu.memory_space<vmem>>, vector<2x50xf32>
    tpu.vector_store %arg11[%c0_23, %c0_24], %92 {strides = array<i32>} : memref<20x50xf32, #tpu.memory_space<vmem>>, vector<2x50xf32>,
    %94 = vector.extract_strided_slice %5 {offsets = [6, 0], sizes = [2, 512], strides = [1, 1]} : vector<24x512xf32> to vector<2x512xf32>
    %cst_25 = arith.constant dense<0.000000e+00> : vector<2x512xf32>
    %95 = tpu.matmul %92, %6, %cst_25 {dimension_numbers = #tpu.dot_dimension_numbers<[1], [0], [0], [1], [0, 0, 1, 1], [], []>} : vector<2x50xf32>, vector<50x512xf32>, vector<2x512xf32> -> vector<2x512xf32>
    %96 = arith.addf %94, %95 : vector<2x512xf32>
    %97 = vector.extract_strided_slice %96 {offsets = [0, 0], sizes = [2, 50], strides = [1, 1]} : vector<2x512xf32> to vector<2x50xf32>
    %98 = arith.negf %97 : vector<2x50xf32>
    %99 = math.exp %98 : vector<2x50xf32>
    %cst_26 = arith.constant 1.000000e+00 : f32
    %100 = vector.broadcast %cst_26 : f32 to vector<2x50xf32>
    %101 = arith.addf %100, %99 : vector<2x50xf32>
    %102 = arith.divf %100, %101 : vector<2x50xf32>
    %103 = vector.extract_strided_slice %96 {offsets = [0, 128], sizes = [2, 50], strides = [1, 1]} : vector<2x512xf32> to vector<2x50xf32>
    %104 = arith.negf %103 : vector<2x50xf32>
    %105 = math.exp %104 : vector<2x50xf32>
    %cst_27 = arith.constant 1.000000e+00 : f32
    %106 = vector.broadcast %cst_27 : f32 to vector<2x50xf32>
    %107 = arith.addf %106, %105 : vector<2x50xf32>
    %108 = arith.divf %106, %107 : vector<2x50xf32>
    %109 = vector.extract_strided_slice %96 {offsets = [0, 256], sizes = [2, 50], strides = [1, 1]} : vector<2x512xf32> to vector<2x50xf32>
    %110 = math.tanh %109 : vector<2x50xf32>
    %111 = vector.extract_strided_slice %96 {offsets = [0, 384], sizes = [2, 50], strides = [1, 1]} : vector<2x512xf32> to vector<2x50xf32>
    %112 = arith.negf %111 : vector<2x50xf32>
    %113 = math.exp %112 : vector<2x50xf32>
    %cst_28 = arith.constant 1.000000e+00 : f32
    %114 = vector.broadcast %cst_28 : f32 to vector<2x50xf32>
    %115 = arith.addf %114, %113 : vector<2x50xf32>
    %116 = arith.divf %114, %115 : vector<2x50xf32>
    %117 = arith.mulf %108, %90 : vector<2x50xf32>
    %118 = arith.mulf %102, %110 : vector<2x50xf32>
    %119 = arith.addf %117, %118 : vector<2x50xf32>
    %120 = math.tanh %119 : vector<2x50xf32>
    %121 = arith.mulf %116, %120 : vector<2x50xf32>
    %c2 = arith.constant 2 : index
    %c0_29 = arith.constant 0 : index
    %122 = vector.load %arg11[%c2, %c0_29] : memref<20x50xf32, #tpu.memory_space<vmem>>, vector<2x50xf32>
    tpu.vector_store %arg11[%c2, %c0_29], %121 {strides = array<i32>} : memref<20x50xf32, #tpu.memory_space<vmem>>, vector<2x50xf32>,
    %123 = vector.extract_strided_slice %5 {offsets = [8, 0], sizes = [2, 512], strides = [1, 1]} : vector<24x512xf32> to vector<2x512xf32>
    %cst_30 = arith.constant dense<0.000000e+00> : vector<2x512xf32>
    %124 = tpu.matmul %121, %6, %cst_30 {dimension_numbers = #tpu.dot_dimension_numbers<[1], [0], [0], [1], [0, 0, 1, 1], [], []>} : vector<2x50xf32>, vector<50x512xf32>, vector<2x512xf32> -> vector<2x512xf32>
    %125 = arith.addf %123, %124 : vector<2x512xf32>
    %126 = vector.extract_strided_slice %125 {offsets = [0, 0], sizes = [2, 50], strides = [1, 1]} : vector<2x512xf32> to vector<2x50xf32>
    %127 = arith.negf %126 : vector<2x50xf32>
    %128 = math.exp %127 : vector<2x50xf32>
    %cst_31 = arith.constant 1.000000e+00 : f32
    %129 = vector.broadcast %cst_31 : f32 to vector<2x50xf32>
    %130 = arith.addf %129, %128 : vector<2x50xf32>
    %131 = arith.divf %129, %130 : vector<2x50xf32>
    %132 = vector.extract_strided_slice %125 {offsets = [0, 128], sizes = [2, 50], strides = [1, 1]} : vector<2x512xf32> to vector<2x50xf32>
    %133 = arith.negf %132 : vector<2x50xf32>
    %134 = math.exp %133 : vector<2x50xf32>
    %cst_32 = arith.constant 1.000000e+00 : f32
    %135 = vector.broadcast %cst_32 : f32 to vector<2x50xf32>
    %136 = arith.addf %135, %134 : vector<2x50xf32>
    %137 = arith.divf %135, %136 : vector<2x50xf32>
    %138 = vector.extract_strided_slice %125 {offsets = [0, 256], sizes = [2, 50], strides = [1, 1]} : vector<2x512xf32> to vector<2x50xf32>
    %139 = math.tanh %138 : vector<2x50xf32>
    %140 = vector.extract_strided_slice %125 {offsets = [0, 384], sizes = [2, 50], strides = [1, 1]} : vector<2x512xf32> to vector<2x50xf32>
    %141 = arith.negf %140 : vector<2x50xf32>
    %142 = math.exp %141 : vector<2x50xf32>
    %cst_33 = arith.constant 1.000000e+00 : f32
    %143 = vector.broadcast %cst_33 : f32 to vector<2x50xf32>
    %144 = arith.addf %143, %142 : vector<2x50xf32>
    %145 = arith.divf %143, %144 : vector<2x50xf32>
    %146 = arith.mulf %137, %119 : vector<2x50xf32>
    %147 = arith.mulf %131, %139 : vector<2x50xf32>
    %148 = arith.addf %146, %147 : vector<2x50xf32>
    %149 = math.tanh %148 : vector<2x50xf32>
    %150 = arith.mulf %145, %149 : vector<2x50xf32>
    %c4 = arith.constant 4 : index
    %c0_34 = arith.constant 0 : index
    %151 = vector.load %arg11[%c4, %c0_34] : memref<20x50xf32, #tpu.memory_space<vmem>>, vector<2x50xf32>
    tpu.vector_store %arg11[%c4, %c0_34], %150 {strides = array<i32>} : memref<20x50xf32, #tpu.memory_space<vmem>>, vector<2x50xf32>,
    %152 = vector.extract_strided_slice %5 {offsets = [10, 0], sizes = [2, 512], strides = [1, 1]} : vector<24x512xf32> to vector<2x512xf32>
    %cst_35 = arith.constant dense<0.000000e+00> : vector<2x512xf32>
    %153 = tpu.matmul %150, %6, %cst_35 {dimension_numbers = #tpu.dot_dimension_numbers<[1], [0], [0], [1], [0, 0, 1, 1], [], []>} : vector<2x50xf32>, vector<50x512xf32>, vector<2x512xf32> -> vector<2x512xf32>
    %154 = arith.addf %152, %153 : vector<2x512xf32>
    %155 = vector.extract_strided_slice %154 {offsets = [0, 0], sizes = [2, 50], strides = [1, 1]} : vector<2x512xf32> to vector<2x50xf32>
    %156 = arith.negf %155 : vector<2x50xf32>
    %157 = math.exp %156 : vector<2x50xf32>
    %cst_36 = arith.constant 1.000000e+00 : f32
    %158 = vector.broadcast %cst_36 : f32 to vector<2x50xf32>
    %159 = arith.addf %158, %157 : vector<2x50xf32>
    %160 = arith.divf %158, %159 : vector<2x50xf32>
    %161 = vector.extract_strided_slice %154 {offsets = [0, 128], sizes = [2, 50], strides = [1, 1]} : vector<2x512xf32> to vector<2x50xf32>
    %162 = arith.negf %161 : vector<2x50xf32>
    %163 = math.exp %162 : vector<2x50xf32>
    %cst_37 = arith.constant 1.000000e+00 : f32
    %164 = vector.broadcast %cst_37 : f32 to vector<2x50xf32>
    %165 = arith.addf %164, %163 : vector<2x50xf32>
    %166 = arith.divf %164, %165 : vector<2x50xf32>
    %167 = vector.extract_strided_slice %154 {offsets = [0, 256], sizes = [2, 50], strides = [1, 1]} : vector<2x512xf32> to vector<2x50xf32>
    %168 = math.tanh %167 : vector<2x50xf32>
    %169 = vector.extract_strided_slice %154 {offsets = [0, 384], sizes = [2, 50], strides = [1, 1]} : vector<2x512xf32> to vector<2x50xf32>
    %170 = arith.negf %169 : vector<2x50xf32>
    %171 = math.exp %170 : vector<2x50xf32>
    %cst_38 = arith.constant 1.000000e+00 : f32
    %172 = vector.broadcast %cst_38 : f32 to vector<2x50xf32>
    %173 = arith.addf %172, %171 : vector<2x50xf32>
    %174 = arith.divf %172, %173 : vector<2x50xf32>
    %175 = arith.mulf %166, %148 : vector<2x50xf32>
    %176 = arith.mulf %160, %168 : vector<2x50xf32>
    %177 = arith.addf %175, %176 : vector<2x50xf32>
    %178 = math.tanh %177 : vector<2x50xf32>
    %179 = arith.mulf %174, %178 : vector<2x50xf32>
    %c6 = arith.constant 6 : index
    %c0_39 = arith.constant 0 : index
    %180 = vector.load %arg11[%c6, %c0_39] : memref<20x50xf32, #tpu.memory_space<vmem>>, vector<2x50xf32>
    tpu.vector_store %arg11[%c6, %c0_39], %179 {strides = array<i32>} : memref<20x50xf32, #tpu.memory_space<vmem>>, vector<2x50xf32>,
    %181 = vector.extract_strided_slice %5 {offsets = [12, 0], sizes = [2, 512], strides = [1, 1]} : vector<24x512xf32> to vector<2x512xf32>
    %cst_40 = arith.constant dense<0.000000e+00> : vector<2x512xf32>
    %182 = tpu.matmul %179, %6, %cst_40 {dimension_numbers = #tpu.dot_dimension_numbers<[1], [0], [0], [1], [0, 0, 1, 1], [], []>} : vector<2x50xf32>, vector<50x512xf32>, vector<2x512xf32> -> vector<2x512xf32>
    %183 = arith.addf %181, %182 : vector<2x512xf32>
    %184 = vector.extract_strided_slice %183 {offsets = [0, 0], sizes = [2, 50], strides = [1, 1]} : vector<2x512xf32> to vector<2x50xf32>
    %185 = arith.negf %184 : vector<2x50xf32>
    %186 = math.exp %185 : vector<2x50xf32>
    %cst_41 = arith.constant 1.000000e+00 : f32
    %187 = vector.broadcast %cst_41 : f32 to vector<2x50xf32>
    %188 = arith.addf %187, %186 : vector<2x50xf32>
    %189 = arith.divf %187, %188 : vector<2x50xf32>
    %190 = vector.extract_strided_slice %183 {offsets = [0, 128], sizes = [2, 50], strides = [1, 1]} : vector<2x512xf32> to vector<2x50xf32>
    %191 = arith.negf %190 : vector<2x50xf32>
    %192 = math.exp %191 : vector<2x50xf32>
    %cst_42 = arith.constant 1.000000e+00 : f32
    %193 = vector.broadcast %cst_42 : f32 to vector<2x50xf32>
    %194 = arith.addf %193, %192 : vector<2x50xf32>
    %195 = arith.divf %193, %194 : vector<2x50xf32>
    %196 = vector.extract_strided_slice %183 {offsets = [0, 256], sizes = [2, 50], strides = [1, 1]} : vector<2x512xf32> to vector<2x50xf32>
    %197 = math.tanh %196 : vector<2x50xf32>
    %198 = vector.extract_strided_slice %183 {offsets = [0, 384], sizes = [2, 50], strides = [1, 1]} : vector<2x512xf32> to vector<2x50xf32>
    %199 = arith.negf %198 : vector<2x50xf32>
    %200 = math.exp %199 : vector<2x50xf32>
    %cst_43 = arith.constant 1.000000e+00 : f32
    %201 = vector.broadcast %cst_43 : f32 to vector<2x50xf32>
    %202 = arith.addf %201, %200 : vector<2x50xf32>
    %203 = arith.divf %201, %202 : vector<2x50xf32>
    %204 = arith.mulf %195, %177 : vector<2x50xf32>
    %205 = arith.mulf %189, %197 : vector<2x50xf32>
    %206 = arith.addf %204, %205 : vector<2x50xf32>
    %207 = math.tanh %206 : vector<2x50xf32>
    %208 = arith.mulf %203, %207 : vector<2x50xf32>
    %c8 = arith.constant 8 : index
    %c0_44 = arith.constant 0 : index
    %209 = vector.load %arg11[%c8, %c0_44] : memref<20x50xf32, #tpu.memory_space<vmem>>, vector<2x50xf32>
    tpu.vector_store %arg11[%c8, %c0_44], %208 {strides = array<i32>} : memref<20x50xf32, #tpu.memory_space<vmem>>, vector<2x50xf32>,
    %210 = vector.extract_strided_slice %5 {offsets = [14, 0], sizes = [2, 512], strides = [1, 1]} : vector<24x512xf32> to vector<2x512xf32>
    %cst_45 = arith.constant dense<0.000000e+00> : vector<2x512xf32>
    %211 = tpu.matmul %208, %6, %cst_45 {dimension_numbers = #tpu.dot_dimension_numbers<[1], [0], [0], [1], [0, 0, 1, 1], [], []>} : vector<2x50xf32>, vector<50x512xf32>, vector<2x512xf32> -> vector<2x512xf32>
    %212 = arith.addf %210, %211 : vector<2x512xf32>
    %213 = vector.extract_strided_slice %212 {offsets = [0, 0], sizes = [2, 50], strides = [1, 1]} : vector<2x512xf32> to vector<2x50xf32>
    %214 = arith.negf %213 : vector<2x50xf32>
    %215 = math.exp %214 : vector<2x50xf32>
    %cst_46 = arith.constant 1.000000e+00 : f32
    %216 = vector.broadcast %cst_46 : f32 to vector<2x50xf32>
    %217 = arith.addf %216, %215 : vector<2x50xf32>
    %218 = arith.divf %216, %217 : vector<2x50xf32>
    %219 = vector.extract_strided_slice %212 {offsets = [0, 128], sizes = [2, 50], strides = [1, 1]} : vector<2x512xf32> to vector<2x50xf32>
    %220 = arith.negf %219 : vector<2x50xf32>
    %221 = math.exp %220 : vector<2x50xf32>
    %cst_47 = arith.constant 1.000000e+00 : f32
    %222 = vector.broadcast %cst_47 : f32 to vector<2x50xf32>
    %223 = arith.addf %222, %221 : vector<2x50xf32>
    %224 = arith.divf %222, %223 : vector<2x50xf32>
    %225 = vector.extract_strided_slice %212 {offsets = [0, 256], sizes = [2, 50], strides = [1, 1]} : vector<2x512xf32> to vector<2x50xf32>
    %226 = math.tanh %225 : vector<2x50xf32>
    %227 = vector.extract_strided_slice %212 {offsets = [0, 384], sizes = [2, 50], strides = [1, 1]} : vector<2x512xf32> to vector<2x50xf32>
    %228 = arith.negf %227 : vector<2x50xf32>
    %229 = math.exp %228 : vector<2x50xf32>
    %cst_48 = arith.constant 1.000000e+00 : f32
    %230 = vector.broadcast %cst_48 : f32 to vector<2x50xf32>
    %231 = arith.addf %230, %229 : vector<2x50xf32>
    %232 = arith.divf %230, %231 : vector<2x50xf32>
    %233 = arith.mulf %224, %206 : vector<2x50xf32>
    %234 = arith.mulf %218, %226 : vector<2x50xf32>
    %235 = arith.addf %233, %234 : vector<2x50xf32>
    %236 = math.tanh %235 : vector<2x50xf32>
    %237 = arith.mulf %232, %236 : vector<2x50xf32>
    %c10 = arith.constant 10 : index
    %c0_49 = arith.constant 0 : index
    %238 = vector.load %arg11[%c10, %c0_49] : memref<20x50xf32, #tpu.memory_space<vmem>>, vector<2x50xf32>
    tpu.vector_store %arg11[%c10, %c0_49], %237 {strides = array<i32>} : memref<20x50xf32, #tpu.memory_space<vmem>>, vector<2x50xf32>,
    %239 = vector.extract_strided_slice %5 {offsets = [16, 0], sizes = [2, 512], strides = [1, 1]} : vector<24x512xf32> to vector<2x512xf32>
    %cst_50 = arith.constant dense<0.000000e+00> : vector<2x512xf32>
    %240 = tpu.matmul %237, %6, %cst_50 {dimension_numbers = #tpu.dot_dimension_numbers<[1], [0], [0], [1], [0, 0, 1, 1], [], []>} : vector<2x50xf32>, vector<50x512xf32>, vector<2x512xf32> -> vector<2x512xf32>
    %241 = arith.addf %239, %240 : vector<2x512xf32>
    %242 = vector.extract_strided_slice %241 {offsets = [0, 0], sizes = [2, 50], strides = [1, 1]} : vector<2x512xf32> to vector<2x50xf32>
    %243 = arith.negf %242 : vector<2x50xf32>
    %244 = math.exp %243 : vector<2x50xf32>
    %cst_51 = arith.constant 1.000000e+00 : f32
    %245 = vector.broadcast %cst_51 : f32 to vector<2x50xf32>
    %246 = arith.addf %245, %244 : vector<2x50xf32>
    %247 = arith.divf %245, %246 : vector<2x50xf32>
    %248 = vector.extract_strided_slice %241 {offsets = [0, 128], sizes = [2, 50], strides = [1, 1]} : vector<2x512xf32> to vector<2x50xf32>
    %249 = arith.negf %248 : vector<2x50xf32>
    %250 = math.exp %249 : vector<2x50xf32>
    %cst_52 = arith.constant 1.000000e+00 : f32
    %251 = vector.broadcast %cst_52 : f32 to vector<2x50xf32>
    %252 = arith.addf %251, %250 : vector<2x50xf32>
    %253 = arith.divf %251, %252 : vector<2x50xf32>
    %254 = vector.extract_strided_slice %241 {offsets = [0, 256], sizes = [2, 50], strides = [1, 1]} : vector<2x512xf32> to vector<2x50xf32>
    %255 = math.tanh %254 : vector<2x50xf32>
    %256 = vector.extract_strided_slice %241 {offsets = [0, 384], sizes = [2, 50], strides = [1, 1]} : vector<2x512xf32> to vector<2x50xf32>
    %257 = arith.negf %256 : vector<2x50xf32>
    %258 = math.exp %257 : vector<2x50xf32>
    %cst_53 = arith.constant 1.000000e+00 : f32
    %259 = vector.broadcast %cst_53 : f32 to vector<2x50xf32>
    %260 = arith.addf %259, %258 : vector<2x50xf32>
    %261 = arith.divf %259, %260 : vector<2x50xf32>
    %262 = arith.mulf %253, %235 : vector<2x50xf32>
    %263 = arith.mulf %247, %255 : vector<2x50xf32>
    %264 = arith.addf %262, %263 : vector<2x50xf32>
    %265 = math.tanh %264 : vector<2x50xf32>
    %266 = arith.mulf %261, %265 : vector<2x50xf32>
    %c12 = arith.constant 12 : index
    %c0_54 = arith.constant 0 : index
    %267 = vector.load %arg11[%c12, %c0_54] : memref<20x50xf32, #tpu.memory_space<vmem>>, vector<2x50xf32>
    tpu.vector_store %arg11[%c12, %c0_54], %266 {strides = array<i32>} : memref<20x50xf32, #tpu.memory_space<vmem>>, vector<2x50xf32>,
    %268 = vector.extract_strided_slice %5 {offsets = [18, 0], sizes = [2, 512], strides = [1, 1]} : vector<24x512xf32> to vector<2x512xf32>
    %cst_55 = arith.constant dense<0.000000e+00> : vector<2x512xf32>
    %269 = tpu.matmul %266, %6, %cst_55 {dimension_numbers = #tpu.dot_dimension_numbers<[1], [0], [0], [1], [0, 0, 1, 1], [], []>} : vector<2x50xf32>, vector<50x512xf32>, vector<2x512xf32> -> vector<2x512xf32>
    %270 = arith.addf %268, %269 : vector<2x512xf32>
    %271 = vector.extract_strided_slice %270 {offsets = [0, 0], sizes = [2, 50], strides = [1, 1]} : vector<2x512xf32> to vector<2x50xf32>
    %272 = arith.negf %271 : vector<2x50xf32>
    %273 = math.exp %272 : vector<2x50xf32>
    %cst_56 = arith.constant 1.000000e+00 : f32
    %274 = vector.broadcast %cst_56 : f32 to vector<2x50xf32>
    %275 = arith.addf %274, %273 : vector<2x50xf32>
    %276 = arith.divf %274, %275 : vector<2x50xf32>
    %277 = vector.extract_strided_slice %270 {offsets = [0, 128], sizes = [2, 50], strides = [1, 1]} : vector<2x512xf32> to vector<2x50xf32>
    %278 = arith.negf %277 : vector<2x50xf32>
    %279 = math.exp %278 : vector<2x50xf32>
    %cst_57 = arith.constant 1.000000e+00 : f32
    %280 = vector.broadcast %cst_57 : f32 to vector<2x50xf32>
    %281 = arith.addf %280, %279 : vector<2x50xf32>
    %282 = arith.divf %280, %281 : vector<2x50xf32>
    %283 = vector.extract_strided_slice %270 {offsets = [0, 256], sizes = [2, 50], strides = [1, 1]} : vector<2x512xf32> to vector<2x50xf32>
    %284 = math.tanh %283 : vector<2x50xf32>
    %285 = vector.extract_strided_slice %270 {offsets = [0, 384], sizes = [2, 50], strides = [1, 1]} : vector<2x512xf32> to vector<2x50xf32>
    %286 = arith.negf %285 : vector<2x50xf32>
    %287 = math.exp %286 : vector<2x50xf32>
    %cst_58 = arith.constant 1.000000e+00 : f32
    %288 = vector.broadcast %cst_58 : f32 to vector<2x50xf32>
    %289 = arith.addf %288, %287 : vector<2x50xf32>
    %290 = arith.divf %288, %289 : vector<2x50xf32>
    %291 = arith.mulf %282, %264 : vector<2x50xf32>
    %292 = arith.mulf %276, %284 : vector<2x50xf32>
    %293 = arith.addf %291, %292 : vector<2x50xf32>
    %294 = math.tanh %293 : vector<2x50xf32>
    %295 = arith.mulf %290, %294 : vector<2x50xf32>
    %c14 = arith.constant 14 : index
    %c0_59 = arith.constant 0 : index
    %296 = vector.load %arg11[%c14, %c0_59] : memref<20x50xf32, #tpu.memory_space<vmem>>, vector<2x50xf32>
    tpu.vector_store %arg11[%c14, %c0_59], %295 {strides = array<i32>} : memref<20x50xf32, #tpu.memory_space<vmem>>, vector<2x50xf32>,
    %297 = vector.extract_strided_slice %5 {offsets = [20, 0], sizes = [2, 512], strides = [1, 1]} : vector<24x512xf32> to vector<2x512xf32>
    %cst_60 = arith.constant dense<0.000000e+00> : vector<2x512xf32>
    %298 = tpu.matmul %295, %6, %cst_60 {dimension_numbers = #tpu.dot_dimension_numbers<[1], [0], [0], [1], [0, 0, 1, 1], [], []>} : vector<2x50xf32>, vector<50x512xf32>, vector<2x512xf32> -> vector<2x512xf32>
    %299 = arith.addf %297, %298 : vector<2x512xf32>
    %300 = vector.extract_strided_slice %299 {offsets = [0, 0], sizes = [2, 50], strides = [1, 1]} : vector<2x512xf32> to vector<2x50xf32>
    %301 = arith.negf %300 : vector<2x50xf32>
    %302 = math.exp %301 : vector<2x50xf32>
    %cst_61 = arith.constant 1.000000e+00 : f32
    %303 = vector.broadcast %cst_61 : f32 to vector<2x50xf32>
    %304 = arith.addf %303, %302 : vector<2x50xf32>
    %305 = arith.divf %303, %304 : vector<2x50xf32>
    %306 = vector.extract_strided_slice %299 {offsets = [0, 128], sizes = [2, 50], strides = [1, 1]} : vector<2x512xf32> to vector<2x50xf32>
    %307 = arith.negf %306 : vector<2x50xf32>
    %308 = math.exp %307 : vector<2x50xf32>
    %cst_62 = arith.constant 1.000000e+00 : f32
    %309 = vector.broadcast %cst_62 : f32 to vector<2x50xf32>
    %310 = arith.addf %309, %308 : vector<2x50xf32>
    %311 = arith.divf %309, %310 : vector<2x50xf32>
    %312 = vector.extract_strided_slice %299 {offsets = [0, 256], sizes = [2, 50], strides = [1, 1]} : vector<2x512xf32> to vector<2x50xf32>
    %313 = math.tanh %312 : vector<2x50xf32>
    %314 = vector.extract_strided_slice %299 {offsets = [0, 384], sizes = [2, 50], strides = [1, 1]} : vector<2x512xf32> to vector<2x50xf32>
    %315 = arith.negf %314 : vector<2x50xf32>
    %316 = math.exp %315 : vector<2x50xf32>
    %cst_63 = arith.constant 1.000000e+00 : f32
    %317 = vector.broadcast %cst_63 : f32 to vector<2x50xf32>
    %318 = arith.addf %317, %316 : vector<2x50xf32>
    %319 = arith.divf %317, %318 : vector<2x50xf32>
    %320 = arith.mulf %311, %293 : vector<2x50xf32>
    %321 = arith.mulf %305, %313 : vector<2x50xf32>
    %322 = arith.addf %320, %321 : vector<2x50xf32>
    %323 = math.tanh %322 : vector<2x50xf32>
    %324 = arith.mulf %319, %323 : vector<2x50xf32>
    %c16 = arith.constant 16 : index
    %c0_64 = arith.constant 0 : index
    %325 = vector.load %arg11[%c16, %c0_64] : memref<20x50xf32, #tpu.memory_space<vmem>>, vector<2x50xf32>
    tpu.vector_store %arg11[%c16, %c0_64], %324 {strides = array<i32>} : memref<20x50xf32, #tpu.memory_space<vmem>>, vector<2x50xf32>,
    %326 = vector.extract_strided_slice %5 {offsets = [22, 0], sizes = [2, 512], strides = [1, 1]} : vector<24x512xf32> to vector<2x512xf32>
    %cst_65 = arith.constant dense<0.000000e+00> : vector<2x512xf32>
    %327 = tpu.matmul %324, %6, %cst_65 {dimension_numbers = #tpu.dot_dimension_numbers<[1], [0], [0], [1], [0, 0, 1, 1], [], []>} : vector<2x50xf32>, vector<50x512xf32>, vector<2x512xf32> -> vector<2x512xf32>
    %328 = arith.addf %326, %327 : vector<2x512xf32>
    %329 = vector.extract_strided_slice %328 {offsets = [0, 0], sizes = [2, 50], strides = [1, 1]} : vector<2x512xf32> to vector<2x50xf32>
    %330 = arith.negf %329 : vector<2x50xf32>
    %331 = math.exp %330 : vector<2x50xf32>
    %cst_66 = arith.constant 1.000000e+00 : f32
    %332 = vector.broadcast %cst_66 : f32 to vector<2x50xf32>
    %333 = arith.addf %332, %331 : vector<2x50xf32>
    %334 = arith.divf %332, %333 : vector<2x50xf32>
    %335 = vector.extract_strided_slice %328 {offsets = [0, 128], sizes = [2, 50], strides = [1, 1]} : vector<2x512xf32> to vector<2x50xf32>
    %336 = arith.negf %335 : vector<2x50xf32>
    %337 = math.exp %336 : vector<2x50xf32>
    %cst_67 = arith.constant 1.000000e+00 : f32
    %338 = vector.broadcast %cst_67 : f32 to vector<2x50xf32>
    %339 = arith.addf %338, %337 : vector<2x50xf32>
    %340 = arith.divf %338, %339 : vector<2x50xf32>
    %341 = vector.extract_strided_slice %328 {offsets = [0, 256], sizes = [2, 50], strides = [1, 1]} : vector<2x512xf32> to vector<2x50xf32>
    %342 = math.tanh %341 : vector<2x50xf32>
    %343 = vector.extract_strided_slice %328 {offsets = [0, 384], sizes = [2, 50], strides = [1, 1]} : vector<2x512xf32> to vector<2x50xf32>
    %344 = arith.negf %343 : vector<2x50xf32>
    %345 = math.exp %344 : vector<2x50xf32>
    %cst_68 = arith.constant 1.000000e+00 : f32
    %346 = vector.broadcast %cst_68 : f32 to vector<2x50xf32>
    %347 = arith.addf %346, %345 : vector<2x50xf32>
    %348 = arith.divf %346, %347 : vector<2x50xf32>
    %349 = arith.mulf %340, %322 : vector<2x50xf32>
    %350 = arith.mulf %334, %342 : vector<2x50xf32>
    %351 = arith.addf %349, %350 : vector<2x50xf32>
    %352 = math.tanh %351 : vector<2x50xf32>
    %353 = arith.mulf %348, %352 : vector<2x50xf32>
    %c18 = arith.constant 18 : index
    %c0_69 = arith.constant 0 : index
    %354 = vector.load %arg11[%c18, %c0_69] : memref<20x50xf32, #tpu.memory_space<vmem>>, vector<2x50xf32>
    tpu.vector_store %arg11[%c18, %c0_69], %353 {strides = array<i32>} : memref<20x50xf32, #tpu.memory_space<vmem>>, vector<2x50xf32>,
    %c0_70 = arith.constant 0 : index
    %c0_71 = arith.constant 0 : index
    %355 = vector.load %arg9[%c0_70, %c0_71] : memref<2x50xf32, #tpu.memory_space<vmem>>, vector<2x50xf32>
    tpu.vector_store %arg9[%c0_70, %c0_71], %353 {strides = array<i32>} : memref<2x50xf32, #tpu.memory_space<vmem>>, vector<2x50xf32>,
    %c0_72 = arith.constant 0 : index
    %c0_73 = arith.constant 0 : index
    %356 = vector.load %arg10[%c0_72, %c0_73] : memref<2x50xf32, #tpu.memory_space<vmem>>, vector<2x50xf32>
    tpu.vector_store %arg10[%c0_72, %c0_73], %351 {strides = array<i32>} : memref<2x50xf32, #tpu.memory_space<vmem>>, vector<2x50xf32>,
    %c0_74 = arith.constant 0 : index
    %c0_75 = arith.constant 0 : index
    %357 = vector.load %arg11[%c0_74, %c0_75] : memref<20x50xf32, #tpu.memory_space<vmem>>, vector<20x50xf32>
    %c0_76 = arith.constant 0 : index
    %c0_77 = arith.constant 0 : index
    %358 = vector.load %arg6[%c0_76, %c0_77] : memref<50x6xf32, #tpu.memory_space<vmem>>, vector<50x6xf32>
    %cst_78 = arith.constant dense<0.000000e+00> : vector<20x6xf32>
    %359 = tpu.matmul %357, %358, %cst_78 {dimension_numbers = #tpu.dot_dimension_numbers<[1], [0], [0], [1], [0, 0, 1, 1], [], []>} : vector<20x50xf32>, vector<50x6xf32>, vector<20x6xf32> -> vector<20x6xf32>
    %c0_79 = arith.constant 0 : index
    %c0_80 = arith.constant 0 : index
    %360 = vector.load %arg7[%c0_79, %c0_80] : memref<1x6xf32, #tpu.memory_space<vmem>>, vector<1x6xf32>
    %361 = vector.broadcast %360 : vector<1x6xf32> to vector<20x6xf32>
    %362 = arith.addf %359, %361 : vector<20x6xf32>
    %c0_81 = arith.constant 0 : index
    %c0_82 = arith.constant 0 : index
    %363 = vector.load %arg8[%c0_81, %c0_82] : memref<20x6xf32, #tpu.memory_space<vmem>>, vector<20x6xf32>
    tpu.vector_store %arg8[%c0_81, %c0_82], %362 {strides = array<i32>} : memref<20x6xf32, #tpu.memory_space<vmem>>, vector<20x6xf32>,
    return
  }
}

</mosaic_0001>

<llo_original>
// kernel: lstm_model_backwards_forward.1
$region0: #{lstm_model_backwards_forward.1}
  #allocation0 [shape = 'u32[]', space=smem, size = 0x4, offset = 0x4, fixed_abs, tag = 'smem constant byte address 0x4 - core index']
  #allocation1 [shape = 'u32[144,128]{1,0:T(1,128)}', space=vmem, size = 0x12000, scoped, tag = 'internal scratch']
  #allocation2 [shape = 'f32[20,50]{1,0:T(8,128)}', space=vmem, size = 0x3000, scoped, tag = 'scratch operand']
  %s0 = inlined_call_operand.vmem [shape: f32[24,6], index: 0, kind: input, shape index: {}]
  %s1 = inlined_call_operand.vmem [shape: f32[2,50], index: 1, kind: input, shape index: {}]
  %s2 = inlined_call_operand.vmem [shape: f32[2,50], index: 2, kind: input, shape index: {}]
  %s3 = inlined_call_operand.vmem [shape: f32[6,512], index: 3, kind: input, shape index: {}]
  %s4 = inlined_call_operand.vmem [shape: f32[50,512], index: 4, kind: input, shape index: {}]
  %s5 = inlined_call_operand.vmem [shape: f32[1,512], index: 5, kind: input, shape index: {}]
  %s6 = inlined_call_operand.vmem [shape: f32[50,6], index: 6, kind: input, shape index: {}]
  %s7 = inlined_call_operand.vmem [shape: f32[1,6], index: 7, kind: input, shape index: {}]
  %s8 = inlined_call_operand.vmem [shape: f32[20,6], index: 8, kind: output, shape index: {0}]
  %s9 = inlined_call_operand.hbm [shape: f32[2,50], index: 9, kind: output, shape index: {1}]
  %s10 = inlined_call_operand.hbm [shape: f32[2,50], index: 10, kind: output, shape index: {2}]
  %11 = xla_tuple %s8, %s9, %s10
  %s12 = sld [smem:[#allocation0]]
  $region58: #{lstm_model_backwards_forward.1} parent=0
    _
  %s14 = ssub.s32 1, %s12
  %s15 = scalar_select 0, %s14, %s12
  $region1: #{lstm_model_backwards_forward.1} parent=0
    #allocation3 [shape = 'u8[1024]{0}', space=vmem, size = 0x400, scoped, tag = 'output window, operand 1, single buffered']
    #allocation4 [shape = 's32[1]{0}', space=sflag, size = 0x4, scoped, tag = 'scoped memory for lstm_model_backwards_forward.1']
    #allocation5 [shape = 'u8[1024]{0}', space=vmem, size = 0x400, scoped, tag = 'output window, operand 2, single buffered']
    #allocation6 [shape = 's32[1]{0}', space=sflag, size = 0x4, scoped, tag = 'scoped memory for lstm_model_backwards_forward.1']
    %16 = vsyncpa [#allocation4], 0
    %17 = vsyncpa [#allocation6], 0
    // Predicated region
    $region2: #{lstm_model_backwards_forward.1} parent=1 // pred_check
      _
    $region3: #{lstm_model_backwards_forward.1} parent=1 // pred_check_branch
      %19 = sbr.rel (0) target = $region5
    $region4: #{lstm_model_backwards_forward.1} parent=1 // pred_region
      _
    $region5: #{lstm_model_backwards_forward.1} parent=1 // pred_fallthru
      _
    // Predicated region
    $region6: #{lstm_model_backwards_forward.1} parent=1 // pred_check
      _
    $region7: #{lstm_model_backwards_forward.1} parent=1 // pred_check_branch
      %21 = sbr.rel (0) target = $region9
    $region8: #{lstm_model_backwards_forward.1} parent=1 // pred_region
      _
    $region9: #{lstm_model_backwards_forward.1} parent=1 // pred_fallthru
      _
    // Predicated region
    $region10: #{lstm_model_backwards_forward.1} parent=1 // pred_check
      _
    $region11: #{lstm_model_backwards_forward.1} parent=1 // pred_check_branch
      %23 = sbr.rel (0) target = $region13
    $region12: #{lstm_model_backwards_forward.1} parent=1 // pred_region
      _
    $region13: #{lstm_model_backwards_forward.1} parent=1 // pred_fallthru
      _
    // Predicated region
    $region14: #{lstm_model_backwards_forward.1} parent=1 // pred_check
      _
    $region15: #{lstm_model_backwards_forward.1} parent=1 // pred_check_branch
      %25 = sbr.rel (0) target = $region17
    $region16: #{lstm_model_backwards_forward.1} parent=1 // pred_region
      _
    $region17: #{lstm_model_backwards_forward.1} parent=1 // pred_fallthru
      _
    // Predicated region
    $region18: #{lstm_model_backwards_forward.1} parent=1 // pred_check
      _
    $region19: #{lstm_model_backwards_forward.1} parent=1 // pred_check_branch
      %27 = sbr.rel (0) target = $region21
    $region20: #{lstm_model_backwards_forward.1} parent=1 // pred_region
      _
    $region21: #{lstm_model_backwards_forward.1} parent=1 // pred_fallthru
      _
    // Predicated region
    $region22: #{lstm_model_backwards_forward.1} parent=1 // pred_check
      _
    $region23: #{lstm_model_backwards_forward.1} parent=1 // pred_check_branch
      %29 = sbr.rel (0) target = $region25
    $region24: #{lstm_model_backwards_forward.1} parent=1 // pred_region
      _
    $region25: #{lstm_model_backwards_forward.1} parent=1 // pred_fallthru
      _
    // Predicated region
    $region26: #{lstm_model_backwards_forward.1} parent=1 // pred_check
      _
    $region27: #{lstm_model_backwards_forward.1} parent=1 // pred_check_branch
      %31 = sbr.rel (0) target = $region29
    $region28: #{lstm_model_backwards_forward.1} parent=1 // pred_region
      _
    $region29: #{lstm_model_backwards_forward.1} parent=1 // pred_fallthru
      _
    // Predicated region
    $region30: #{lstm_model_backwards_forward.1} parent=1 // pred_check
      _
    $region31: #{lstm_model_backwards_forward.1} parent=1 // pred_check_branch
      %33 = sbr.rel (0) target = $region33
    $region32: #{lstm_model_backwards_forward.1} parent=1 // pred_region
      _
    $region33: #{lstm_model_backwards_forward.1} parent=1 // pred_fallthru
      _
    %v34 = vld [vmem:[%s0] sm:$0xff]
    %v35 = vld [vmem:[%s0 + $0x8] sm:$0xff]
    %v36 = vld [vmem:[%s0 + $0x10] sm:$0xff]
    %v37 = vld [vmem:[%s3] sm:$0x3f]
    %v38 = vld [vmem:[%s3 + $0x8] sm:$0x3f]
    %v39 = vld [vmem:[%s3 + $0x10] sm:$0x3f]
    %v40 = vld [vmem:[%s3 + $0x18] sm:$0x3f]
    %v41 = vld [vmem:[%s5] sm:$0xf]
    %v43 = vlaneseq
    %v44 = vshrl.u32 %v43, 7
    %v45 = vsub.s32 0, %v44
    %v46 = vrot.slane %v41, %v45
    %v47 = vlaneseq
    %v48 = vshrl.u32 %v47, 7
    %v49 = vsub.s32 1, %v48
    %v50 = vrot.slane %v41, %v49
    %v51 = vlaneseq
    %v52 = vshrl.u32 %v51, 7
    %v53 = vsub.s32 2, %v52
    %v54 = vrot.slane %v41, %v53
    %v55 = vlaneseq
    %v56 = vshrl.u32 %v55, 7
    %v57 = vsub.s32 3, %v56
    %v58 = vrot.slane %v41, %v57
    %vm63 = vcmask 48128
    %v65 = vsel %vm63, %v34, 0
    %v68 = vsel %vm63, %v35, 0
    %v71 = vsel %vm63, %v36, 0
    %vm73 = vcmask 1045504
    %v75 = vsel %vm73, %v37, 0
    %v78 = vsel %vm73, %v38, 0
    %v81 = vsel %vm73, %v39, 0
    %v84 = vsel %vm73, %v40, 0
    %86 = vmatprep.subr.mxu0 0.0
    %87 = vmatpush1.msra.mxu0 0.0
    %88 = vmatprep.subr.mxu0 0.0
    %89 = vmatpush1.msra.mxu0 0.0
    %90 = vmatprep.subr.mxu0 0.0
    %91 = vmatpush1.msra.mxu0 0.0
    %92 = vmatprep.subr.mxu0 0.0
    %93 = vmatpush1.msra.mxu0 0.0
    %94 = vmatprep.subr.mxu0 0.0
    %95 = vmatpush1.msra.mxu0 0.0
    %96 = vmatprep.subr.mxu0 0.0
    %97 = vmatpush1.msra.mxu0 0.0
    %98 = vmatprep.subr.mxu0 0.0
    %99 = vmatpush1.msra.mxu0 0.0
    %100 = vmatprep.subr.mxu0 0.0
    %101 = vmatpush1.msra.mxu0 0.0
    %102 = vmatprep.subr.mxu0 0.0
    %103 = vmatpush1.msra.mxu0 0.0
    %104 = vmatprep.subr.mxu0 0.0
    %105 = vmatpush1.msra.mxu0 0.0
    %106 = vmatprep.subr.mxu0 0.0
    %107 = vmatpush1.msra.mxu0 0.0
    %108 = vmatprep.subr.mxu0 0.0
    %109 = vmatpush1.msra.mxu0 0.0
    %110 = vmatprep.subr.mxu0 0.0
    %111 = vmatpush1.msra.mxu0 0.0
    %112 = vmatprep.subr.mxu0 0.0
    %113 = vmatpush1.msra.mxu0 0.0
    %114 = vmatprep.subr.mxu0 0.0
    %115 = vmatpush1.msra.mxu0 0.0
    %116 = vmatprep.subr.mxu0 %v78
    %117 = vmatpush1.msra.mxu0 %v75
    %118 = vmatprep.subr.mxu0 0.0
    %119 = vmatpush2.msra.mxu0 0.0
    %120 = vmatprep.subr.mxu0 0.0
    %121 = vmatpush2.msra.mxu0 0.0
    %122 = vmatprep.subr.mxu0 0.0
    %123 = vmatpush2.msra.mxu0 0.0
    %124 = vmatprep.subr.mxu0 0.0
    %125 = vmatpush2.msra.mxu0 0.0
    %126 = vmatprep.subr.mxu0 0.0
    %127 = vmatpush2.msra.mxu0 0.0
    %128 = vmatprep.subr.mxu0 0.0
    %129 = vmatpush2.msra.mxu0 0.0
    %130 = vmatprep.subr.mxu0 0.0
    %131 = vmatpush2.msra.mxu0 0.0
    %132 = vmatprep.subr.mxu0 0.0
    %133 = vmatpush2.msra.mxu0 0.0
    %134 = vmatprep.subr.mxu0 0.0
    %135 = vmatpush2.msra.mxu0 0.0
    %136 = vmatprep.subr.mxu0 0.0
    %137 = vmatpush2.msra.mxu0 0.0
    %138 = vmatprep.subr.mxu0 0.0
    %139 = vmatpush2.msra.mxu0 0.0
    %140 = vmatprep.subr.mxu0 0.0
    %141 = vmatpush2.msra.mxu0 0.0
    %142 = vmatprep.subr.mxu0 0.0
    %143 = vmatpush2.msra.mxu0 0.0
    %144 = vmatprep.subr.mxu0 0.0
    %145 = vmatpush2.msra.mxu0 0.0
    %146 = vmatprep.subr.mxu0 0.0
    %147 = vmatpush2.msra.mxu0 0.0
    %148 = vmatprep.subr.mxu0 0.0
    %149 = vmatpush2.msra.mxu0 0.0
    %150 = vmatprep.mubr.f32.mxu0 0.0
    %151 = vmatmul.mubr.f32.gmra.mxu0 %v65
    %v152 = vpop.f32.mrf.mxu0
    %v153 = vadd.f32 %v46, %v152
    %v154 = vpop.f32.mrf.mxu0
    %v155 = vadd.f32 %v50, %v154
    %156 = vmatprep.mubr.f32.mxu0 0.0
    %157 = vmatmul.mubr.f32.gmra.mxu0 %v68
    %v158 = vpop.f32.mrf.mxu0
    %v159 = vadd.f32 %v46, %v158
    %v160 = vpop.f32.mrf.mxu0
    %v161 = vadd.f32 %v50, %v160
    %162 = vmatprep.mubr.f32.mxu0 0.0
    %163 = vmatmul.mubr.f32.gmra.mxu0 %v71
    %v164 = vpop.f32.mrf.mxu0
    %v165 = vadd.f32 %v46, %v164
    %v166 = vpop.f32.mrf.mxu0
    %v167 = vadd.f32 %v50, %v166
    %168 = vdwg.mxu0
    %169 = vmatprep.subr.mxu0 0.0
    %170 = vmatpush1.msra.mxu0 0.0
    %171 = vmatprep.subr.mxu0 0.0
    %172 = vmatpush1.msra.mxu0 0.0
    %173 = vmatprep.subr.mxu0 0.0
    %174 = vmatpush1.msra.mxu0 0.0
    %175 = vmatprep.subr.mxu0 0.0
    %176 = vmatpush1.msra.mxu0 0.0
    %177 = vmatprep.subr.mxu0 0.0
    %178 = vmatpush1.msra.mxu0 0.0
    %179 = vmatprep.subr.mxu0 0.0
    %180 = vmatpush1.msra.mxu0 0.0
    %181 = vmatprep.subr.mxu0 0.0
    %182 = vmatpush1.msra.mxu0 0.0
    %183 = vmatprep.subr.mxu0 0.0
    %184 = vmatpush1.msra.mxu0 0.0
    %185 = vmatprep.subr.mxu0 0.0
    %186 = vmatpush1.msra.mxu0 0.0
    %187 = vmatprep.subr.mxu0 0.0
    %188 = vmatpush1.msra.mxu0 0.0
    %189 = vmatprep.subr.mxu0 0.0
    %190 = vmatpush1.msra.mxu0 0.0
    %191 = vmatprep.subr.mxu0 0.0
    %192 = vmatpush1.msra.mxu0 0.0
    %193 = vmatprep.subr.mxu0 0.0
    %194 = vmatpush1.msra.mxu0 0.0
    %195 = vmatprep.subr.mxu0 0.0
    %196 = vmatpush1.msra.mxu0 0.0
    %197 = vmatprep.subr.mxu0 0.0
    %198 = vmatpush1.msra.mxu0 0.0
    %199 = vmatprep.subr.mxu0 %v84
    %200 = vmatpush1.msra.mxu0 %v81
    %201 = vmatprep.subr.mxu0 0.0
    %202 = vmatpush2.msra.mxu0 0.0
    %203 = vmatprep.subr.mxu0 0.0
    %204 = vmatpush2.msra.mxu0 0.0
    %205 = vmatprep.subr.mxu0 0.0
    %206 = vmatpush2.msra.mxu0 0.0
    %207 = vmatprep.subr.mxu0 0.0
    %208 = vmatpush2.msra.mxu0 0.0
    %209 = vmatprep.subr.mxu0 0.0
    %210 = vmatpush2.msra.mxu0 0.0
    %211 = vmatprep.subr.mxu0 0.0
    %212 = vmatpush2.msra.mxu0 0.0
    %213 = vmatprep.subr.mxu0 0.0
    %214 = vmatpush2.msra.mxu0 0.0
    %215 = vmatprep.subr.mxu0 0.0
    %216 = vmatpush2.msra.mxu0 0.0
    %217 = vmatprep.subr.mxu0 0.0
    %218 = vmatpush2.msra.mxu0 0.0
    %219 = vmatprep.subr.mxu0 0.0
    %220 = vmatpush2.msra.mxu0 0.0
    %221 = vmatprep.subr.mxu0 0.0
    %222 = vmatpush2.msra.mxu0 0.0
    %223 = vmatprep.subr.mxu0 0.0
    %224 = vmatpush2.msra.mxu0 0.0
    %225 = vmatprep.subr.mxu0 0.0
    %226 = vmatpush2.msra.mxu0 0.0
    %227 = vmatprep.subr.mxu0 0.0
    %228 = vmatpush2.msra.mxu0 0.0
    %229 = vmatprep.subr.mxu0 0.0
    %230 = vmatpush2.msra.mxu0 0.0
    %231 = vmatprep.subr.mxu0 0.0
    %232 = vmatpush2.msra.mxu0 0.0
    %233 = vmatprep.mubr.f32.mxu0 0.0
    %234 = vmatmul.mubr.f32.gmra.mxu0 %v65
    %v235 = vpop.f32.mrf.mxu0
    %v236 = vadd.f32 %v54, %v235
    %v237 = vpop.f32.mrf.mxu0
    %v238 = vadd.f32 %v58, %v237
    %239 = vmatprep.mubr.f32.mxu0 0.0
    %240 = vmatmul.mubr.f32.gmra.mxu0 %v68
    %v241 = vpop.f32.mrf.mxu0
    %v242 = vadd.f32 %v54, %v241
    %v243 = vpop.f32.mrf.mxu0
    %v244 = vadd.f32 %v58, %v243
    %245 = vmatprep.mubr.f32.mxu0 0.0
    %246 = vmatmul.mubr.f32.gmra.mxu0 %v71
    %v247 = vpop.f32.mrf.mxu0
    %v248 = vadd.f32 %v54, %v247
    %v249 = vpop.f32.mrf.mxu0
    %v250 = vadd.f32 %v58, %v249
    %251 = vdwg.mxu0
    %v252 = vld [vmem:[%s4] sm:$0xff]
    %v253 = vld [vmem:[%s4 + $0x8] sm:$0xff]
    %v254 = vld [vmem:[%s4 + $0x10] sm:$0xff]
    %v255 = vld [vmem:[%s4 + $0x18] sm:$0xff]
    %v256 = vld [vmem:[%s4 + $0x20] sm:$0xff]
    %v257 = vld [vmem:[%s4 + $0x28] sm:$0xff]
    %v258 = vld [vmem:[%s4 + $0x30] sm:$0xff]
    %v259 = vld [vmem:[%s4 + $0x38] sm:$0xff]
    %v260 = vld [vmem:[%s4 + $0x40] sm:$0xff]
    %v261 = vld [vmem:[%s4 + $0x48] sm:$0xff]
    %v262 = vld [vmem:[%s4 + $0x50] sm:$0xff]
    %v263 = vld [vmem:[%s4 + $0x58] sm:$0xff]
    %v264 = vld [vmem:[%s4 + $0x60] sm:$0xff]
    %v265 = vld [vmem:[%s4 + $0x68] sm:$0xff]
    %v266 = vld [vmem:[%s4 + $0x70] sm:$0xff]
    %v267 = vld [vmem:[%s4 + $0x78] sm:$0xff]
    %v268 = vld [vmem:[%s4 + $0x80] sm:$0xff]
    %v269 = vld [vmem:[%s4 + $0x88] sm:$0xff]
    %v270 = vld [vmem:[%s4 + $0x90] sm:$0xff]
    %v271 = vld [vmem:[%s4 + $0x98] sm:$0xff]
    %v272 = vld [vmem:[%s4 + $0xa0] sm:$0xff]
    %v273 = vld [vmem:[%s4 + $0xa8] sm:$0xff]
    %v274 = vld [vmem:[%s4 + $0xb0] sm:$0xff]
    %v275 = vld [vmem:[%s4 + $0xb8] sm:$0xff]
    %v276 = vld [vmem:[%s4 + $0xc0] sm:$0x3]
    %v277 = vld [vmem:[%s4 + $0xc8] sm:$0x3]
    %v278 = vld [vmem:[%s4 + $0xd0] sm:$0x3]
    %v279 = vld [vmem:[%s4 + $0xd8] sm:$0x3]
    %v280 = vld [vmem:[%s1] sm:$0x3]
    %v281 = vld [vmem:[%s2] sm:$0x3]
    %vm282 = vcmask 408576
    %v284 = vsel %vm282, %v280, 0
    %vm286 = vcmask 1041408
    %v288 = vsel %vm286, %v276, 0
    %v291 = vsel %vm286, %v277, 0
    %v294 = vsel %vm286, %v278, 0
    %v297 = vsel %vm286, %v279, 0
    %299 = vmatprep.subr.mxu0 0.0
    %300 = vmatpush1.msra.mxu0 0.0
    %301 = vmatprep.subr.mxu0 0.0
    %302 = vmatpush1.msra.mxu0 0.0
    %303 = vmatprep.subr.mxu0 0.0
    %304 = vmatpush1.msra.mxu0 0.0
    %305 = vmatprep.subr.mxu0 0.0
    %306 = vmatpush1.msra.mxu0 0.0
    %307 = vmatprep.subr.mxu0 0.0
    %308 = vmatpush1.msra.mxu0 0.0
    %309 = vmatprep.subr.mxu0 0.0
    %310 = vmatpush1.msra.mxu0 0.0
    %311 = vmatprep.subr.mxu0 0.0
    %312 = vmatpush1.msra.mxu0 0.0
    %313 = vmatprep.subr.mxu0 0.0
    %314 = vmatpush1.msra.mxu0 0.0
    %315 = vmatprep.subr.mxu0 0.0
    %316 = vmatpush1.msra.mxu0 0.0
    %317 = vmatprep.subr.mxu0 %v291
    %318 = vmatpush1.msra.mxu0 %v288
    %319 = vmatprep.subr.mxu0 %v273
    %320 = vmatpush1.msra.mxu0 %v272
    %321 = vmatprep.subr.mxu0 %v269
    %322 = vmatpush1.msra.mxu0 %v268
    %323 = vmatprep.subr.mxu0 %v265
    %324 = vmatpush1.msra.mxu0 %v264
    %325 = vmatprep.subr.mxu0 %v261
    %326 = vmatpush1.msra.mxu0 %v260
    %327 = vmatprep.subr.mxu0 %v257
    %328 = vmatpush1.msra.mxu0 %v256
    %329 = vmatprep.subr.mxu0 %v253
    %330 = vmatpush1.msra.mxu0 %v252
    %331 = vmatprep.subr.mxu0 0.0
    %332 = vmatpush2.msra.mxu0 0.0
    %333 = vmatprep.subr.mxu0 0.0
    %334 = vmatpush2.msra.mxu0 0.0
    %335 = vmatprep.subr.mxu0 0.0
    %336 = vmatpush2.msra.mxu0 0.0
    %337 = vmatprep.subr.mxu0 0.0
    %338 = vmatpush2.msra.mxu0 0.0
    %339 = vmatprep.subr.mxu0 0.0
    %340 = vmatpush2.msra.mxu0 0.0
    %341 = vmatprep.subr.mxu0 0.0
    %342 = vmatpush2.msra.mxu0 0.0
    %343 = vmatprep.subr.mxu0 0.0
    %344 = vmatpush2.msra.mxu0 0.0
    %345 = vmatprep.subr.mxu0 0.0
    %346 = vmatpush2.msra.mxu0 0.0
    %347 = vmatprep.subr.mxu0 0.0
    %348 = vmatpush2.msra.mxu0 0.0
    %349 = vmatprep.subr.mxu0 0.0
    %350 = vmatpush2.msra.mxu0 0.0
    %351 = vmatprep.subr.mxu0 0.0
    %352 = vmatpush2.msra.mxu0 0.0
    %353 = vmatprep.subr.mxu0 0.0
    %354 = vmatpush2.msra.mxu0 0.0
    %355 = vmatprep.subr.mxu0 0.0
    %356 = vmatpush2.msra.mxu0 0.0
    %357 = vmatprep.subr.mxu0 0.0
    %358 = vmatpush2.msra.mxu0 0.0
    %359 = vmatprep.subr.mxu0 0.0
    %360 = vmatpush2.msra.mxu0 0.0
    %361 = vmatprep.subr.mxu0 0.0
    %362 = vmatpush2.msra.mxu0 0.0
    %363 = vmatprep.mubr.f32.mxu0 0.0
    %364 = vmatmul.mubr.f32.gmra.mxu0 %v284
    %v365 = vpop.f32.mrf.mxu0
    %v366 = vadd.f32 0.0, %v365
    %v367 = vpop.f32.mrf.mxu0
    %v368 = vadd.f32 0.0, %v367
    %369 = vdwg.mxu0
    %370 = vmatprep.subr.mxu0 0.0
    %371 = vmatpush1.msra.mxu0 0.0
    %372 = vmatprep.subr.mxu0 0.0
    %373 = vmatpush1.msra.mxu0 0.0
    %374 = vmatprep.subr.mxu0 0.0
    %375 = vmatpush1.msra.mxu0 0.0
    %376 = vmatprep.subr.mxu0 0.0
    %377 = vmatpush1.msra.mxu0 0.0
    %378 = vmatprep.subr.mxu0 0.0
    %379 = vmatpush1.msra.mxu0 0.0
    %380 = vmatprep.subr.mxu0 0.0
    %381 = vmatpush1.msra.mxu0 0.0
    %382 = vmatprep.subr.mxu0 0.0
    %383 = vmatpush1.msra.mxu0 0.0
    %384 = vmatprep.subr.mxu0 0.0
    %385 = vmatpush1.msra.mxu0 0.0
    %386 = vmatprep.subr.mxu0 0.0
    %387 = vmatpush1.msra.mxu0 0.0
    %388 = vmatprep.subr.mxu0 %v297
    %389 = vmatpush1.msra.mxu0 %v294
    %390 = vmatprep.subr.mxu0 %v275
    %391 = vmatpush1.msra.mxu0 %v274
    %392 = vmatprep.subr.mxu0 %v271
    %393 = vmatpush1.msra.mxu0 %v270
    %394 = vmatprep.subr.mxu0 %v267
    %395 = vmatpush1.msra.mxu0 %v266
    %396 = vmatprep.subr.mxu0 %v263
    %397 = vmatpush1.msra.mxu0 %v262
    %398 = vmatprep.subr.mxu0 %v259
    %399 = vmatpush1.msra.mxu0 %v258
    %400 = vmatprep.subr.mxu0 %v255
    %401 = vmatpush1.msra.mxu0 %v254
    %402 = vmatprep.subr.mxu0 0.0
    %403 = vmatpush2.msra.mxu0 0.0
    %404 = vmatprep.subr.mxu0 0.0
    %405 = vmatpush2.msra.mxu0 0.0
    %406 = vmatprep.subr.mxu0 0.0
    %407 = vmatpush2.msra.mxu0 0.0
    %408 = vmatprep.subr.mxu0 0.0
    %409 = vmatpush2.msra.mxu0 0.0
    %410 = vmatprep.subr.mxu0 0.0
    %411 = vmatpush2.msra.mxu0 0.0
    %412 = vmatprep.subr.mxu0 0.0
    %413 = vmatpush2.msra.mxu0 0.0
    %414 = vmatprep.subr.mxu0 0.0
    %415 = vmatpush2.msra.mxu0 0.0
    %416 = vmatprep.subr.mxu0 0.0
    %417 = vmatpush2.msra.mxu0 0.0
    %418 = vmatprep.subr.mxu0 0.0
    %419 = vmatpush2.msra.mxu0 0.0
    %420 = vmatprep.subr.mxu0 0.0
    %421 = vmatpush2.msra.mxu0 0.0
    %422 = vmatprep.subr.mxu0 0.0
    %423 = vmatpush2.msra.mxu0 0.0
    %424 = vmatprep.subr.mxu0 0.0
    %425 = vmatpush2.msra.mxu0 0.0
    %426 = vmatprep.subr.mxu0 0.0
    %427 = vmatpush2.msra.mxu0 0.0
    %428 = vmatprep.subr.mxu0 0.0
    %429 = vmatpush2.msra.mxu0 0.0
    %430 = vmatprep.subr.mxu0 0.0
    %431 = vmatpush2.msra.mxu0 0.0
    %432 = vmatprep.subr.mxu0 0.0
    %433 = vmatpush2.msra.mxu0 0.0
    %434 = vmatprep.mubr.f32.mxu0 0.0
    %435 = vmatmul.mubr.f32.gmra.mxu0 %v284
    %v436 = vpop.f32.mrf.mxu0
    %v437 = vadd.f32 0.0, %v436
    %v438 = vpop.f32.mrf.mxu0
    %v439 = vadd.f32 0.0, %v438
    %440 = vdwg.mxu0
    %v441 = vadd.f32 %v153, %v366
    %v442 = vadd.f32 %v155, %v368
    %v443 = vadd.f32 %v236, %v437
    %v444 = vadd.f32 %v238, %v439
    %v445 = vxor.u32 %v441, 2147483648
    %v446 = vmul.f32 %v445, 1.442695
    %v447 = vpow.pop %v446
    %v448 = vadd.f32 %v447, 1.0
    %v449 = vrcp.pop %v448
    %v450 = vmul.f32 1.0, %v449
    %v451 = vxor.u32 %v442, 2147483648
    %v452 = vmul.f32 %v451, 1.442695
    %v453 = vpow.pop %v452
    %v454 = vadd.f32 %v453, 1.0
    %v455 = vrcp.pop %v454
    %v456 = vmul.f32 1.0, %v455
    %v457 = vtanh.pop %v443
    %v458 = vxor.u32 %v444, 2147483648
    %v459 = vmul.f32 %v458, 1.442695
    %v460 = vpow.pop %v459
    %v461 = vadd.f32 %v460, 1.0
    %v462 = vrcp.pop %v461
    %v463 = vmul.f32 1.0, %v462
    %v464 = vmul.f32 %v456, %v281
    %v465 = vmul.f32 %v450, %v457
    %v466 = vadd.f32 %v464, %v465
    %v467 = vtanh.pop %v466
    %v468 = vmul.f32 %v463, %v467
    %v470 = vsel %vm282, %v468, 0
    %472 = vmatprep.subr.mxu0 0.0
    %473 = vmatpush1.msra.mxu0 0.0
    %474 = vmatprep.subr.mxu0 0.0
    %475 = vmatpush1.msra.mxu0 0.0
    %476 = vmatprep.subr.mxu0 0.0
    %477 = vmatpush1.msra.mxu0 0.0
    %478 = vmatprep.subr.mxu0 0.0
    %479 = vmatpush1.msra.mxu0 0.0
    %480 = vmatprep.subr.mxu0 0.0
    %481 = vmatpush1.msra.mxu0 0.0
    %482 = vmatprep.subr.mxu0 0.0
    %483 = vmatpush1.msra.mxu0 0.0
    %484 = vmatprep.subr.mxu0 0.0
    %485 = vmatpush1.msra.mxu0 0.0
    %486 = vmatprep.subr.mxu0 0.0
    %487 = vmatpush1.msra.mxu0 0.0
    %488 = vmatprep.subr.mxu0 0.0
    %489 = vmatpush1.msra.mxu0 0.0
    %490 = vmatprep.subr.mxu0 %v291
    %491 = vmatpush1.msra.mxu0 %v288
    %492 = vmatprep.subr.mxu0 %v273
    %493 = vmatpush1.msra.mxu0 %v272
    %494 = vmatprep.subr.mxu0 %v269
    %495 = vmatpush1.msra.mxu0 %v268
    %496 = vmatprep.subr.mxu0 %v265
    %497 = vmatpush1.msra.mxu0 %v264
    %498 = vmatprep.subr.mxu0 %v261
    %499 = vmatpush1.msra.mxu0 %v260
    %500 = vmatprep.subr.mxu0 %v257
    %501 = vmatpush1.msra.mxu0 %v256
    %502 = vmatprep.subr.mxu0 %v253
    %503 = vmatpush1.msra.mxu0 %v252
    %504 = vmatprep.subr.mxu0 0.0
    %505 = vmatpush2.msra.mxu0 0.0
    %506 = vmatprep.subr.mxu0 0.0
    %507 = vmatpush2.msra.mxu0 0.0
    %508 = vmatprep.subr.mxu0 0.0
    %509 = vmatpush2.msra.mxu0 0.0
    %510 = vmatprep.subr.mxu0 0.0
    %511 = vmatpush2.msra.mxu0 0.0
    %512 = vmatprep.subr.mxu0 0.0
    %513 = vmatpush2.msra.mxu0 0.0
    %514 = vmatprep.subr.mxu0 0.0
    %515 = vmatpush2.msra.mxu0 0.0
    %516 = vmatprep.subr.mxu0 0.0
    %517 = vmatpush2.msra.mxu0 0.0
    %518 = vmatprep.subr.mxu0 0.0
    %519 = vmatpush2.msra.mxu0 0.0
    %520 = vmatprep.subr.mxu0 0.0
    %521 = vmatpush2.msra.mxu0 0.0
    %522 = vmatprep.subr.mxu0 0.0
    %523 = vmatpush2.msra.mxu0 0.0
    %524 = vmatprep.subr.mxu0 0.0
    %525 = vmatpush2.msra.mxu0 0.0
    %526 = vmatprep.subr.mxu0 0.0
    %527 = vmatpush2.msra.mxu0 0.0
    %528 = vmatprep.subr.mxu0 0.0
    %529 = vmatpush2.msra.mxu0 0.0
    %530 = vmatprep.subr.mxu0 0.0
    %531 = vmatpush2.msra.mxu0 0.0
    %532 = vmatprep.subr.mxu0 0.0
    %533 = vmatpush2.msra.mxu0 0.0
    %534 = vmatprep.subr.mxu0 0.0
    %535 = vmatpush2.msra.mxu0 0.0
    %536 = vmatprep.mubr.f32.mxu0 0.0
    %537 = vmatmul.mubr.f32.gmra.mxu0 %v470
    %v538 = vpop.f32.mrf.mxu0
    %v539 = vadd.f32 0.0, %v538
    %v540 = vpop.f32.mrf.mxu0
    %v541 = vadd.f32 0.0, %v540
    %542 = vdwg.mxu0
    %543 = vmatprep.subr.mxu0 0.0
    %544 = vmatpush1.msra.mxu0 0.0
    %545 = vmatprep.subr.mxu0 0.0
    %546 = vmatpush1.msra.mxu0 0.0
    %547 = vmatprep.subr.mxu0 0.0
    %548 = vmatpush1.msra.mxu0 0.0
    %549 = vmatprep.subr.mxu0 0.0
    %550 = vmatpush1.msra.mxu0 0.0
    %551 = vmatprep.subr.mxu0 0.0
    %552 = vmatpush1.msra.mxu0 0.0
    %553 = vmatprep.subr.mxu0 0.0
    %554 = vmatpush1.msra.mxu0 0.0
    %555 = vmatprep.subr.mxu0 0.0
    %556 = vmatpush1.msra.mxu0 0.0
    %557 = vmatprep.subr.mxu0 0.0
    %558 = vmatpush1.msra.mxu0 0.0
    %559 = vmatprep.subr.mxu0 0.0
    %560 = vmatpush1.msra.mxu0 0.0
    %561 = vmatprep.subr.mxu0 %v297
    %562 = vmatpush1.msra.mxu0 %v294
    %563 = vmatprep.subr.mxu0 %v275
    %564 = vmatpush1.msra.mxu0 %v274
    %565 = vmatprep.subr.mxu0 %v271
    %566 = vmatpush1.msra.mxu0 %v270
    %567 = vmatprep.subr.mxu0 %v267
    %568 = vmatpush1.msra.mxu0 %v266
    %569 = vmatprep.subr.mxu0 %v263
    %570 = vmatpush1.msra.mxu0 %v262
    %571 = vmatprep.subr.mxu0 %v259
    %572 = vmatpush1.msra.mxu0 %v258
    %573 = vmatprep.subr.mxu0 %v255
    %574 = vmatpush1.msra.mxu0 %v254
    %575 = vmatprep.subr.mxu0 0.0
    %576 = vmatpush2.msra.mxu0 0.0
    %577 = vmatprep.subr.mxu0 0.0
    %578 = vmatpush2.msra.mxu0 0.0
    %579 = vmatprep.subr.mxu0 0.0
    %580 = vmatpush2.msra.mxu0 0.0
    %581 = vmatprep.subr.mxu0 0.0
    %582 = vmatpush2.msra.mxu0 0.0
    %583 = vmatprep.subr.mxu0 0.0
    %584 = vmatpush2.msra.mxu0 0.0
    %585 = vmatprep.subr.mxu0 0.0
    %586 = vmatpush2.msra.mxu0 0.0
    %587 = vmatprep.subr.mxu0 0.0
    %588 = vmatpush2.msra.mxu0 0.0
    %589 = vmatprep.subr.mxu0 0.0
    %590 = vmatpush2.msra.mxu0 0.0
    %591 = vmatprep.subr.mxu0 0.0
    %592 = vmatpush2.msra.mxu0 0.0
    %593 = vmatprep.subr.mxu0 0.0
    %594 = vmatpush2.msra.mxu0 0.0
    %595 = vmatprep.subr.mxu0 0.0
    %596 = vmatpush2.msra.mxu0 0.0
    %597 = vmatprep.subr.mxu0 0.0
    %598 = vmatpush2.msra.mxu0 0.0
    %599 = vmatprep.subr.mxu0 0.0
    %600 = vmatpush2.msra.mxu0 0.0
    %601 = vmatprep.subr.mxu0 0.0
    %602 = vmatpush2.msra.mxu0 0.0
    %603 = vmatprep.subr.mxu0 0.0
    %604 = vmatpush2.msra.mxu0 0.0
    %605 = vmatprep.subr.mxu0 0.0
    %606 = vmatpush2.msra.mxu0 0.0
    %607 = vmatprep.mubr.f32.mxu0 0.0
    %608 = vmatmul.mubr.f32.gmra.mxu0 %v470
    %v609 = vpop.f32.mrf.mxu0
    %v610 = vadd.f32 0.0, %v609
    %v611 = vpop.f32.mrf.mxu0
    %v612 = vadd.f32 0.0, %v611
    %613 = vdwg.mxu0
    %v618 = vrot.slane %v539, 6
    %v619 = vrot.slane %v541, 6
    %v620 = vrot.slane %v610, 6
    %v621 = vrot.slane %v612, 6
    %v626 = vadd.f32 %v153, %v618
    %v627 = vadd.f32 %v155, %v619
    %v628 = vadd.f32 %v236, %v620
    %v629 = vadd.f32 %v238, %v621
    %v630 = vxor.u32 %v626, 2147483648
    %v631 = vmul.f32 %v630, 1.442695
    %v632 = vpow.pop %v631
    %v633 = vadd.f32 %v632, 1.0
    %v634 = vrcp.pop %v633
    %v635 = vmul.f32 1.0, %v634
    %v636 = vxor.u32 %v627, 2147483648
    %v637 = vmul.f32 %v636, 1.442695
    %v638 = vpow.pop %v637
    %v639 = vadd.f32 %v638, 1.0
    %v640 = vrcp.pop %v639
    %v641 = vmul.f32 1.0, %v640
    %v642 = vtanh.pop %v628
    %v643 = vxor.u32 %v629, 2147483648
    %v644 = vmul.f32 %v643, 1.442695
    %v645 = vpow.pop %v644
    %v646 = vadd.f32 %v645, 1.0
    %v647 = vrcp.pop %v646
    %v648 = vmul.f32 1.0, %v647
    %v650 = vrot.slane %v466, 6
    %v652 = vmul.f32 %v641, %v650
    %v653 = vmul.f32 %v635, %v642
    %v654 = vadd.f32 %v652, %v653
    %v655 = vtanh.pop %v654
    %v656 = vmul.f32 %v648, %v655
    %v658 = vrot.slane %v656, 2
    %v659 = vsel %vm282, %v658, 0
    %661 = vmatprep.subr.mxu0 0.0
    %662 = vmatpush1.msra.mxu0 0.0
    %663 = vmatprep.subr.mxu0 0.0
    %664 = vmatpush1.msra.mxu0 0.0
    %665 = vmatprep.subr.mxu0 0.0
    %666 = vmatpush1.msra.mxu0 0.0
    %667 = vmatprep.subr.mxu0 0.0
    %668 = vmatpush1.msra.mxu0 0.0
    %669 = vmatprep.subr.mxu0 0.0
    %670 = vmatpush1.msra.mxu0 0.0
    %671 = vmatprep.subr.mxu0 0.0
    %672 = vmatpush1.msra.mxu0 0.0
    %673 = vmatprep.subr.mxu0 0.0
    %674 = vmatpush1.msra.mxu0 0.0
    %675 = vmatprep.subr.mxu0 0.0
    %676 = vmatpush1.msra.mxu0 0.0
    %677 = vmatprep.subr.mxu0 0.0
    %678 = vmatpush1.msra.mxu0 0.0
    %679 = vmatprep.subr.mxu0 %v291
    %680 = vmatpush1.msra.mxu0 %v288
    %681 = vmatprep.subr.mxu0 %v273
    %682 = vmatpush1.msra.mxu0 %v272
    %683 = vmatprep.subr.mxu0 %v269
    %684 = vmatpush1.msra.mxu0 %v268
    %685 = vmatprep.subr.mxu0 %v265
    %686 = vmatpush1.msra.mxu0 %v264
    %687 = vmatprep.subr.mxu0 %v261
    %688 = vmatpush1.msra.mxu0 %v260
    %689 = vmatprep.subr.mxu0 %v257
    %690 = vmatpush1.msra.mxu0 %v256
    %691 = vmatprep.subr.mxu0 %v253
    %692 = vmatpush1.msra.mxu0 %v252
    %693 = vmatprep.subr.mxu0 0.0
    %694 = vmatpush2.msra.mxu0 0.0
    %695 = vmatprep.subr.mxu0 0.0
    %696 = vmatpush2.msra.mxu0 0.0
    %697 = vmatprep.subr.mxu0 0.0
    %698 = vmatpush2.msra.mxu0 0.0
    %699 = vmatprep.subr.mxu0 0.0
    %700 = vmatpush2.msra.mxu0 0.0
    %701 = vmatprep.subr.mxu0 0.0
    %702 = vmatpush2.msra.mxu0 0.0
    %703 = vmatprep.subr.mxu0 0.0
    %704 = vmatpush2.msra.mxu0 0.0
    %705 = vmatprep.subr.mxu0 0.0
    %706 = vmatpush2.msra.mxu0 0.0
    %707 = vmatprep.subr.mxu0 0.0
    %708 = vmatpush2.msra.mxu0 0.0
    %709 = vmatprep.subr.mxu0 0.0
    %710 = vmatpush2.msra.mxu0 0.0
    %711 = vmatprep.subr.mxu0 0.0
    %712 = vmatpush2.msra.mxu0 0.0
    %713 = vmatprep.subr.mxu0 0.0
    %714 = vmatpush2.msra.mxu0 0.0
    %715 = vmatprep.subr.mxu0 0.0
    %716 = vmatpush2.msra.mxu0 0.0
    %717 = vmatprep.subr.mxu0 0.0
    %718 = vmatpush2.msra.mxu0 0.0
    %719 = vmatprep.subr.mxu0 0.0
    %720 = vmatpush2.msra.mxu0 0.0
    %721 = vmatprep.subr.mxu0 0.0
    %722 = vmatpush2.msra.mxu0 0.0
    %723 = vmatprep.subr.mxu0 0.0
    %724 = vmatpush2.msra.mxu0 0.0
    %725 = vmatprep.mubr.f32.mxu0 0.0
    %726 = vmatmul.mubr.f32.gmra.mxu0 %v659
    %v727 = vpop.f32.mrf.mxu0
    %v728 = vadd.f32 0.0, %v727
    %v729 = vpop.f32.mrf.mxu0
    %v730 = vadd.f32 0.0, %v729
    %731 = vdwg.mxu0
    %732 = vmatprep.subr.mxu0 0.0
    %733 = vmatpush1.msra.mxu0 0.0
    %734 = vmatprep.subr.mxu0 0.0
    %735 = vmatpush1.msra.mxu0 0.0
    %736 = vmatprep.subr.mxu0 0.0
    %737 = vmatpush1.msra.mxu0 0.0
    %738 = vmatprep.subr.mxu0 0.0
    %739 = vmatpush1.msra.mxu0 0.0
    %740 = vmatprep.subr.mxu0 0.0
    %741 = vmatpush1.msra.mxu0 0.0
    %742 = vmatprep.subr.mxu0 0.0
    %743 = vmatpush1.msra.mxu0 0.0
    %744 = vmatprep.subr.mxu0 0.0
    %745 = vmatpush1.msra.mxu0 0.0
    %746 = vmatprep.subr.mxu0 0.0
    %747 = vmatpush1.msra.mxu0 0.0
    %748 = vmatprep.subr.mxu0 0.0
    %749 = vmatpush1.msra.mxu0 0.0
    %750 = vmatprep.subr.mxu0 %v297
    %751 = vmatpush1.msra.mxu0 %v294
    %752 = vmatprep.subr.mxu0 %v275
    %753 = vmatpush1.msra.mxu0 %v274
    %754 = vmatprep.subr.mxu0 %v271
    %755 = vmatpush1.msra.mxu0 %v270
    %756 = vmatprep.subr.mxu0 %v267
    %757 = vmatpush1.msra.mxu0 %v266
    %758 = vmatprep.subr.mxu0 %v263
    %759 = vmatpush1.msra.mxu0 %v262
    %760 = vmatprep.subr.mxu0 %v259
    %761 = vmatpush1.msra.mxu0 %v258
    %762 = vmatprep.subr.mxu0 %v255
    %763 = vmatpush1.msra.mxu0 %v254
    %764 = vmatprep.subr.mxu0 0.0
    %765 = vmatpush2.msra.mxu0 0.0
    %766 = vmatprep.subr.mxu0 0.0
    %767 = vmatpush2.msra.mxu0 0.0
    %768 = vmatprep.subr.mxu0 0.0
    %769 = vmatpush2.msra.mxu0 0.0
    %770 = vmatprep.subr.mxu0 0.0
    %771 = vmatpush2.msra.mxu0 0.0
    %772 = vmatprep.subr.mxu0 0.0
    %773 = vmatpush2.msra.mxu0 0.0
    %774 = vmatprep.subr.mxu0 0.0
    %775 = vmatpush2.msra.mxu0 0.0
    %776 = vmatprep.subr.mxu0 0.0
    %777 = vmatpush2.msra.mxu0 0.0
    %778 = vmatprep.subr.mxu0 0.0
    %779 = vmatpush2.msra.mxu0 0.0
    %780 = vmatprep.subr.mxu0 0.0
    %781 = vmatpush2.msra.mxu0 0.0
    %782 = vmatprep.subr.mxu0 0.0
    %783 = vmatpush2.msra.mxu0 0.0
    %784 = vmatprep.subr.mxu0 0.0
    %785 = vmatpush2.msra.mxu0 0.0
    %786 = vmatprep.subr.mxu0 0.0
    %787 = vmatpush2.msra.mxu0 0.0
    %788 = vmatprep.subr.mxu0 0.0
    %789 = vmatpush2.msra.mxu0 0.0
    %790 = vmatprep.subr.mxu0 0.0
    %791 = vmatpush2.msra.mxu0 0.0
    %792 = vmatprep.subr.mxu0 0.0
    %793 = vmatpush2.msra.mxu0 0.0
    %794 = vmatprep.subr.mxu0 0.0
    %795 = vmatpush2.msra.mxu0 0.0
    %796 = vmatprep.mubr.f32.mxu0 0.0
    %797 = vmatmul.mubr.f32.gmra.mxu0 %v659
    %v798 = vpop.f32.mrf.mxu0
    %v799 = vadd.f32 0.0, %v798
    %v800 = vpop.f32.mrf.mxu0
    %v801 = vadd.f32 0.0, %v800
    %802 = vdwg.mxu0
    %v807 = vrot.slane %v728, 4
    %v808 = vrot.slane %v730, 4
    %v809 = vrot.slane %v799, 4
    %v810 = vrot.slane %v801, 4
    %v815 = vadd.f32 %v153, %v807
    %v816 = vadd.f32 %v155, %v808
    %v817 = vadd.f32 %v236, %v809
    %v818 = vadd.f32 %v238, %v810
    %v819 = vxor.u32 %v815, 2147483648
    %v820 = vmul.f32 %v819, 1.442695
    %v821 = vpow.pop %v820
    %v822 = vadd.f32 %v821, 1.0
    %v823 = vrcp.pop %v822
    %v824 = vmul.f32 1.0, %v823
    %v825 = vxor.u32 %v816, 2147483648
    %v826 = vmul.f32 %v825, 1.442695
    %v827 = vpow.pop %v826
    %v828 = vadd.f32 %v827, 1.0
    %v829 = vrcp.pop %v828
    %v830 = vmul.f32 1.0, %v829
    %v831 = vtanh.pop %v817
    %v832 = vxor.u32 %v818, 2147483648
    %v833 = vmul.f32 %v832, 1.442695
    %v834 = vpow.pop %v833
    %v835 = vadd.f32 %v834, 1.0
    %v836 = vrcp.pop %v835
    %v837 = vmul.f32 1.0, %v836
    %v839 = vrot.slane %v654, 6
    %v841 = vmul.f32 %v830, %v839
    %v842 = vmul.f32 %v824, %v831
    %v843 = vadd.f32 %v841, %v842
    %v844 = vtanh.pop %v843
    %v845 = vmul.f32 %v837, %v844
    %vm846 = vcmask 406532
    %847 = vst.msk [vmem:[#allocation2 - $0x4] sm:$0x30] %vm846, %v845
    %v849 = vrot.slane %v845, 4
    %v850 = vsel %vm282, %v849, 0
    %852 = vmatprep.subr.mxu0 0.0
    %853 = vmatpush1.msra.mxu0 0.0
    %854 = vmatprep.subr.mxu0 0.0
    %855 = vmatpush1.msra.mxu0 0.0
    %856 = vmatprep.subr.mxu0 0.0
    %857 = vmatpush1.msra.mxu0 0.0
    %858 = vmatprep.subr.mxu0 0.0
    %859 = vmatpush1.msra.mxu0 0.0
    %860 = vmatprep.subr.mxu0 0.0
    %861 = vmatpush1.msra.mxu0 0.0
    %862 = vmatprep.subr.mxu0 0.0
    %863 = vmatpush1.msra.mxu0 0.0
    %864 = vmatprep.subr.mxu0 0.0
    %865 = vmatpush1.msra.mxu0 0.0
    %866 = vmatprep.subr.mxu0 0.0
    %867 = vmatpush1.msra.mxu0 0.0
    %868 = vmatprep.subr.mxu0 0.0
    %869 = vmatpush1.msra.mxu0 0.0
    %870 = vmatprep.subr.mxu0 %v291
    %871 = vmatpush1.msra.mxu0 %v288
    %872 = vmatprep.subr.mxu0 %v273
    %873 = vmatpush1.msra.mxu0 %v272
    %874 = vmatprep.subr.mxu0 %v269
    %875 = vmatpush1.msra.mxu0 %v268
    %876 = vmatprep.subr.mxu0 %v265
    %877 = vmatpush1.msra.mxu0 %v264
    %878 = vmatprep.subr.mxu0 %v261
    %879 = vmatpush1.msra.mxu0 %v260
    %880 = vmatprep.subr.mxu0 %v257
    %881 = vmatpush1.msra.mxu0 %v256
    %882 = vmatprep.subr.mxu0 %v253
    %883 = vmatpush1.msra.mxu0 %v252
    %884 = vmatprep.subr.mxu0 0.0
    %885 = vmatpush2.msra.mxu0 0.0
    %886 = vmatprep.subr.mxu0 0.0
    %887 = vmatpush2.msra.mxu0 0.0
    %888 = vmatprep.subr.mxu0 0.0
    %889 = vmatpush2.msra.mxu0 0.0
    %890 = vmatprep.subr.mxu0 0.0
    %891 = vmatpush2.msra.mxu0 0.0
    %892 = vmatprep.subr.mxu0 0.0
    %893 = vmatpush2.msra.mxu0 0.0
    %894 = vmatprep.subr.mxu0 0.0
    %895 = vmatpush2.msra.mxu0 0.0
    %896 = vmatprep.subr.mxu0 0.0
    %897 = vmatpush2.msra.mxu0 0.0
    %898 = vmatprep.subr.mxu0 0.0
    %899 = vmatpush2.msra.mxu0 0.0
    %900 = vmatprep.subr.mxu0 0.0
    %901 = vmatpush2.msra.mxu0 0.0
    %902 = vmatprep.subr.mxu0 0.0
    %903 = vmatpush2.msra.mxu0 0.0
    %904 = vmatprep.subr.mxu0 0.0
    %905 = vmatpush2.msra.mxu0 0.0
    %906 = vmatprep.subr.mxu0 0.0
    %907 = vmatpush2.msra.mxu0 0.0
    %908 = vmatprep.subr.mxu0 0.0
    %909 = vmatpush2.msra.mxu0 0.0
    %910 = vmatprep.subr.mxu0 0.0
    %911 = vmatpush2.msra.mxu0 0.0
    %912 = vmatprep.subr.mxu0 0.0
    %913 = vmatpush2.msra.mxu0 0.0
    %914 = vmatprep.subr.mxu0 0.0
    %915 = vmatpush2.msra.mxu0 0.0
    %916 = vmatprep.mubr.f32.mxu0 0.0
    %917 = vmatmul.mubr.f32.gmra.mxu0 %v850
    %v918 = vpop.f32.mrf.mxu0
    %v919 = vadd.f32 0.0, %v918
    %v920 = vpop.f32.mrf.mxu0
    %v921 = vadd.f32 0.0, %v920
    %922 = vdwg.mxu0
    %923 = vmatprep.subr.mxu0 0.0
    %924 = vmatpush1.msra.mxu0 0.0
    %925 = vmatprep.subr.mxu0 0.0
    %926 = vmatpush1.msra.mxu0 0.0
    %927 = vmatprep.subr.mxu0 0.0
    %928 = vmatpush1.msra.mxu0 0.0
    %929 = vmatprep.subr.mxu0 0.0
    %930 = vmatpush1.msra.mxu0 0.0
    %931 = vmatprep.subr.mxu0 0.0
    %932 = vmatpush1.msra.mxu0 0.0
    %933 = vmatprep.subr.mxu0 0.0
    %934 = vmatpush1.msra.mxu0 0.0
    %935 = vmatprep.subr.mxu0 0.0
    %936 = vmatpush1.msra.mxu0 0.0
    %937 = vmatprep.subr.mxu0 0.0
    %938 = vmatpush1.msra.mxu0 0.0
    %939 = vmatprep.subr.mxu0 0.0
    %940 = vmatpush1.msra.mxu0 0.0
    %941 = vmatprep.subr.mxu0 %v297
    %942 = vmatpush1.msra.mxu0 %v294
    %943 = vmatprep.subr.mxu0 %v275
    %944 = vmatpush1.msra.mxu0 %v274
    %945 = vmatprep.subr.mxu0 %v271
    %946 = vmatpush1.msra.mxu0 %v270
    %947 = vmatprep.subr.mxu0 %v267
    %948 = vmatpush1.msra.mxu0 %v266
    %949 = vmatprep.subr.mxu0 %v263
    %950 = vmatpush1.msra.mxu0 %v262
    %951 = vmatprep.subr.mxu0 %v259
    %952 = vmatpush1.msra.mxu0 %v258
    %953 = vmatprep.subr.mxu0 %v255
    %954 = vmatpush1.msra.mxu0 %v254
    %955 = vmatprep.subr.mxu0 0.0
    %956 = vmatpush2.msra.mxu0 0.0
    %957 = vmatprep.subr.mxu0 0.0
    %958 = vmatpush2.msra.mxu0 0.0
    %959 = vmatprep.subr.mxu0 0.0
    %960 = vmatpush2.msra.mxu0 0.0
    %961 = vmatprep.subr.mxu0 0.0
    %962 = vmatpush2.msra.mxu0 0.0
    %963 = vmatprep.subr.mxu0 0.0
    %964 = vmatpush2.msra.mxu0 0.0
    %965 = vmatprep.subr.mxu0 0.0
    %966 = vmatpush2.msra.mxu0 0.0
    %967 = vmatprep.subr.mxu0 0.0
    %968 = vmatpush2.msra.mxu0 0.0
    %969 = vmatprep.subr.mxu0 0.0
    %970 = vmatpush2.msra.mxu0 0.0
    %971 = vmatprep.subr.mxu0 0.0
    %972 = vmatpush2.msra.mxu0 0.0
    %973 = vmatprep.subr.mxu0 0.0
    %974 = vmatpush2.msra.mxu0 0.0
    %975 = vmatprep.subr.mxu0 0.0
    %976 = vmatpush2.msra.mxu0 0.0
    %977 = vmatprep.subr.mxu0 0.0
    %978 = vmatpush2.msra.mxu0 0.0
    %979 = vmatprep.subr.mxu0 0.0
    %980 = vmatpush2.msra.mxu0 0.0
    %981 = vmatprep.subr.mxu0 0.0
    %982 = vmatpush2.msra.mxu0 0.0
    %983 = vmatprep.subr.mxu0 0.0
    %984 = vmatpush2.msra.mxu0 0.0
    %985 = vmatprep.subr.mxu0 0.0
    %986 = vmatpush2.msra.mxu0 0.0
    %987 = vmatprep.mubr.f32.mxu0 0.0
    %988 = vmatmul.mubr.f32.gmra.mxu0 %v850
    %v989 = vpop.f32.mrf.mxu0
    %v990 = vadd.f32 0.0, %v989
    %v991 = vpop.f32.mrf.mxu0
    %v992 = vadd.f32 0.0, %v991
    %993 = vdwg.mxu0
    %v998 = vrot.slane %v919, 2
    %v999 = vrot.slane %v921, 2
    %v1000 = vrot.slane %v990, 2
    %v1001 = vrot.slane %v992, 2
    %v1006 = vadd.f32 %v153, %v998
    %v1007 = vadd.f32 %v155, %v999
    %v1008 = vadd.f32 %v236, %v1000
    %v1009 = vadd.f32 %v238, %v1001
    %v1010 = vxor.u32 %v1006, 2147483648
    %v1011 = vmul.f32 %v1010, 1.442695
    %v1012 = vpow.pop %v1011
    %v1013 = vadd.f32 %v1012, 1.0
    %v1014 = vrcp.pop %v1013
    %v1015 = vmul.f32 1.0, %v1014
    %v1016 = vxor.u32 %v1007, 2147483648
    %v1017 = vmul.f32 %v1016, 1.442695
    %v1018 = vpow.pop %v1017
    %v1019 = vadd.f32 %v1018, 1.0
    %v1020 = vrcp.pop %v1019
    %v1021 = vmul.f32 1.0, %v1020
    %v1022 = vtanh.pop %v1008
    %v1023 = vxor.u32 %v1009, 2147483648
    %v1024 = vmul.f32 %v1023, 1.442695
    %v1025 = vpow.pop %v1024
    %v1026 = vadd.f32 %v1025, 1.0
    %v1027 = vrcp.pop %v1026
    %v1028 = vmul.f32 1.0, %v1027
    %v1030 = vrot.slane %v843, 6
    %v1032 = vmul.f32 %v1021, %v1030
    %v1033 = vmul.f32 %v1015, %v1022
    %v1034 = vadd.f32 %v1032, %v1033
    %v1035 = vtanh.pop %v1034
    %v1036 = vmul.f32 %v1028, %v1035
    %vm1037 = vcmask 408582
    %1038 = vst.msk [vmem:[#allocation2 - $0x4] sm:$0xc0] %vm1037, %v1036
    %v1040 = vrot.slane %v1036, 6
    %v1041 = vsel %vm282, %v1040, 0
    %1043 = vmatprep.subr.mxu0 0.0
    %1044 = vmatpush1.msra.mxu0 0.0
    %1045 = vmatprep.subr.mxu0 0.0
    %1046 = vmatpush1.msra.mxu0 0.0
    %1047 = vmatprep.subr.mxu0 0.0
    %1048 = vmatpush1.msra.mxu0 0.0
    %1049 = vmatprep.subr.mxu0 0.0
    %1050 = vmatpush1.msra.mxu0 0.0
    %1051 = vmatprep.subr.mxu0 0.0
    %1052 = vmatpush1.msra.mxu0 0.0
    %1053 = vmatprep.subr.mxu0 0.0
    %1054 = vmatpush1.msra.mxu0 0.0
    %1055 = vmatprep.subr.mxu0 0.0
    %1056 = vmatpush1.msra.mxu0 0.0
    %1057 = vmatprep.subr.mxu0 0.0
    %1058 = vmatpush1.msra.mxu0 0.0
    %1059 = vmatprep.subr.mxu0 0.0
    %1060 = vmatpush1.msra.mxu0 0.0
    %1061 = vmatprep.subr.mxu0 %v291
    %1062 = vmatpush1.msra.mxu0 %v288
    %1063 = vmatprep.subr.mxu0 %v273
    %1064 = vmatpush1.msra.mxu0 %v272
    %1065 = vmatprep.subr.mxu0 %v269
    %1066 = vmatpush1.msra.mxu0 %v268
    %1067 = vmatprep.subr.mxu0 %v265
    %1068 = vmatpush1.msra.mxu0 %v264
    %1069 = vmatprep.subr.mxu0 %v261
    %1070 = vmatpush1.msra.mxu0 %v260
    %1071 = vmatprep.subr.mxu0 %v257
    %1072 = vmatpush1.msra.mxu0 %v256
    %1073 = vmatprep.subr.mxu0 %v253
    %1074 = vmatpush1.msra.mxu0 %v252
    %1075 = vmatprep.subr.mxu0 0.0
    %1076 = vmatpush2.msra.mxu0 0.0
    %1077 = vmatprep.subr.mxu0 0.0
    %1078 = vmatpush2.msra.mxu0 0.0
    %1079 = vmatprep.subr.mxu0 0.0
    %1080 = vmatpush2.msra.mxu0 0.0
    %1081 = vmatprep.subr.mxu0 0.0
    %1082 = vmatpush2.msra.mxu0 0.0
    %1083 = vmatprep.subr.mxu0 0.0
    %1084 = vmatpush2.msra.mxu0 0.0
    %1085 = vmatprep.subr.mxu0 0.0
    %1086 = vmatpush2.msra.mxu0 0.0
    %1087 = vmatprep.subr.mxu0 0.0
    %1088 = vmatpush2.msra.mxu0 0.0
    %1089 = vmatprep.subr.mxu0 0.0
    %1090 = vmatpush2.msra.mxu0 0.0
    %1091 = vmatprep.subr.mxu0 0.0
    %1092 = vmatpush2.msra.mxu0 0.0
    %1093 = vmatprep.subr.mxu0 0.0
    %1094 = vmatpush2.msra.mxu0 0.0
    %1095 = vmatprep.subr.mxu0 0.0
    %1096 = vmatpush2.msra.mxu0 0.0
    %1097 = vmatprep.subr.mxu0 0.0
    %1098 = vmatpush2.msra.mxu0 0.0
    %1099 = vmatprep.subr.mxu0 0.0
    %1100 = vmatpush2.msra.mxu0 0.0
    %1101 = vmatprep.subr.mxu0 0.0
    %1102 = vmatpush2.msra.mxu0 0.0
    %1103 = vmatprep.subr.mxu0 0.0
    %1104 = vmatpush2.msra.mxu0 0.0
    %1105 = vmatprep.subr.mxu0 0.0
    %1106 = vmatpush2.msra.mxu0 0.0
    %1107 = vmatprep.mubr.f32.mxu0 0.0
    %1108 = vmatmul.mubr.f32.gmra.mxu0 %v1041
    %v1109 = vpop.f32.mrf.mxu0
    %v1110 = vadd.f32 0.0, %v1109
    %v1111 = vpop.f32.mrf.mxu0
    %v1112 = vadd.f32 0.0, %v1111
    %1113 = vdwg.mxu0
    %1114 = vmatprep.subr.mxu0 0.0
    %1115 = vmatpush1.msra.mxu0 0.0
    %1116 = vmatprep.subr.mxu0 0.0
    %1117 = vmatpush1.msra.mxu0 0.0
    %1118 = vmatprep.subr.mxu0 0.0
    %1119 = vmatpush1.msra.mxu0 0.0
    %1120 = vmatprep.subr.mxu0 0.0
    %1121 = vmatpush1.msra.mxu0 0.0
    %1122 = vmatprep.subr.mxu0 0.0
    %1123 = vmatpush1.msra.mxu0 0.0
    %1124 = vmatprep.subr.mxu0 0.0
    %1125 = vmatpush1.msra.mxu0 0.0
    %1126 = vmatprep.subr.mxu0 0.0
    %1127 = vmatpush1.msra.mxu0 0.0
    %1128 = vmatprep.subr.mxu0 0.0
    %1129 = vmatpush1.msra.mxu0 0.0
    %1130 = vmatprep.subr.mxu0 0.0
    %1131 = vmatpush1.msra.mxu0 0.0
    %1132 = vmatprep.subr.mxu0 %v297
    %1133 = vmatpush1.msra.mxu0 %v294
    %1134 = vmatprep.subr.mxu0 %v275
    %1135 = vmatpush1.msra.mxu0 %v274
    %1136 = vmatprep.subr.mxu0 %v271
    %1137 = vmatpush1.msra.mxu0 %v270
    %1138 = vmatprep.subr.mxu0 %v267
    %1139 = vmatpush1.msra.mxu0 %v266
    %1140 = vmatprep.subr.mxu0 %v263
    %1141 = vmatpush1.msra.mxu0 %v262
    %1142 = vmatprep.subr.mxu0 %v259
    %1143 = vmatpush1.msra.mxu0 %v258
    %1144 = vmatprep.subr.mxu0 %v255
    %1145 = vmatpush1.msra.mxu0 %v254
    %1146 = vmatprep.subr.mxu0 0.0
    %1147 = vmatpush2.msra.mxu0 0.0
    %1148 = vmatprep.subr.mxu0 0.0
    %1149 = vmatpush2.msra.mxu0 0.0
    %1150 = vmatprep.subr.mxu0 0.0
    %1151 = vmatpush2.msra.mxu0 0.0
    %1152 = vmatprep.subr.mxu0 0.0
    %1153 = vmatpush2.msra.mxu0 0.0
    %1154 = vmatprep.subr.mxu0 0.0
    %1155 = vmatpush2.msra.mxu0 0.0
    %1156 = vmatprep.subr.mxu0 0.0
    %1157 = vmatpush2.msra.mxu0 0.0
    %1158 = vmatprep.subr.mxu0 0.0
    %1159 = vmatpush2.msra.mxu0 0.0
    %1160 = vmatprep.subr.mxu0 0.0
    %1161 = vmatpush2.msra.mxu0 0.0
    %1162 = vmatprep.subr.mxu0 0.0
    %1163 = vmatpush2.msra.mxu0 0.0
    %1164 = vmatprep.subr.mxu0 0.0
    %1165 = vmatpush2.msra.mxu0 0.0
    %1166 = vmatprep.subr.mxu0 0.0
    %1167 = vmatpush2.msra.mxu0 0.0
    %1168 = vmatprep.subr.mxu0 0.0
    %1169 = vmatpush2.msra.mxu0 0.0
    %1170 = vmatprep.subr.mxu0 0.0
    %1171 = vmatpush2.msra.mxu0 0.0
    %1172 = vmatprep.subr.mxu0 0.0
    %1173 = vmatpush2.msra.mxu0 0.0
    %1174 = vmatprep.subr.mxu0 0.0
    %1175 = vmatpush2.msra.mxu0 0.0
    %1176 = vmatprep.subr.mxu0 0.0
    %1177 = vmatpush2.msra.mxu0 0.0
    %1178 = vmatprep.mubr.f32.mxu0 0.0
    %1179 = vmatmul.mubr.f32.gmra.mxu0 %v1041
    %v1180 = vpop.f32.mrf.mxu0
    %v1181 = vadd.f32 0.0, %v1180
    %v1182 = vpop.f32.mrf.mxu0
    %v1183 = vadd.f32 0.0, %v1182
    %1184 = vdwg.mxu0
    %v1185 = vadd.f32 %v159, %v1110
    %v1186 = vadd.f32 %v161, %v1112
    %v1187 = vadd.f32 %v242, %v1181
    %v1188 = vadd.f32 %v244, %v1183
    %v1189 = vxor.u32 %v1185, 2147483648
    %v1190 = vmul.f32 %v1189, 1.442695
    %v1191 = vpow.pop %v1190
    %v1192 = vadd.f32 %v1191, 1.0
    %v1193 = vrcp.pop %v1192
    %v1194 = vmul.f32 1.0, %v1193
    %v1195 = vxor.u32 %v1186, 2147483648
    %v1196 = vmul.f32 %v1195, 1.442695
    %v1197 = vpow.pop %v1196
    %v1198 = vadd.f32 %v1197, 1.0
    %v1199 = vrcp.pop %v1198
    %v1200 = vmul.f32 1.0, %v1199
    %v1201 = vtanh.pop %v1187
    %v1202 = vxor.u32 %v1188, 2147483648
    %v1203 = vmul.f32 %v1202, 1.442695
    %v1204 = vpow.pop %v1203
    %v1205 = vadd.f32 %v1204, 1.0
    %v1206 = vrcp.pop %v1205
    %v1207 = vmul.f32 1.0, %v1206
    %v1209 = vrot.slane %v1034, 6
    %v1211 = vmul.f32 %v1200, %v1209
    %v1212 = vmul.f32 %v1194, %v1201
    %v1213 = vadd.f32 %v1211, %v1212
    %v1214 = vtanh.pop %v1213
    %v1215 = vmul.f32 %v1207, %v1214
    %vm1216 = vcmask 402432
    %1217 = vst.msk [vmem:[#allocation2 + $0x4] sm:$0x3] %vm1216, %v1215
    %v1219 = vsel %vm282, %v1215, 0
    %1221 = vmatprep.subr.mxu0 0.0
    %1222 = vmatpush1.msra.mxu0 0.0
    %1223 = vmatprep.subr.mxu0 0.0
    %1224 = vmatpush1.msra.mxu0 0.0
    %1225 = vmatprep.subr.mxu0 0.0
    %1226 = vmatpush1.msra.mxu0 0.0
    %1227 = vmatprep.subr.mxu0 0.0
    %1228 = vmatpush1.msra.mxu0 0.0
    %1229 = vmatprep.subr.mxu0 0.0
    %1230 = vmatpush1.msra.mxu0 0.0
    %1231 = vmatprep.subr.mxu0 0.0
    %1232 = vmatpush1.msra.mxu0 0.0
    %1233 = vmatprep.subr.mxu0 0.0
    %1234 = vmatpush1.msra.mxu0 0.0
    %1235 = vmatprep.subr.mxu0 0.0
    %1236 = vmatpush1.msra.mxu0 0.0
    %1237 = vmatprep.subr.mxu0 0.0
    %1238 = vmatpush1.msra.mxu0 0.0
    %1239 = vmatprep.subr.mxu0 %v291
    %1240 = vmatpush1.msra.mxu0 %v288
    %1241 = vmatprep.subr.mxu0 %v273
    %1242 = vmatpush1.msra.mxu0 %v272
    %1243 = vmatprep.subr.mxu0 %v269
    %1244 = vmatpush1.msra.mxu0 %v268
    %1245 = vmatprep.subr.mxu0 %v265
    %1246 = vmatpush1.msra.mxu0 %v264
    %1247 = vmatprep.subr.mxu0 %v261
    %1248 = vmatpush1.msra.mxu0 %v260
    %1249 = vmatprep.subr.mxu0 %v257
    %1250 = vmatpush1.msra.mxu0 %v256
    %1251 = vmatprep.subr.mxu0 %v253
    %1252 = vmatpush1.msra.mxu0 %v252
    %1253 = vmatprep.subr.mxu0 0.0
    %1254 = vmatpush2.msra.mxu0 0.0
    %1255 = vmatprep.subr.mxu0 0.0
    %1256 = vmatpush2.msra.mxu0 0.0
    %1257 = vmatprep.subr.mxu0 0.0
    %1258 = vmatpush2.msra.mxu0 0.0
    %1259 = vmatprep.subr.mxu0 0.0
    %1260 = vmatpush2.msra.mxu0 0.0
    %1261 = vmatprep.subr.mxu0 0.0
    %1262 = vmatpush2.msra.mxu0 0.0
    %1263 = vmatprep.subr.mxu0 0.0
    %1264 = vmatpush2.msra.mxu0 0.0
    %1265 = vmatprep.subr.mxu0 0.0
    %1266 = vmatpush2.msra.mxu0 0.0
    %1267 = vmatprep.subr.mxu0 0.0
    %1268 = vmatpush2.msra.mxu0 0.0
    %1269 = vmatprep.subr.mxu0 0.0
    %1270 = vmatpush2.msra.mxu0 0.0
    %1271 = vmatprep.subr.mxu0 0.0
    %1272 = vmatpush2.msra.mxu0 0.0
    %1273 = vmatprep.subr.mxu0 0.0
    %1274 = vmatpush2.msra.mxu0 0.0
    %1275 = vmatprep.subr.mxu0 0.0
    %1276 = vmatpush2.msra.mxu0 0.0
    %1277 = vmatprep.subr.mxu0 0.0
    %1278 = vmatpush2.msra.mxu0 0.0
    %1279 = vmatprep.subr.mxu0 0.0
    %1280 = vmatpush2.msra.mxu0 0.0
    %1281 = vmatprep.subr.mxu0 0.0
    %1282 = vmatpush2.msra.mxu0 0.0
    %1283 = vmatprep.subr.mxu0 0.0
    %1284 = vmatpush2.msra.mxu0 0.0
    %1285 = vmatprep.mubr.f32.mxu0 0.0
    %1286 = vmatmul.mubr.f32.gmra.mxu0 %v1219
    %v1287 = vpop.f32.mrf.mxu0
    %v1288 = vadd.f32 0.0, %v1287
    %v1289 = vpop.f32.mrf.mxu0
    %v1290 = vadd.f32 0.0, %v1289
    %1291 = vdwg.mxu0
    %1292 = vmatprep.subr.mxu0 0.0
    %1293 = vmatpush1.msra.mxu0 0.0
    %1294 = vmatprep.subr.mxu0 0.0
    %1295 = vmatpush1.msra.mxu0 0.0
    %1296 = vmatprep.subr.mxu0 0.0
    %1297 = vmatpush1.msra.mxu0 0.0
    %1298 = vmatprep.subr.mxu0 0.0
    %1299 = vmatpush1.msra.mxu0 0.0
    %1300 = vmatprep.subr.mxu0 0.0
    %1301 = vmatpush1.msra.mxu0 0.0
    %1302 = vmatprep.subr.mxu0 0.0
    %1303 = vmatpush1.msra.mxu0 0.0
    %1304 = vmatprep.subr.mxu0 0.0
    %1305 = vmatpush1.msra.mxu0 0.0
    %1306 = vmatprep.subr.mxu0 0.0
    %1307 = vmatpush1.msra.mxu0 0.0
    %1308 = vmatprep.subr.mxu0 0.0
    %1309 = vmatpush1.msra.mxu0 0.0
    %1310 = vmatprep.subr.mxu0 %v297
    %1311 = vmatpush1.msra.mxu0 %v294
    %1312 = vmatprep.subr.mxu0 %v275
    %1313 = vmatpush1.msra.mxu0 %v274
    %1314 = vmatprep.subr.mxu0 %v271
    %1315 = vmatpush1.msra.mxu0 %v270
    %1316 = vmatprep.subr.mxu0 %v267
    %1317 = vmatpush1.msra.mxu0 %v266
    %1318 = vmatprep.subr.mxu0 %v263
    %1319 = vmatpush1.msra.mxu0 %v262
    %1320 = vmatprep.subr.mxu0 %v259
    %1321 = vmatpush1.msra.mxu0 %v258
    %1322 = vmatprep.subr.mxu0 %v255
    %1323 = vmatpush1.msra.mxu0 %v254
    %1324 = vmatprep.subr.mxu0 0.0
    %1325 = vmatpush2.msra.mxu0 0.0
    %1326 = vmatprep.subr.mxu0 0.0
    %1327 = vmatpush2.msra.mxu0 0.0
    %1328 = vmatprep.subr.mxu0 0.0
    %1329 = vmatpush2.msra.mxu0 0.0
    %1330 = vmatprep.subr.mxu0 0.0
    %1331 = vmatpush2.msra.mxu0 0.0
    %1332 = vmatprep.subr.mxu0 0.0
    %1333 = vmatpush2.msra.mxu0 0.0
    %1334 = vmatprep.subr.mxu0 0.0
    %1335 = vmatpush2.msra.mxu0 0.0
    %1336 = vmatprep.subr.mxu0 0.0
    %1337 = vmatpush2.msra.mxu0 0.0
    %1338 = vmatprep.subr.mxu0 0.0
    %1339 = vmatpush2.msra.mxu0 0.0
    %1340 = vmatprep.subr.mxu0 0.0
    %1341 = vmatpush2.msra.mxu0 0.0
    %1342 = vmatprep.subr.mxu0 0.0
    %1343 = vmatpush2.msra.mxu0 0.0
    %1344 = vmatprep.subr.mxu0 0.0
    %1345 = vmatpush2.msra.mxu0 0.0
    %1346 = vmatprep.subr.mxu0 0.0
    %1347 = vmatpush2.msra.mxu0 0.0
    %1348 = vmatprep.subr.mxu0 0.0
    %1349 = vmatpush2.msra.mxu0 0.0
    %1350 = vmatprep.subr.mxu0 0.0
    %1351 = vmatpush2.msra.mxu0 0.0
    %1352 = vmatprep.subr.mxu0 0.0
    %1353 = vmatpush2.msra.mxu0 0.0
    %1354 = vmatprep.subr.mxu0 0.0
    %1355 = vmatpush2.msra.mxu0 0.0
    %1356 = vmatprep.mubr.f32.mxu0 0.0
    %1357 = vmatmul.mubr.f32.gmra.mxu0 %v1219
    %v1358 = vpop.f32.mrf.mxu0
    %v1359 = vadd.f32 0.0, %v1358
    %v1360 = vpop.f32.mrf.mxu0
    %v1361 = vadd.f32 0.0, %v1360
    %1362 = vdwg.mxu0
    %v1367 = vrot.slane %v1288, 6
    %v1368 = vrot.slane %v1290, 6
    %v1369 = vrot.slane %v1359, 6
    %v1370 = vrot.slane %v1361, 6
    %v1375 = vadd.f32 %v159, %v1367
    %v1376 = vadd.f32 %v161, %v1368
    %v1377 = vadd.f32 %v242, %v1369
    %v1378 = vadd.f32 %v244, %v1370
    %v1379 = vxor.u32 %v1375, 2147483648
    %v1380 = vmul.f32 %v1379, 1.442695
    %v1381 = vpow.pop %v1380
    %v1382 = vadd.f32 %v1381, 1.0
    %v1383 = vrcp.pop %v1382
    %v1384 = vmul.f32 1.0, %v1383
    %v1385 = vxor.u32 %v1376, 2147483648
    %v1386 = vmul.f32 %v1385, 1.442695
    %v1387 = vpow.pop %v1386
    %v1388 = vadd.f32 %v1387, 1.0
    %v1389 = vrcp.pop %v1388
    %v1390 = vmul.f32 1.0, %v1389
    %v1391 = vtanh.pop %v1377
    %v1392 = vxor.u32 %v1378, 2147483648
    %v1393 = vmul.f32 %v1392, 1.442695
    %v1394 = vpow.pop %v1393
    %v1395 = vadd.f32 %v1394, 1.0
    %v1396 = vrcp.pop %v1395
    %v1397 = vmul.f32 1.0, %v1396
    %v1399 = vrot.slane %v1213, 6
    %v1401 = vmul.f32 %v1390, %v1399
    %v1402 = vmul.f32 %v1384, %v1391
    %v1403 = vadd.f32 %v1401, %v1402
    %v1404 = vtanh.pop %v1403
    %v1405 = vmul.f32 %v1397, %v1404
    %vm1406 = vcmask 404482
    %1407 = vst.msk [vmem:[#allocation2 + $0x4] sm:$0xc] %vm1406, %v1405
    %v1409 = vrot.slane %v1405, 2
    %v1410 = vsel %vm282, %v1409, 0
    %1412 = vmatprep.subr.mxu0 0.0
    %1413 = vmatpush1.msra.mxu0 0.0
    %1414 = vmatprep.subr.mxu0 0.0
    %1415 = vmatpush1.msra.mxu0 0.0
    %1416 = vmatprep.subr.mxu0 0.0
    %1417 = vmatpush1.msra.mxu0 0.0
    %1418 = vmatprep.subr.mxu0 0.0
    %1419 = vmatpush1.msra.mxu0 0.0
    %1420 = vmatprep.subr.mxu0 0.0
    %1421 = vmatpush1.msra.mxu0 0.0
    %1422 = vmatprep.subr.mxu0 0.0
    %1423 = vmatpush1.msra.mxu0 0.0
    %1424 = vmatprep.subr.mxu0 0.0
    %1425 = vmatpush1.msra.mxu0 0.0
    %1426 = vmatprep.subr.mxu0 0.0
    %1427 = vmatpush1.msra.mxu0 0.0
    %1428 = vmatprep.subr.mxu0 0.0
    %1429 = vmatpush1.msra.mxu0 0.0
    %1430 = vmatprep.subr.mxu0 %v291
    %1431 = vmatpush1.msra.mxu0 %v288
    %1432 = vmatprep.subr.mxu0 %v273
    %1433 = vmatpush1.msra.mxu0 %v272
    %1434 = vmatprep.subr.mxu0 %v269
    %1435 = vmatpush1.msra.mxu0 %v268
    %1436 = vmatprep.subr.mxu0 %v265
    %1437 = vmatpush1.msra.mxu0 %v264
    %1438 = vmatprep.subr.mxu0 %v261
    %1439 = vmatpush1.msra.mxu0 %v260
    %1440 = vmatprep.subr.mxu0 %v257
    %1441 = vmatpush1.msra.mxu0 %v256
    %1442 = vmatprep.subr.mxu0 %v253
    %1443 = vmatpush1.msra.mxu0 %v252
    %1444 = vmatprep.subr.mxu0 0.0
    %1445 = vmatpush2.msra.mxu0 0.0
    %1446 = vmatprep.subr.mxu0 0.0
    %1447 = vmatpush2.msra.mxu0 0.0
    %1448 = vmatprep.subr.mxu0 0.0
    %1449 = vmatpush2.msra.mxu0 0.0
    %1450 = vmatprep.subr.mxu0 0.0
    %1451 = vmatpush2.msra.mxu0 0.0
    %1452 = vmatprep.subr.mxu0 0.0
    %1453 = vmatpush2.msra.mxu0 0.0
    %1454 = vmatprep.subr.mxu0 0.0
    %1455 = vmatpush2.msra.mxu0 0.0
    %1456 = vmatprep.subr.mxu0 0.0
    %1457 = vmatpush2.msra.mxu0 0.0
    %1458 = vmatprep.subr.mxu0 0.0
    %1459 = vmatpush2.msra.mxu0 0.0
    %1460 = vmatprep.subr.mxu0 0.0
    %1461 = vmatpush2.msra.mxu0 0.0
    %1462 = vmatprep.subr.mxu0 0.0
    %1463 = vmatpush2.msra.mxu0 0.0
    %1464 = vmatprep.subr.mxu0 0.0
    %1465 = vmatpush2.msra.mxu0 0.0
    %1466 = vmatprep.subr.mxu0 0.0
    %1467 = vmatpush2.msra.mxu0 0.0
    %1468 = vmatprep.subr.mxu0 0.0
    %1469 = vmatpush2.msra.mxu0 0.0
    %1470 = vmatprep.subr.mxu0 0.0
    %1471 = vmatpush2.msra.mxu0 0.0
    %1472 = vmatprep.subr.mxu0 0.0
    %1473 = vmatpush2.msra.mxu0 0.0
    %1474 = vmatprep.subr.mxu0 0.0
    %1475 = vmatpush2.msra.mxu0 0.0
    %1476 = vmatprep.mubr.f32.mxu0 0.0
    %1477 = vmatmul.mubr.f32.gmra.mxu0 %v1410
    %v1478 = vpop.f32.mrf.mxu0
    %v1479 = vadd.f32 0.0, %v1478
    %v1480 = vpop.f32.mrf.mxu0
    %v1481 = vadd.f32 0.0, %v1480
    %1482 = vdwg.mxu0
    %1483 = vmatprep.subr.mxu0 0.0
    %1484 = vmatpush1.msra.mxu0 0.0
    %1485 = vmatprep.subr.mxu0 0.0
    %1486 = vmatpush1.msra.mxu0 0.0
    %1487 = vmatprep.subr.mxu0 0.0
    %1488 = vmatpush1.msra.mxu0 0.0
    %1489 = vmatprep.subr.mxu0 0.0
    %1490 = vmatpush1.msra.mxu0 0.0
    %1491 = vmatprep.subr.mxu0 0.0
    %1492 = vmatpush1.msra.mxu0 0.0
    %1493 = vmatprep.subr.mxu0 0.0
    %1494 = vmatpush1.msra.mxu0 0.0
    %1495 = vmatprep.subr.mxu0 0.0
    %1496 = vmatpush1.msra.mxu0 0.0
    %1497 = vmatprep.subr.mxu0 0.0
    %1498 = vmatpush1.msra.mxu0 0.0
    %1499 = vmatprep.subr.mxu0 0.0
    %1500 = vmatpush1.msra.mxu0 0.0
    %1501 = vmatprep.subr.mxu0 %v297
    %1502 = vmatpush1.msra.mxu0 %v294
    %1503 = vmatprep.subr.mxu0 %v275
    %1504 = vmatpush1.msra.mxu0 %v274
    %1505 = vmatprep.subr.mxu0 %v271
    %1506 = vmatpush1.msra.mxu0 %v270
    %1507 = vmatprep.subr.mxu0 %v267
    %1508 = vmatpush1.msra.mxu0 %v266
    %1509 = vmatprep.subr.mxu0 %v263
    %1510 = vmatpush1.msra.mxu0 %v262
    %1511 = vmatprep.subr.mxu0 %v259
    %1512 = vmatpush1.msra.mxu0 %v258
    %1513 = vmatprep.subr.mxu0 %v255
    %1514 = vmatpush1.msra.mxu0 %v254
    %1515 = vmatprep.subr.mxu0 0.0
    %1516 = vmatpush2.msra.mxu0 0.0
    %1517 = vmatprep.subr.mxu0 0.0
    %1518 = vmatpush2.msra.mxu0 0.0
    %1519 = vmatprep.subr.mxu0 0.0
    %1520 = vmatpush2.msra.mxu0 0.0
    %1521 = vmatprep.subr.mxu0 0.0
    %1522 = vmatpush2.msra.mxu0 0.0
    %1523 = vmatprep.subr.mxu0 0.0
    %1524 = vmatpush2.msra.mxu0 0.0
    %1525 = vmatprep.subr.mxu0 0.0
    %1526 = vmatpush2.msra.mxu0 0.0
    %1527 = vmatprep.subr.mxu0 0.0
    %1528 = vmatpush2.msra.mxu0 0.0
    %1529 = vmatprep.subr.mxu0 0.0
    %1530 = vmatpush2.msra.mxu0 0.0
    %1531 = vmatprep.subr.mxu0 0.0
    %1532 = vmatpush2.msra.mxu0 0.0
    %1533 = vmatprep.subr.mxu0 0.0
    %1534 = vmatpush2.msra.mxu0 0.0
    %1535 = vmatprep.subr.mxu0 0.0
    %1536 = vmatpush2.msra.mxu0 0.0
    %1537 = vmatprep.subr.mxu0 0.0
    %1538 = vmatpush2.msra.mxu0 0.0
    %1539 = vmatprep.subr.mxu0 0.0
    %1540 = vmatpush2.msra.mxu0 0.0
    %1541 = vmatprep.subr.mxu0 0.0
    %1542 = vmatpush2.msra.mxu0 0.0
    %1543 = vmatprep.subr.mxu0 0.0
    %1544 = vmatpush2.msra.mxu0 0.0
    %1545 = vmatprep.subr.mxu0 0.0
    %1546 = vmatpush2.msra.mxu0 0.0
    %1547 = vmatprep.mubr.f32.mxu0 0.0
    %1548 = vmatmul.mubr.f32.gmra.mxu0 %v1410
    %v1549 = vpop.f32.mrf.mxu0
    %v1550 = vadd.f32 0.0, %v1549
    %v1551 = vpop.f32.mrf.mxu0
    %v1552 = vadd.f32 0.0, %v1551
    %1553 = vdwg.mxu0
    %v1558 = vrot.slane %v1479, 4
    %v1559 = vrot.slane %v1481, 4
    %v1560 = vrot.slane %v1550, 4
    %v1561 = vrot.slane %v1552, 4
    %v1566 = vadd.f32 %v159, %v1558
    %v1567 = vadd.f32 %v161, %v1559
    %v1568 = vadd.f32 %v242, %v1560
    %v1569 = vadd.f32 %v244, %v1561
    %v1570 = vxor.u32 %v1566, 2147483648
    %v1571 = vmul.f32 %v1570, 1.442695
    %v1572 = vpow.pop %v1571
    %v1573 = vadd.f32 %v1572, 1.0
    %v1574 = vrcp.pop %v1573
    %v1575 = vmul.f32 1.0, %v1574
    %v1576 = vxor.u32 %v1567, 2147483648
    %v1577 = vmul.f32 %v1576, 1.442695
    %v1578 = vpow.pop %v1577
    %v1579 = vadd.f32 %v1578, 1.0
    %v1580 = vrcp.pop %v1579
    %v1581 = vmul.f32 1.0, %v1580
    %v1582 = vtanh.pop %v1568
    %v1583 = vxor.u32 %v1569, 2147483648
    %v1584 = vmul.f32 %v1583, 1.442695
    %v1585 = vpow.pop %v1584
    %v1586 = vadd.f32 %v1585, 1.0
    %v1587 = vrcp.pop %v1586
    %v1588 = vmul.f32 1.0, %v1587
    %v1590 = vrot.slane %v1403, 6
    %v1592 = vmul.f32 %v1581, %v1590
    %v1593 = vmul.f32 %v1575, %v1582
    %v1594 = vadd.f32 %v1592, %v1593
    %v1595 = vtanh.pop %v1594
    %v1596 = vmul.f32 %v1588, %v1595
    %1597 = vst.msk [vmem:[#allocation2 + $0x4] sm:$0x30] %vm846, %v1596
    %v1599 = vrot.slane %v1596, 4
    %v1600 = vsel %vm282, %v1599, 0
    %1602 = vmatprep.subr.mxu0 0.0
    %1603 = vmatpush1.msra.mxu0 0.0
    %1604 = vmatprep.subr.mxu0 0.0
    %1605 = vmatpush1.msra.mxu0 0.0
    %1606 = vmatprep.subr.mxu0 0.0
    %1607 = vmatpush1.msra.mxu0 0.0
    %1608 = vmatprep.subr.mxu0 0.0
    %1609 = vmatpush1.msra.mxu0 0.0
    %1610 = vmatprep.subr.mxu0 0.0
    %1611 = vmatpush1.msra.mxu0 0.0
    %1612 = vmatprep.subr.mxu0 0.0
    %1613 = vmatpush1.msra.mxu0 0.0
    %1614 = vmatprep.subr.mxu0 0.0
    %1615 = vmatpush1.msra.mxu0 0.0
    %1616 = vmatprep.subr.mxu0 0.0
    %1617 = vmatpush1.msra.mxu0 0.0
    %1618 = vmatprep.subr.mxu0 0.0
    %1619 = vmatpush1.msra.mxu0 0.0
    %1620 = vmatprep.subr.mxu0 %v291
    %1621 = vmatpush1.msra.mxu0 %v288
    %1622 = vmatprep.subr.mxu0 %v273
    %1623 = vmatpush1.msra.mxu0 %v272
    %1624 = vmatprep.subr.mxu0 %v269
    %1625 = vmatpush1.msra.mxu0 %v268
    %1626 = vmatprep.subr.mxu0 %v265
    %1627 = vmatpush1.msra.mxu0 %v264
    %1628 = vmatprep.subr.mxu0 %v261
    %1629 = vmatpush1.msra.mxu0 %v260
    %1630 = vmatprep.subr.mxu0 %v257
    %1631 = vmatpush1.msra.mxu0 %v256
    %1632 = vmatprep.subr.mxu0 %v253
    %1633 = vmatpush1.msra.mxu0 %v252
    %1634 = vmatprep.subr.mxu0 0.0
    %1635 = vmatpush2.msra.mxu0 0.0
    %1636 = vmatprep.subr.mxu0 0.0
    %1637 = vmatpush2.msra.mxu0 0.0
    %1638 = vmatprep.subr.mxu0 0.0
    %1639 = vmatpush2.msra.mxu0 0.0
    %1640 = vmatprep.subr.mxu0 0.0
    %1641 = vmatpush2.msra.mxu0 0.0
    %1642 = vmatprep.subr.mxu0 0.0
    %1643 = vmatpush2.msra.mxu0 0.0
    %1644 = vmatprep.subr.mxu0 0.0
    %1645 = vmatpush2.msra.mxu0 0.0
    %1646 = vmatprep.subr.mxu0 0.0
    %1647 = vmatpush2.msra.mxu0 0.0
    %1648 = vmatprep.subr.mxu0 0.0
    %1649 = vmatpush2.msra.mxu0 0.0
    %1650 = vmatprep.subr.mxu0 0.0
    %1651 = vmatpush2.msra.mxu0 0.0
    %1652 = vmatprep.subr.mxu0 0.0
    %1653 = vmatpush2.msra.mxu0 0.0
    %1654 = vmatprep.subr.mxu0 0.0
    %1655 = vmatpush2.msra.mxu0 0.0
    %1656 = vmatprep.subr.mxu0 0.0
    %1657 = vmatpush2.msra.mxu0 0.0
    %1658 = vmatprep.subr.mxu0 0.0
    %1659 = vmatpush2.msra.mxu0 0.0
    %1660 = vmatprep.subr.mxu0 0.0
    %1661 = vmatpush2.msra.mxu0 0.0
    %1662 = vmatprep.subr.mxu0 0.0
    %1663 = vmatpush2.msra.mxu0 0.0
    %1664 = vmatprep.subr.mxu0 0.0
    %1665 = vmatpush2.msra.mxu0 0.0
    %1666 = vmatprep.mubr.f32.mxu0 0.0
    %1667 = vmatmul.mubr.f32.gmra.mxu0 %v1600
    %v1668 = vpop.f32.mrf.mxu0
    %v1669 = vadd.f32 0.0, %v1668
    %v1670 = vpop.f32.mrf.mxu0
    %v1671 = vadd.f32 0.0, %v1670
    %1672 = vdwg.mxu0
    %1673 = vmatprep.subr.mxu0 0.0
    %1674 = vmatpush1.msra.mxu0 0.0
    %1675 = vmatprep.subr.mxu0 0.0
    %1676 = vmatpush1.msra.mxu0 0.0
    %1677 = vmatprep.subr.mxu0 0.0
    %1678 = vmatpush1.msra.mxu0 0.0
    %1679 = vmatprep.subr.mxu0 0.0
    %1680 = vmatpush1.msra.mxu0 0.0
    %1681 = vmatprep.subr.mxu0 0.0
    %1682 = vmatpush1.msra.mxu0 0.0
    %1683 = vmatprep.subr.mxu0 0.0
    %1684 = vmatpush1.msra.mxu0 0.0
    %1685 = vmatprep.subr.mxu0 0.0
    %1686 = vmatpush1.msra.mxu0 0.0
    %1687 = vmatprep.subr.mxu0 0.0
    %1688 = vmatpush1.msra.mxu0 0.0
    %1689 = vmatprep.subr.mxu0 0.0
    %1690 = vmatpush1.msra.mxu0 0.0
    %1691 = vmatprep.subr.mxu0 %v297
    %1692 = vmatpush1.msra.mxu0 %v294
    %1693 = vmatprep.subr.mxu0 %v275
    %1694 = vmatpush1.msra.mxu0 %v274
    %1695 = vmatprep.subr.mxu0 %v271
    %1696 = vmatpush1.msra.mxu0 %v270
    %1697 = vmatprep.subr.mxu0 %v267
    %1698 = vmatpush1.msra.mxu0 %v266
    %1699 = vmatprep.subr.mxu0 %v263
    %1700 = vmatpush1.msra.mxu0 %v262
    %1701 = vmatprep.subr.mxu0 %v259
    %1702 = vmatpush1.msra.mxu0 %v258
    %1703 = vmatprep.subr.mxu0 %v255
    %1704 = vmatpush1.msra.mxu0 %v254
    %1705 = vmatprep.subr.mxu0 0.0
    %1706 = vmatpush2.msra.mxu0 0.0
    %1707 = vmatprep.subr.mxu0 0.0
    %1708 = vmatpush2.msra.mxu0 0.0
    %1709 = vmatprep.subr.mxu0 0.0
    %1710 = vmatpush2.msra.mxu0 0.0
    %1711 = vmatprep.subr.mxu0 0.0
    %1712 = vmatpush2.msra.mxu0 0.0
    %1713 = vmatprep.subr.mxu0 0.0
    %1714 = vmatpush2.msra.mxu0 0.0
    %1715 = vmatprep.subr.mxu0 0.0
    %1716 = vmatpush2.msra.mxu0 0.0
    %1717 = vmatprep.subr.mxu0 0.0
    %1718 = vmatpush2.msra.mxu0 0.0
    %1719 = vmatprep.subr.mxu0 0.0
    %1720 = vmatpush2.msra.mxu0 0.0
    %1721 = vmatprep.subr.mxu0 0.0
    %1722 = vmatpush2.msra.mxu0 0.0
    %1723 = vmatprep.subr.mxu0 0.0
    %1724 = vmatpush2.msra.mxu0 0.0
    %1725 = vmatprep.subr.mxu0 0.0
    %1726 = vmatpush2.msra.mxu0 0.0
    %1727 = vmatprep.subr.mxu0 0.0
    %1728 = vmatpush2.msra.mxu0 0.0
    %1729 = vmatprep.subr.mxu0 0.0
    %1730 = vmatpush2.msra.mxu0 0.0
    %1731 = vmatprep.subr.mxu0 0.0
    %1732 = vmatpush2.msra.mxu0 0.0
    %1733 = vmatprep.subr.mxu0 0.0
    %1734 = vmatpush2.msra.mxu0 0.0
    %1735 = vmatprep.subr.mxu0 0.0
    %1736 = vmatpush2.msra.mxu0 0.0
    %1737 = vmatprep.mubr.f32.mxu0 0.0
    %1738 = vmatmul.mubr.f32.gmra.mxu0 %v1600
    %v1739 = vpop.f32.mrf.mxu0
    %v1740 = vadd.f32 0.0, %v1739
    %v1741 = vpop.f32.mrf.mxu0
    %v1742 = vadd.f32 0.0, %v1741
    %1743 = vdwg.mxu0
    %v1748 = vrot.slane %v1669, 2
    %v1749 = vrot.slane %v1671, 2
    %v1750 = vrot.slane %v1740, 2
    %v1751 = vrot.slane %v1742, 2
    %v1756 = vadd.f32 %v159, %v1748
    %v1757 = vadd.f32 %v161, %v1749
    %v1758 = vadd.f32 %v242, %v1750
    %v1759 = vadd.f32 %v244, %v1751
    %v1760 = vxor.u32 %v1756, 2147483648
    %v1761 = vmul.f32 %v1760, 1.442695
    %v1762 = vpow.pop %v1761
    %v1763 = vadd.f32 %v1762, 1.0
    %v1764 = vrcp.pop %v1763
    %v1765 = vmul.f32 1.0, %v1764
    %v1766 = vxor.u32 %v1757, 2147483648
    %v1767 = vmul.f32 %v1766, 1.442695
    %v1768 = vpow.pop %v1767
    %v1769 = vadd.f32 %v1768, 1.0
    %v1770 = vrcp.pop %v1769
    %v1771 = vmul.f32 1.0, %v1770
    %v1772 = vtanh.pop %v1758
    %v1773 = vxor.u32 %v1759, 2147483648
    %v1774 = vmul.f32 %v1773, 1.442695
    %v1775 = vpow.pop %v1774
    %v1776 = vadd.f32 %v1775, 1.0
    %v1777 = vrcp.pop %v1776
    %v1778 = vmul.f32 1.0, %v1777
    %v1780 = vrot.slane %v1594, 6
    %v1782 = vmul.f32 %v1771, %v1780
    %v1783 = vmul.f32 %v1765, %v1772
    %v1784 = vadd.f32 %v1782, %v1783
    %v1785 = vtanh.pop %v1784
    %v1786 = vmul.f32 %v1778, %v1785
    %1787 = vst.msk [vmem:[#allocation2 + $0x4] sm:$0xc0] %vm1037, %v1786
    %v1789 = vrot.slane %v1786, 6
    %v1790 = vsel %vm282, %v1789, 0
    %1792 = vmatprep.subr.mxu0 0.0
    %1793 = vmatpush1.msra.mxu0 0.0
    %1794 = vmatprep.subr.mxu0 0.0
    %1795 = vmatpush1.msra.mxu0 0.0
    %1796 = vmatprep.subr.mxu0 0.0
    %1797 = vmatpush1.msra.mxu0 0.0
    %1798 = vmatprep.subr.mxu0 0.0
    %1799 = vmatpush1.msra.mxu0 0.0
    %1800 = vmatprep.subr.mxu0 0.0
    %1801 = vmatpush1.msra.mxu0 0.0
    %1802 = vmatprep.subr.mxu0 0.0
    %1803 = vmatpush1.msra.mxu0 0.0
    %1804 = vmatprep.subr.mxu0 0.0
    %1805 = vmatpush1.msra.mxu0 0.0
    %1806 = vmatprep.subr.mxu0 0.0
    %1807 = vmatpush1.msra.mxu0 0.0
    %1808 = vmatprep.subr.mxu0 0.0
    %1809 = vmatpush1.msra.mxu0 0.0
    %1810 = vmatprep.subr.mxu0 %v291
    %1811 = vmatpush1.msra.mxu0 %v288
    %1812 = vmatprep.subr.mxu0 %v273
    %1813 = vmatpush1.msra.mxu0 %v272
    %1814 = vmatprep.subr.mxu0 %v269
    %1815 = vmatpush1.msra.mxu0 %v268
    %1816 = vmatprep.subr.mxu0 %v265
    %1817 = vmatpush1.msra.mxu0 %v264
    %1818 = vmatprep.subr.mxu0 %v261
    %1819 = vmatpush1.msra.mxu0 %v260
    %1820 = vmatprep.subr.mxu0 %v257
    %1821 = vmatpush1.msra.mxu0 %v256
    %1822 = vmatprep.subr.mxu0 %v253
    %1823 = vmatpush1.msra.mxu0 %v252
    %1824 = vmatprep.subr.mxu0 0.0
    %1825 = vmatpush2.msra.mxu0 0.0
    %1826 = vmatprep.subr.mxu0 0.0
    %1827 = vmatpush2.msra.mxu0 0.0
    %1828 = vmatprep.subr.mxu0 0.0
    %1829 = vmatpush2.msra.mxu0 0.0
    %1830 = vmatprep.subr.mxu0 0.0
    %1831 = vmatpush2.msra.mxu0 0.0
    %1832 = vmatprep.subr.mxu0 0.0
    %1833 = vmatpush2.msra.mxu0 0.0
    %1834 = vmatprep.subr.mxu0 0.0
    %1835 = vmatpush2.msra.mxu0 0.0
    %1836 = vmatprep.subr.mxu0 0.0
    %1837 = vmatpush2.msra.mxu0 0.0
    %1838 = vmatprep.subr.mxu0 0.0
    %1839 = vmatpush2.msra.mxu0 0.0
    %1840 = vmatprep.subr.mxu0 0.0
    %1841 = vmatpush2.msra.mxu0 0.0
    %1842 = vmatprep.subr.mxu0 0.0
    %1843 = vmatpush2.msra.mxu0 0.0
    %1844 = vmatprep.subr.mxu0 0.0
    %1845 = vmatpush2.msra.mxu0 0.0
    %1846 = vmatprep.subr.mxu0 0.0
    %1847 = vmatpush2.msra.mxu0 0.0
    %1848 = vmatprep.subr.mxu0 0.0
    %1849 = vmatpush2.msra.mxu0 0.0
    %1850 = vmatprep.subr.mxu0 0.0
    %1851 = vmatpush2.msra.mxu0 0.0
    %1852 = vmatprep.subr.mxu0 0.0
    %1853 = vmatpush2.msra.mxu0 0.0
    %1854 = vmatprep.subr.mxu0 0.0
    %1855 = vmatpush2.msra.mxu0 0.0
    %1856 = vmatprep.mubr.f32.mxu0 0.0
    %1857 = vmatmul.mubr.f32.gmra.mxu0 %v1790
    %v1858 = vpop.f32.mrf.mxu0
    %v1859 = vadd.f32 0.0, %v1858
    %v1860 = vpop.f32.mrf.mxu0
    %v1861 = vadd.f32 0.0, %v1860
    %1862 = vdwg.mxu0
    %1863 = vmatprep.subr.mxu0 0.0
    %1864 = vmatpush1.msra.mxu0 0.0
    %1865 = vmatprep.subr.mxu0 0.0
    %1866 = vmatpush1.msra.mxu0 0.0
    %1867 = vmatprep.subr.mxu0 0.0
    %1868 = vmatpush1.msra.mxu0 0.0
    %1869 = vmatprep.subr.mxu0 0.0
    %1870 = vmatpush1.msra.mxu0 0.0
    %1871 = vmatprep.subr.mxu0 0.0
    %1872 = vmatpush1.msra.mxu0 0.0
    %1873 = vmatprep.subr.mxu0 0.0
    %1874 = vmatpush1.msra.mxu0 0.0
    %1875 = vmatprep.subr.mxu0 0.0
    %1876 = vmatpush1.msra.mxu0 0.0
    %1877 = vmatprep.subr.mxu0 0.0
    %1878 = vmatpush1.msra.mxu0 0.0
    %1879 = vmatprep.subr.mxu0 0.0
    %1880 = vmatpush1.msra.mxu0 0.0
    %1881 = vmatprep.subr.mxu0 %v297
    %1882 = vmatpush1.msra.mxu0 %v294
    %1883 = vmatprep.subr.mxu0 %v275
    %1884 = vmatpush1.msra.mxu0 %v274
    %1885 = vmatprep.subr.mxu0 %v271
    %1886 = vmatpush1.msra.mxu0 %v270
    %1887 = vmatprep.subr.mxu0 %v267
    %1888 = vmatpush1.msra.mxu0 %v266
    %1889 = vmatprep.subr.mxu0 %v263
    %1890 = vmatpush1.msra.mxu0 %v262
    %1891 = vmatprep.subr.mxu0 %v259
    %1892 = vmatpush1.msra.mxu0 %v258
    %1893 = vmatprep.subr.mxu0 %v255
    %1894 = vmatpush1.msra.mxu0 %v254
    %1895 = vmatprep.subr.mxu0 0.0
    %1896 = vmatpush2.msra.mxu0 0.0
    %1897 = vmatprep.subr.mxu0 0.0
    %1898 = vmatpush2.msra.mxu0 0.0
    %1899 = vmatprep.subr.mxu0 0.0
    %1900 = vmatpush2.msra.mxu0 0.0
    %1901 = vmatprep.subr.mxu0 0.0
    %1902 = vmatpush2.msra.mxu0 0.0
    %1903 = vmatprep.subr.mxu0 0.0
    %1904 = vmatpush2.msra.mxu0 0.0
    %1905 = vmatprep.subr.mxu0 0.0
    %1906 = vmatpush2.msra.mxu0 0.0
    %1907 = vmatprep.subr.mxu0 0.0
    %1908 = vmatpush2.msra.mxu0 0.0
    %1909 = vmatprep.subr.mxu0 0.0
    %1910 = vmatpush2.msra.mxu0 0.0
    %1911 = vmatprep.subr.mxu0 0.0
    %1912 = vmatpush2.msra.mxu0 0.0
    %1913 = vmatprep.subr.mxu0 0.0
    %1914 = vmatpush2.msra.mxu0 0.0
    %1915 = vmatprep.subr.mxu0 0.0
    %1916 = vmatpush2.msra.mxu0 0.0
    %1917 = vmatprep.subr.mxu0 0.0
    %1918 = vmatpush2.msra.mxu0 0.0
    %1919 = vmatprep.subr.mxu0 0.0
    %1920 = vmatpush2.msra.mxu0 0.0
    %1921 = vmatprep.subr.mxu0 0.0
    %1922 = vmatpush2.msra.mxu0 0.0
    %1923 = vmatprep.subr.mxu0 0.0
    %1924 = vmatpush2.msra.mxu0 0.0
    %1925 = vmatprep.subr.mxu0 0.0
    %1926 = vmatpush2.msra.mxu0 0.0
    %1927 = vmatprep.mubr.f32.mxu0 0.0
    %1928 = vmatmul.mubr.f32.gmra.mxu0 %v1790
    %v1929 = vpop.f32.mrf.mxu0
    %v1930 = vadd.f32 0.0, %v1929
    %v1931 = vpop.f32.mrf.mxu0
    %v1932 = vadd.f32 0.0, %v1931
    %1933 = vdwg.mxu0
    %v1934 = vadd.f32 %v165, %v1859
    %v1935 = vadd.f32 %v167, %v1861
    %v1936 = vadd.f32 %v248, %v1930
    %v1937 = vadd.f32 %v250, %v1932
    %v1938 = vxor.u32 %v1934, 2147483648
    %v1939 = vmul.f32 %v1938, 1.442695
    %v1940 = vpow.pop %v1939
    %v1941 = vadd.f32 %v1940, 1.0
    %v1942 = vrcp.pop %v1941
    %v1943 = vmul.f32 1.0, %v1942
    %v1944 = vxor.u32 %v1935, 2147483648
    %v1945 = vmul.f32 %v1944, 1.442695
    %v1946 = vpow.pop %v1945
    %v1947 = vadd.f32 %v1946, 1.0
    %v1948 = vrcp.pop %v1947
    %v1949 = vmul.f32 1.0, %v1948
    %v1950 = vtanh.pop %v1936
    %v1951 = vxor.u32 %v1937, 2147483648
    %v1952 = vmul.f32 %v1951, 1.442695
    %v1953 = vpow.pop %v1952
    %v1954 = vadd.f32 %v1953, 1.0
    %v1955 = vrcp.pop %v1954
    %v1956 = vmul.f32 1.0, %v1955
    %v1958 = vrot.slane %v1784, 6
    %v1960 = vmul.f32 %v1949, %v1958
    %v1961 = vmul.f32 %v1943, %v1950
    %v1962 = vadd.f32 %v1960, %v1961
    %v1963 = vtanh.pop %v1962
    %v1964 = vmul.f32 %v1956, %v1963
    %1965 = vst.msk [vmem:[#allocation2 + $0xc] sm:$0x3] %vm1216, %v1964
    %v1967 = vsel %vm282, %v1964, 0
    %1969 = vmatprep.subr.mxu0 0.0
    %1970 = vmatpush1.msra.mxu0 0.0
    %1971 = vmatprep.subr.mxu0 0.0
    %1972 = vmatpush1.msra.mxu0 0.0
    %1973 = vmatprep.subr.mxu0 0.0
    %1974 = vmatpush1.msra.mxu0 0.0
    %1975 = vmatprep.subr.mxu0 0.0
    %1976 = vmatpush1.msra.mxu0 0.0
    %1977 = vmatprep.subr.mxu0 0.0
    %1978 = vmatpush1.msra.mxu0 0.0
    %1979 = vmatprep.subr.mxu0 0.0
    %1980 = vmatpush1.msra.mxu0 0.0
    %1981 = vmatprep.subr.mxu0 0.0
    %1982 = vmatpush1.msra.mxu0 0.0
    %1983 = vmatprep.subr.mxu0 0.0
    %1984 = vmatpush1.msra.mxu0 0.0
    %1985 = vmatprep.subr.mxu0 0.0
    %1986 = vmatpush1.msra.mxu0 0.0
    %1987 = vmatprep.subr.mxu0 %v291
    %1988 = vmatpush1.msra.mxu0 %v288
    %1989 = vmatprep.subr.mxu0 %v273
    %1990 = vmatpush1.msra.mxu0 %v272
    %1991 = vmatprep.subr.mxu0 %v269
    %1992 = vmatpush1.msra.mxu0 %v268
    %1993 = vmatprep.subr.mxu0 %v265
    %1994 = vmatpush1.msra.mxu0 %v264
    %1995 = vmatprep.subr.mxu0 %v261
    %1996 = vmatpush1.msra.mxu0 %v260
    %1997 = vmatprep.subr.mxu0 %v257
    %1998 = vmatpush1.msra.mxu0 %v256
    %1999 = vmatprep.subr.mxu0 %v253
    %2000 = vmatpush1.msra.mxu0 %v252
    %2001 = vmatprep.subr.mxu0 0.0
    %2002 = vmatpush2.msra.mxu0 0.0
    %2003 = vmatprep.subr.mxu0 0.0
    %2004 = vmatpush2.msra.mxu0 0.0
    %2005 = vmatprep.subr.mxu0 0.0
    %2006 = vmatpush2.msra.mxu0 0.0
    %2007 = vmatprep.subr.mxu0 0.0
    %2008 = vmatpush2.msra.mxu0 0.0
    %2009 = vmatprep.subr.mxu0 0.0
    %2010 = vmatpush2.msra.mxu0 0.0
    %2011 = vmatprep.subr.mxu0 0.0
    %2012 = vmatpush2.msra.mxu0 0.0
    %2013 = vmatprep.subr.mxu0 0.0
    %2014 = vmatpush2.msra.mxu0 0.0
    %2015 = vmatprep.subr.mxu0 0.0
    %2016 = vmatpush2.msra.mxu0 0.0
    %2017 = vmatprep.subr.mxu0 0.0
    %2018 = vmatpush2.msra.mxu0 0.0
    %2019 = vmatprep.subr.mxu0 0.0
    %2020 = vmatpush2.msra.mxu0 0.0
    %2021 = vmatprep.subr.mxu0 0.0
    %2022 = vmatpush2.msra.mxu0 0.0
    %2023 = vmatprep.subr.mxu0 0.0
    %2024 = vmatpush2.msra.mxu0 0.0
    %2025 = vmatprep.subr.mxu0 0.0
    %2026 = vmatpush2.msra.mxu0 0.0
    %2027 = vmatprep.subr.mxu0 0.0
    %2028 = vmatpush2.msra.mxu0 0.0
    %2029 = vmatprep.subr.mxu0 0.0
    %2030 = vmatpush2.msra.mxu0 0.0
    %2031 = vmatprep.subr.mxu0 0.0
    %2032 = vmatpush2.msra.mxu0 0.0
    %2033 = vmatprep.mubr.f32.mxu0 0.0
    %2034 = vmatmul.mubr.f32.gmra.mxu0 %v1967
    %v2035 = vpop.f32.mrf.mxu0
    %v2036 = vadd.f32 0.0, %v2035
    %v2037 = vpop.f32.mrf.mxu0
    %v2038 = vadd.f32 0.0, %v2037
    %2039 = vdwg.mxu0
    %2040 = vmatprep.subr.mxu0 0.0
    %2041 = vmatpush1.msra.mxu0 0.0
    %2042 = vmatprep.subr.mxu0 0.0
    %2043 = vmatpush1.msra.mxu0 0.0
    %2044 = vmatprep.subr.mxu0 0.0
    %2045 = vmatpush1.msra.mxu0 0.0
    %2046 = vmatprep.subr.mxu0 0.0
    %2047 = vmatpush1.msra.mxu0 0.0
    %2048 = vmatprep.subr.mxu0 0.0
    %2049 = vmatpush1.msra.mxu0 0.0
    %2050 = vmatprep.subr.mxu0 0.0
    %2051 = vmatpush1.msra.mxu0 0.0
    %2052 = vmatprep.subr.mxu0 0.0
    %2053 = vmatpush1.msra.mxu0 0.0
    %2054 = vmatprep.subr.mxu0 0.0
    %2055 = vmatpush1.msra.mxu0 0.0
    %2056 = vmatprep.subr.mxu0 0.0
    %2057 = vmatpush1.msra.mxu0 0.0
    %2058 = vmatprep.subr.mxu0 %v297
    %2059 = vmatpush1.msra.mxu0 %v294
    %2060 = vmatprep.subr.mxu0 %v275
    %2061 = vmatpush1.msra.mxu0 %v274
    %2062 = vmatprep.subr.mxu0 %v271
    %2063 = vmatpush1.msra.mxu0 %v270
    %2064 = vmatprep.subr.mxu0 %v267
    %2065 = vmatpush1.msra.mxu0 %v266
    %2066 = vmatprep.subr.mxu0 %v263
    %2067 = vmatpush1.msra.mxu0 %v262
    %2068 = vmatprep.subr.mxu0 %v259
    %2069 = vmatpush1.msra.mxu0 %v258
    %2070 = vmatprep.subr.mxu0 %v255
    %2071 = vmatpush1.msra.mxu0 %v254
    %2072 = vmatprep.subr.mxu0 0.0
    %2073 = vmatpush2.msra.mxu0 0.0
    %2074 = vmatprep.subr.mxu0 0.0
    %2075 = vmatpush2.msra.mxu0 0.0
    %2076 = vmatprep.subr.mxu0 0.0
    %2077 = vmatpush2.msra.mxu0 0.0
    %2078 = vmatprep.subr.mxu0 0.0
    %2079 = vmatpush2.msra.mxu0 0.0
    %2080 = vmatprep.subr.mxu0 0.0
    %2081 = vmatpush2.msra.mxu0 0.0
    %2082 = vmatprep.subr.mxu0 0.0
    %2083 = vmatpush2.msra.mxu0 0.0
    %2084 = vmatprep.subr.mxu0 0.0
    %2085 = vmatpush2.msra.mxu0 0.0
    %2086 = vmatprep.subr.mxu0 0.0
    %2087 = vmatpush2.msra.mxu0 0.0
    %2088 = vmatprep.subr.mxu0 0.0
    %2089 = vmatpush2.msra.mxu0 0.0
    %2090 = vmatprep.subr.mxu0 0.0
    %2091 = vmatpush2.msra.mxu0 0.0
    %2092 = vmatprep.subr.mxu0 0.0
    %2093 = vmatpush2.msra.mxu0 0.0
    %2094 = vmatprep.subr.mxu0 0.0
    %2095 = vmatpush2.msra.mxu0 0.0
    %2096 = vmatprep.subr.mxu0 0.0
    %2097 = vmatpush2.msra.mxu0 0.0
    %2098 = vmatprep.subr.mxu0 0.0
    %2099 = vmatpush2.msra.mxu0 0.0
    %2100 = vmatprep.subr.mxu0 0.0
    %2101 = vmatpush2.msra.mxu0 0.0
    %2102 = vmatprep.subr.mxu0 0.0
    %2103 = vmatpush2.msra.mxu0 0.0
    %2104 = vmatprep.mubr.f32.mxu0 0.0
    %2105 = vmatmul.mubr.f32.gmra.mxu0 %v1967
    %v2106 = vpop.f32.mrf.mxu0
    %v2107 = vadd.f32 0.0, %v2106
    %v2108 = vpop.f32.mrf.mxu0
    %v2109 = vadd.f32 0.0, %v2108
    %2110 = vdwg.mxu0
    %v2115 = vrot.slane %v2036, 6
    %v2116 = vrot.slane %v2038, 6
    %v2117 = vrot.slane %v2107, 6
    %v2118 = vrot.slane %v2109, 6
    %v2123 = vadd.f32 %v165, %v2115
    %v2124 = vadd.f32 %v167, %v2116
    %v2125 = vadd.f32 %v248, %v2117
    %v2126 = vadd.f32 %v250, %v2118
    %v2127 = vxor.u32 %v2123, 2147483648
    %v2128 = vmul.f32 %v2127, 1.442695
    %v2129 = vpow.pop %v2128
    %v2130 = vadd.f32 %v2129, 1.0
    %v2131 = vrcp.pop %v2130
    %v2132 = vmul.f32 1.0, %v2131
    %v2133 = vxor.u32 %v2124, 2147483648
    %v2134 = vmul.f32 %v2133, 1.442695
    %v2135 = vpow.pop %v2134
    %v2136 = vadd.f32 %v2135, 1.0
    %v2137 = vrcp.pop %v2136
    %v2138 = vmul.f32 1.0, %v2137
    %v2139 = vtanh.pop %v2125
    %v2140 = vxor.u32 %v2126, 2147483648
    %v2141 = vmul.f32 %v2140, 1.442695
    %v2142 = vpow.pop %v2141
    %v2143 = vadd.f32 %v2142, 1.0
    %v2144 = vrcp.pop %v2143
    %v2145 = vmul.f32 1.0, %v2144
    %v2147 = vrot.slane %v1962, 6
    %v2149 = vmul.f32 %v2138, %v2147
    %v2150 = vmul.f32 %v2132, %v2139
    %v2151 = vadd.f32 %v2149, %v2150
    %v2152 = vtanh.pop %v2151
    %v2153 = vmul.f32 %v2145, %v2152
    %2154 = vst.msk [vmem:[#allocation2 + $0xc] sm:$0xc] %vm1406, %v2153
    %v2156 = vrot.slane %v2153, 2
    %v2157 = vsel %vm282, %v2156, 0
    %2159 = vmatprep.subr.mxu0 0.0
    %2160 = vmatpush1.msra.mxu0 0.0
    %2161 = vmatprep.subr.mxu0 0.0
    %2162 = vmatpush1.msra.mxu0 0.0
    %2163 = vmatprep.subr.mxu0 0.0
    %2164 = vmatpush1.msra.mxu0 0.0
    %2165 = vmatprep.subr.mxu0 0.0
    %2166 = vmatpush1.msra.mxu0 0.0
    %2167 = vmatprep.subr.mxu0 0.0
    %2168 = vmatpush1.msra.mxu0 0.0
    %2169 = vmatprep.subr.mxu0 0.0
    %2170 = vmatpush1.msra.mxu0 0.0
    %2171 = vmatprep.subr.mxu0 0.0
    %2172 = vmatpush1.msra.mxu0 0.0
    %2173 = vmatprep.subr.mxu0 0.0
    %2174 = vmatpush1.msra.mxu0 0.0
    %2175 = vmatprep.subr.mxu0 0.0
    %2176 = vmatpush1.msra.mxu0 0.0
    %2177 = vmatprep.subr.mxu0 %v291
    %2178 = vmatpush1.msra.mxu0 %v288
    %2179 = vmatprep.subr.mxu0 %v273
    %2180 = vmatpush1.msra.mxu0 %v272
    %2181 = vmatprep.subr.mxu0 %v269
    %2182 = vmatpush1.msra.mxu0 %v268
    %2183 = vmatprep.subr.mxu0 %v265
    %2184 = vmatpush1.msra.mxu0 %v264
    %2185 = vmatprep.subr.mxu0 %v261
    %2186 = vmatpush1.msra.mxu0 %v260
    %2187 = vmatprep.subr.mxu0 %v257
    %2188 = vmatpush1.msra.mxu0 %v256
    %2189 = vmatprep.subr.mxu0 %v253
    %2190 = vmatpush1.msra.mxu0 %v252
    %2191 = vmatprep.subr.mxu0 0.0
    %2192 = vmatpush2.msra.mxu0 0.0
    %2193 = vmatprep.subr.mxu0 0.0
    %2194 = vmatpush2.msra.mxu0 0.0
    %2195 = vmatprep.subr.mxu0 0.0
    %2196 = vmatpush2.msra.mxu0 0.0
    %2197 = vmatprep.subr.mxu0 0.0
    %2198 = vmatpush2.msra.mxu0 0.0
    %2199 = vmatprep.subr.mxu0 0.0
    %2200 = vmatpush2.msra.mxu0 0.0
    %2201 = vmatprep.subr.mxu0 0.0
    %2202 = vmatpush2.msra.mxu0 0.0
    %2203 = vmatprep.subr.mxu0 0.0
    %2204 = vmatpush2.msra.mxu0 0.0
    %2205 = vmatprep.subr.mxu0 0.0
    %2206 = vmatpush2.msra.mxu0 0.0
    %2207 = vmatprep.subr.mxu0 0.0
    %2208 = vmatpush2.msra.mxu0 0.0
    %2209 = vmatprep.subr.mxu0 0.0
    %2210 = vmatpush2.msra.mxu0 0.0
    %2211 = vmatprep.subr.mxu0 0.0
    %2212 = vmatpush2.msra.mxu0 0.0
    %2213 = vmatprep.subr.mxu0 0.0
    %2214 = vmatpush2.msra.mxu0 0.0
    %2215 = vmatprep.subr.mxu0 0.0
    %2216 = vmatpush2.msra.mxu0 0.0
    %2217 = vmatprep.subr.mxu0 0.0
    %2218 = vmatpush2.msra.mxu0 0.0
    %2219 = vmatprep.subr.mxu0 0.0
    %2220 = vmatpush2.msra.mxu0 0.0
    %2221 = vmatprep.subr.mxu0 0.0
    %2222 = vmatpush2.msra.mxu0 0.0
    %2223 = vmatprep.mubr.f32.mxu0 0.0
    %2224 = vmatmul.mubr.f32.gmra.mxu0 %v2157
    %v2225 = vpop.f32.mrf.mxu0
    %v2226 = vadd.f32 0.0, %v2225
    %v2227 = vpop.f32.mrf.mxu0
    %v2228 = vadd.f32 0.0, %v2227
    %2229 = vdwg.mxu0
    %2230 = vmatprep.subr.mxu0 0.0
    %2231 = vmatpush1.msra.mxu0 0.0
    %2232 = vmatprep.subr.mxu0 0.0
    %2233 = vmatpush1.msra.mxu0 0.0
    %2234 = vmatprep.subr.mxu0 0.0
    %2235 = vmatpush1.msra.mxu0 0.0
    %2236 = vmatprep.subr.mxu0 0.0
    %2237 = vmatpush1.msra.mxu0 0.0
    %2238 = vmatprep.subr.mxu0 0.0
    %2239 = vmatpush1.msra.mxu0 0.0
    %2240 = vmatprep.subr.mxu0 0.0
    %2241 = vmatpush1.msra.mxu0 0.0
    %2242 = vmatprep.subr.mxu0 0.0
    %2243 = vmatpush1.msra.mxu0 0.0
    %2244 = vmatprep.subr.mxu0 0.0
    %2245 = vmatpush1.msra.mxu0 0.0
    %2246 = vmatprep.subr.mxu0 0.0
    %2247 = vmatpush1.msra.mxu0 0.0
    %2248 = vmatprep.subr.mxu0 %v297
    %2249 = vmatpush1.msra.mxu0 %v294
    %2250 = vmatprep.subr.mxu0 %v275
    %2251 = vmatpush1.msra.mxu0 %v274
    %2252 = vmatprep.subr.mxu0 %v271
    %2253 = vmatpush1.msra.mxu0 %v270
    %2254 = vmatprep.subr.mxu0 %v267
    %2255 = vmatpush1.msra.mxu0 %v266
    %2256 = vmatprep.subr.mxu0 %v263
    %2257 = vmatpush1.msra.mxu0 %v262
    %2258 = vmatprep.subr.mxu0 %v259
    %2259 = vmatpush1.msra.mxu0 %v258
    %2260 = vmatprep.subr.mxu0 %v255
    %2261 = vmatpush1.msra.mxu0 %v254
    %2262 = vmatprep.subr.mxu0 0.0
    %2263 = vmatpush2.msra.mxu0 0.0
    %2264 = vmatprep.subr.mxu0 0.0
    %2265 = vmatpush2.msra.mxu0 0.0
    %2266 = vmatprep.subr.mxu0 0.0
    %2267 = vmatpush2.msra.mxu0 0.0
    %2268 = vmatprep.subr.mxu0 0.0
    %2269 = vmatpush2.msra.mxu0 0.0
    %2270 = vmatprep.subr.mxu0 0.0
    %2271 = vmatpush2.msra.mxu0 0.0
    %2272 = vmatprep.subr.mxu0 0.0
    %2273 = vmatpush2.msra.mxu0 0.0
    %2274 = vmatprep.subr.mxu0 0.0
    %2275 = vmatpush2.msra.mxu0 0.0
    %2276 = vmatprep.subr.mxu0 0.0
    %2277 = vmatpush2.msra.mxu0 0.0
    %2278 = vmatprep.subr.mxu0 0.0
    %2279 = vmatpush2.msra.mxu0 0.0
    %2280 = vmatprep.subr.mxu0 0.0
    %2281 = vmatpush2.msra.mxu0 0.0
    %2282 = vmatprep.subr.mxu0 0.0
    %2283 = vmatpush2.msra.mxu0 0.0
    %2284 = vmatprep.subr.mxu0 0.0
    %2285 = vmatpush2.msra.mxu0 0.0
    %2286 = vmatprep.subr.mxu0 0.0
    %2287 = vmatpush2.msra.mxu0 0.0
    %2288 = vmatprep.subr.mxu0 0.0
    %2289 = vmatpush2.msra.mxu0 0.0
    %2290 = vmatprep.subr.mxu0 0.0
    %2291 = vmatpush2.msra.mxu0 0.0
    %2292 = vmatprep.subr.mxu0 0.0
    %2293 = vmatpush2.msra.mxu0 0.0
    %2294 = vmatprep.mubr.f32.mxu0 0.0
    %2295 = vmatmul.mubr.f32.gmra.mxu0 %v2157
    %v2296 = vpop.f32.mrf.mxu0
    %v2297 = vadd.f32 0.0, %v2296
    %v2298 = vpop.f32.mrf.mxu0
    %v2299 = vadd.f32 0.0, %v2298
    %2300 = vdwg.mxu0
    %v2305 = vrot.slane %v2226, 4
    %v2306 = vrot.slane %v2228, 4
    %v2307 = vrot.slane %v2297, 4
    %v2308 = vrot.slane %v2299, 4
    %v2313 = vadd.f32 %v165, %v2305
    %v2314 = vadd.f32 %v167, %v2306
    %v2315 = vadd.f32 %v248, %v2307
    %v2316 = vadd.f32 %v250, %v2308
    %v2317 = vxor.u32 %v2313, 2147483648
    %v2318 = vmul.f32 %v2317, 1.442695
    %v2319 = vpow.pop %v2318
    %v2320 = vadd.f32 %v2319, 1.0
    %v2321 = vrcp.pop %v2320
    %v2322 = vmul.f32 1.0, %v2321
    %v2323 = vxor.u32 %v2314, 2147483648
    %v2324 = vmul.f32 %v2323, 1.442695
    %v2325 = vpow.pop %v2324
    %v2326 = vadd.f32 %v2325, 1.0
    %v2327 = vrcp.pop %v2326
    %v2328 = vmul.f32 1.0, %v2327
    %v2329 = vtanh.pop %v2315
    %v2330 = vxor.u32 %v2316, 2147483648
    %v2331 = vmul.f32 %v2330, 1.442695
    %v2332 = vpow.pop %v2331
    %v2333 = vadd.f32 %v2332, 1.0
    %v2334 = vrcp.pop %v2333
    %v2335 = vmul.f32 1.0, %v2334
    %v2337 = vrot.slane %v2151, 6
    %v2339 = vmul.f32 %v2328, %v2337
    %v2340 = vmul.f32 %v2322, %v2329
    %v2341 = vadd.f32 %v2339, %v2340
    %v2342 = vtanh.pop %v2341
    %v2343 = vmul.f32 %v2335, %v2342
    %2344 = vst.msk [vmem:[#allocation2 + $0xc] sm:$0x30] %vm846, %v2343
    %v2346 = vrot.slane %v2343, 4
    %v2347 = vsel %vm282, %v2346, 0
    %2349 = vmatprep.subr.mxu0 0.0
    %2350 = vmatpush1.msra.mxu0 0.0
    %2351 = vmatprep.subr.mxu0 0.0
    %2352 = vmatpush1.msra.mxu0 0.0
    %2353 = vmatprep.subr.mxu0 0.0
    %2354 = vmatpush1.msra.mxu0 0.0
    %2355 = vmatprep.subr.mxu0 0.0
    %2356 = vmatpush1.msra.mxu0 0.0
    %2357 = vmatprep.subr.mxu0 0.0
    %2358 = vmatpush1.msra.mxu0 0.0
    %2359 = vmatprep.subr.mxu0 0.0
    %2360 = vmatpush1.msra.mxu0 0.0
    %2361 = vmatprep.subr.mxu0 0.0
    %2362 = vmatpush1.msra.mxu0 0.0
    %2363 = vmatprep.subr.mxu0 0.0
    %2364 = vmatpush1.msra.mxu0 0.0
    %2365 = vmatprep.subr.mxu0 0.0
    %2366 = vmatpush1.msra.mxu0 0.0
    %2367 = vmatprep.subr.mxu0 %v291
    %2368 = vmatpush1.msra.mxu0 %v288
    %2369 = vmatprep.subr.mxu0 %v273
    %2370 = vmatpush1.msra.mxu0 %v272
    %2371 = vmatprep.subr.mxu0 %v269
    %2372 = vmatpush1.msra.mxu0 %v268
    %2373 = vmatprep.subr.mxu0 %v265
    %2374 = vmatpush1.msra.mxu0 %v264
    %2375 = vmatprep.subr.mxu0 %v261
    %2376 = vmatpush1.msra.mxu0 %v260
    %2377 = vmatprep.subr.mxu0 %v257
    %2378 = vmatpush1.msra.mxu0 %v256
    %2379 = vmatprep.subr.mxu0 %v253
    %2380 = vmatpush1.msra.mxu0 %v252
    %2381 = vmatprep.subr.mxu0 0.0
    %2382 = vmatpush2.msra.mxu0 0.0
    %2383 = vmatprep.subr.mxu0 0.0
    %2384 = vmatpush2.msra.mxu0 0.0
    %2385 = vmatprep.subr.mxu0 0.0
    %2386 = vmatpush2.msra.mxu0 0.0
    %2387 = vmatprep.subr.mxu0 0.0
    %2388 = vmatpush2.msra.mxu0 0.0
    %2389 = vmatprep.subr.mxu0 0.0
    %2390 = vmatpush2.msra.mxu0 0.0
    %2391 = vmatprep.subr.mxu0 0.0
    %2392 = vmatpush2.msra.mxu0 0.0
    %2393 = vmatprep.subr.mxu0 0.0
    %2394 = vmatpush2.msra.mxu0 0.0
    %2395 = vmatprep.subr.mxu0 0.0
    %2396 = vmatpush2.msra.mxu0 0.0
    %2397 = vmatprep.subr.mxu0 0.0
    %2398 = vmatpush2.msra.mxu0 0.0
    %2399 = vmatprep.subr.mxu0 0.0
    %2400 = vmatpush2.msra.mxu0 0.0
    %2401 = vmatprep.subr.mxu0 0.0
    %2402 = vmatpush2.msra.mxu0 0.0
    %2403 = vmatprep.subr.mxu0 0.0
    %2404 = vmatpush2.msra.mxu0 0.0
    %2405 = vmatprep.subr.mxu0 0.0
    %2406 = vmatpush2.msra.mxu0 0.0
    %2407 = vmatprep.subr.mxu0 0.0
    %2408 = vmatpush2.msra.mxu0 0.0
    %2409 = vmatprep.subr.mxu0 0.0
    %2410 = vmatpush2.msra.mxu0 0.0
    %2411 = vmatprep.subr.mxu0 0.0
    %2412 = vmatpush2.msra.mxu0 0.0
    %2413 = vmatprep.mubr.f32.mxu0 0.0
    %2414 = vmatmul.mubr.f32.gmra.mxu0 %v2347
    %v2415 = vpop.f32.mrf.mxu0
    %v2416 = vadd.f32 0.0, %v2415
    %v2417 = vpop.f32.mrf.mxu0
    %v2418 = vadd.f32 0.0, %v2417
    %2419 = vdwg.mxu0
    %2420 = vmatprep.subr.mxu0 0.0
    %2421 = vmatpush1.msra.mxu0 0.0
    %2422 = vmatprep.subr.mxu0 0.0
    %2423 = vmatpush1.msra.mxu0 0.0
    %2424 = vmatprep.subr.mxu0 0.0
    %2425 = vmatpush1.msra.mxu0 0.0
    %2426 = vmatprep.subr.mxu0 0.0
    %2427 = vmatpush1.msra.mxu0 0.0
    %2428 = vmatprep.subr.mxu0 0.0
    %2429 = vmatpush1.msra.mxu0 0.0
    %2430 = vmatprep.subr.mxu0 0.0
    %2431 = vmatpush1.msra.mxu0 0.0
    %2432 = vmatprep.subr.mxu0 0.0
    %2433 = vmatpush1.msra.mxu0 0.0
    %2434 = vmatprep.subr.mxu0 0.0
    %2435 = vmatpush1.msra.mxu0 0.0
    %2436 = vmatprep.subr.mxu0 0.0
    %2437 = vmatpush1.msra.mxu0 0.0
    %2438 = vmatprep.subr.mxu0 %v297
    %2439 = vmatpush1.msra.mxu0 %v294
    %2440 = vmatprep.subr.mxu0 %v275
    %2441 = vmatpush1.msra.mxu0 %v274
    %2442 = vmatprep.subr.mxu0 %v271
    %2443 = vmatpush1.msra.mxu0 %v270
    %2444 = vmatprep.subr.mxu0 %v267
    %2445 = vmatpush1.msra.mxu0 %v266
    %2446 = vmatprep.subr.mxu0 %v263
    %2447 = vmatpush1.msra.mxu0 %v262
    %2448 = vmatprep.subr.mxu0 %v259
    %2449 = vmatpush1.msra.mxu0 %v258
    %2450 = vmatprep.subr.mxu0 %v255
    %2451 = vmatpush1.msra.mxu0 %v254
    %2452 = vmatprep.subr.mxu0 0.0
    %2453 = vmatpush2.msra.mxu0 0.0
    %2454 = vmatprep.subr.mxu0 0.0
    %2455 = vmatpush2.msra.mxu0 0.0
    %2456 = vmatprep.subr.mxu0 0.0
    %2457 = vmatpush2.msra.mxu0 0.0
    %2458 = vmatprep.subr.mxu0 0.0
    %2459 = vmatpush2.msra.mxu0 0.0
    %2460 = vmatprep.subr.mxu0 0.0
    %2461 = vmatpush2.msra.mxu0 0.0
    %2462 = vmatprep.subr.mxu0 0.0
    %2463 = vmatpush2.msra.mxu0 0.0
    %2464 = vmatprep.subr.mxu0 0.0
    %2465 = vmatpush2.msra.mxu0 0.0
    %2466 = vmatprep.subr.mxu0 0.0
    %2467 = vmatpush2.msra.mxu0 0.0
    %2468 = vmatprep.subr.mxu0 0.0
    %2469 = vmatpush2.msra.mxu0 0.0
    %2470 = vmatprep.subr.mxu0 0.0
    %2471 = vmatpush2.msra.mxu0 0.0
    %2472 = vmatprep.subr.mxu0 0.0
    %2473 = vmatpush2.msra.mxu0 0.0
    %2474 = vmatprep.subr.mxu0 0.0
    %2475 = vmatpush2.msra.mxu0 0.0
    %2476 = vmatprep.subr.mxu0 0.0
    %2477 = vmatpush2.msra.mxu0 0.0
    %2478 = vmatprep.subr.mxu0 0.0
    %2479 = vmatpush2.msra.mxu0 0.0
    %2480 = vmatprep.subr.mxu0 0.0
    %2481 = vmatpush2.msra.mxu0 0.0
    %2482 = vmatprep.subr.mxu0 0.0
    %2483 = vmatpush2.msra.mxu0 0.0
    %2484 = vmatprep.mubr.f32.mxu0 0.0
    %2485 = vmatmul.mubr.f32.gmra.mxu0 %v2347
    %v2486 = vpop.f32.mrf.mxu0
    %v2487 = vadd.f32 0.0, %v2486
    %v2488 = vpop.f32.mrf.mxu0
    %v2489 = vadd.f32 0.0, %v2488
    %2490 = vdwg.mxu0
    %v2495 = vrot.slane %v2416, 2
    %v2496 = vrot.slane %v2418, 2
    %v2497 = vrot.slane %v2487, 2
    %v2498 = vrot.slane %v2489, 2
    %v2503 = vadd.f32 %v165, %v2495
    %v2504 = vadd.f32 %v167, %v2496
    %v2505 = vadd.f32 %v248, %v2497
    %v2506 = vadd.f32 %v250, %v2498
    %v2507 = vxor.u32 %v2503, 2147483648
    %v2508 = vmul.f32 %v2507, 1.442695
    %v2509 = vpow.pop %v2508
    %v2510 = vadd.f32 %v2509, 1.0
    %v2511 = vrcp.pop %v2510
    %v2512 = vmul.f32 1.0, %v2511
    %v2513 = vxor.u32 %v2504, 2147483648
    %v2514 = vmul.f32 %v2513, 1.442695
    %v2515 = vpow.pop %v2514
    %v2516 = vadd.f32 %v2515, 1.0
    %v2517 = vrcp.pop %v2516
    %v2518 = vmul.f32 1.0, %v2517
    %v2519 = vtanh.pop %v2505
    %v2520 = vxor.u32 %v2506, 2147483648
    %v2521 = vmul.f32 %v2520, 1.442695
    %v2522 = vpow.pop %v2521
    %v2523 = vadd.f32 %v2522, 1.0
    %v2524 = vrcp.pop %v2523
    %v2525 = vmul.f32 1.0, %v2524
    %v2527 = vrot.slane %v2341, 6
    %v2529 = vmul.f32 %v2518, %v2527
    %v2530 = vmul.f32 %v2512, %v2519
    %v2531 = vadd.f32 %v2529, %v2530
    %v2532 = vtanh.pop %v2531
    %v2533 = vmul.f32 %v2525, %v2532
    %2534 = vst.msk [vmem:[#allocation2 + $0xc] sm:$0xc0] %vm1037, %v2533
    %2535 = vst.msk [vmem:[#allocation3 - $0x6] sm:$0xc0] %vm1037, %v2533
    %2536 = vst.msk [vmem:[#allocation5 - $0x6] sm:$0xc0] %vm1037, %v2531
    %v2537 = vld [vmem:[#allocation2] sm:$0xff]
    %v2538 = vld [vmem:[#allocation2 + $0x8] sm:$0xff]
    %v2539 = vld [vmem:[#allocation2 + $0x10] sm:$0xf]
    %v2540 = vld [vmem:[%s6] sm:$0xff]
    %v2541 = vld [vmem:[%s6 + $0x8] sm:$0xff]
    %v2542 = vld [vmem:[%s6 + $0x10] sm:$0xff]
    %v2543 = vld [vmem:[%s6 + $0x18] sm:$0xff]
    %v2544 = vld [vmem:[%s6 + $0x20] sm:$0xff]
    %v2545 = vld [vmem:[%s6 + $0x28] sm:$0xff]
    %v2546 = vld [vmem:[%s6 + $0x30] sm:$0x3]
    %v2547 = vld [vmem:[%s7] sm:$0x1]
    %v2549 = vlaneseq
    %v2550 = vshrl.u32 %v2549, 7
    %v2551 = vsub.s32 0, %v2550
    %v2552 = vrot.slane %v2547, %v2551
    %v2555 = vsel %vm282, %v2537, 0
    %v2558 = vsel %vm282, %v2538, 0
    %v2561 = vsel %vm282, %v2539, 0
    %v2564 = vsel %vm286, %v2546, 0
    %2566 = vmatprep.subr.mxu0 0.0
    %2567 = vmatpush1.msra.mxu0 0.0
    %2568 = vmatprep.subr.mxu0 0.0
    %2569 = vmatpush1.msra.mxu0 0.0
    %2570 = vmatprep.subr.mxu0 0.0
    %2571 = vmatpush1.msra.mxu0 0.0
    %2572 = vmatprep.subr.mxu0 0.0
    %2573 = vmatpush1.msra.mxu0 0.0
    %2574 = vmatprep.subr.mxu0 0.0
    %2575 = vmatpush1.msra.mxu0 0.0
    %2576 = vmatprep.subr.mxu0 0.0
    %2577 = vmatpush1.msra.mxu0 0.0
    %2578 = vmatprep.subr.mxu0 0.0
    %2579 = vmatpush1.msra.mxu0 0.0
    %2580 = vmatprep.subr.mxu0 0.0
    %2581 = vmatpush1.msra.mxu0 0.0
    %2582 = vmatprep.subr.mxu0 0.0
    %2583 = vmatpush1.msra.mxu0 0.0
    %2584 = vmatprep.subr.mxu0 0.0
    %2585 = vmatpush1.msra.mxu0 %v2564
    %2586 = vmatprep.subr.mxu0 0.0
    %2587 = vmatpush1.msra.mxu0 %v2545
    %2588 = vmatprep.subr.mxu0 0.0
    %2589 = vmatpush1.msra.mxu0 %v2544
    %2590 = vmatprep.subr.mxu0 0.0
    %2591 = vmatpush1.msra.mxu0 %v2543
    %2592 = vmatprep.subr.mxu0 0.0
    %2593 = vmatpush1.msra.mxu0 %v2542
    %2594 = vmatprep.subr.mxu0 0.0
    %2595 = vmatpush1.msra.mxu0 %v2541
    %2596 = vmatprep.subr.mxu0 0.0
    %2597 = vmatpush1.msra.mxu0 %v2540
    %2598 = vmatprep.subr.mxu0 0.0
    %2599 = vmatpush2.msra.mxu0 0.0
    %2600 = vmatprep.subr.mxu0 0.0
    %2601 = vmatpush2.msra.mxu0 0.0
    %2602 = vmatprep.subr.mxu0 0.0
    %2603 = vmatpush2.msra.mxu0 0.0
    %2604 = vmatprep.subr.mxu0 0.0
    %2605 = vmatpush2.msra.mxu0 0.0
    %2606 = vmatprep.subr.mxu0 0.0
    %2607 = vmatpush2.msra.mxu0 0.0
    %2608 = vmatprep.subr.mxu0 0.0
    %2609 = vmatpush2.msra.mxu0 0.0
    %2610 = vmatprep.subr.mxu0 0.0
    %2611 = vmatpush2.msra.mxu0 0.0
    %2612 = vmatprep.subr.mxu0 0.0
    %2613 = vmatpush2.msra.mxu0 0.0
    %2614 = vmatprep.subr.mxu0 0.0
    %2615 = vmatpush2.msra.mxu0 0.0
    %2616 = vmatprep.subr.mxu0 0.0
    %2617 = vmatpush2.msra.mxu0 0.0
    %2618 = vmatprep.subr.mxu0 0.0
    %2619 = vmatpush2.msra.mxu0 0.0
    %2620 = vmatprep.subr.mxu0 0.0
    %2621 = vmatpush2.msra.mxu0 0.0
    %2622 = vmatprep.subr.mxu0 0.0
    %2623 = vmatpush2.msra.mxu0 0.0
    %2624 = vmatprep.subr.mxu0 0.0
    %2625 = vmatpush2.msra.mxu0 0.0
    %2626 = vmatprep.subr.mxu0 0.0
    %2627 = vmatpush2.msra.mxu0 0.0
    %2628 = vmatprep.subr.mxu0 0.0
    %2629 = vmatpush2.msra.mxu0 0.0
    %2630 = vmatprep.mubr.f32.mxu0 0.0
    %2631 = vmatmul.mubr.f32.gmra.mxu0 %v2555
    %v2632 = vpop.f32.mrf.mxu0
    %v2633 = vadd.f32 %v2552, %v2632
    %v2634 = vpop.f32.mrf.mxu0
    %2635 = vmatprep.mubr.f32.mxu0 0.0
    %2636 = vmatmul.mubr.f32.gmra.mxu0 %v2558
    %v2637 = vpop.f32.mrf.mxu0
    %v2638 = vadd.f32 %v2552, %v2637
    %v2639 = vpop.f32.mrf.mxu0
    %2640 = vmatprep.mubr.f32.mxu0 0.0
    %2641 = vmatmul.mubr.f32.gmra.mxu0 %v2561
    %v2642 = vpop.f32.mrf.mxu0
    %v2643 = vadd.f32 %v2552, %v2642
    %v2644 = vpop.f32.mrf.mxu0
    %2645 = vdwg.mxu0
    %2646 = vst.msk [vmem:[%s8] sm:$0xff] %vm63, %v2633
    %2647 = vst.msk [vmem:[%s8 + $0x8] sm:$0xff] %vm63, %v2638
    %vm2648 = vcmask 44032
    %2649 = vst.msk [vmem:[%s8 + $0x10] sm:$0xf] %vm2648, %v2643
    // Predicated region
    $region34: #{lstm_model_backwards_forward.1} parent=1 // pred_check
      _
    $region35: #{lstm_model_backwards_forward.1} parent=1 // pred_check_branch
      %2651 = sbr.rel (0) target = $region37
    $region36: #{lstm_model_backwards_forward.1} parent=1 // pred_region
      _
    $region37: #{lstm_model_backwards_forward.1} parent=1 // pred_fallthru
      _
    // Predicated region
    $region38: #{lstm_model_backwards_forward.1} parent=1 // pred_check
      _
    $region39: #{lstm_model_backwards_forward.1} parent=1 // pred_check_branch
      %2653 = sbr.rel (0) target = $region41
    $region40: #{lstm_model_backwards_forward.1} parent=1 // pred_region
      %s2655 = ssub.s32 32, 32
      %2656 = vsyncadd [#allocation4], %s2655
      %s2658 = sshll.u32 [#allocation3], 4
      %s2659 = int_to_ptr.vmem [resolvable:$true] %s2658
      %2661 = dma.vmem_to_hbm [thread:$0]  %s2659, 32, %s9, [#allocation4]
    $region41: #{lstm_model_backwards_forward.1} parent=1 // pred_fallthru
      _
    // Predicated region
    $region42: #{lstm_model_backwards_forward.1} parent=1 // pred_check
      _
    $region43: #{lstm_model_backwards_forward.1} parent=1 // pred_check_branch
      %2663 = sbr.rel (0) target = $region45
    $region44: #{lstm_model_backwards_forward.1} parent=1 // pred_region
      %s2665 = ssub.s32 32, 32
      %2666 = vsyncadd [#allocation6], %s2665
      %s2668 = sshll.u32 [#allocation5], 4
      %s2669 = int_to_ptr.vmem [resolvable:$true] %s2668
      %2671 = dma.vmem_to_hbm [thread:$0]  %s2669, 32, %s10, [#allocation6]
    $region45: #{lstm_model_backwards_forward.1} parent=1 // pred_fallthru
      _
    // Predicated region
    $region46: #{lstm_model_backwards_forward.1} parent=1 // pred_check
      _
    $region47: #{lstm_model_backwards_forward.1} parent=1 // pred_check_branch
      %2673 = sbr.rel (0) target = $region49
    $region48: #{lstm_model_backwards_forward.1} parent=1 // pred_region
      _
    $region49: #{lstm_model_backwards_forward.1} parent=1 // pred_fallthru
      _
    // Predicated region
    $region50: #{lstm_model_backwards_forward.1} parent=1 // pred_check
      _
    $region51: #{lstm_model_backwards_forward.1} parent=1 // pred_check_branch
      %2675 = sbr.rel (0) target = $region53
    $region52: #{lstm_model_backwards_forward.1} parent=1 // pred_region
      %2676 = dma.done [#allocation4], 32
    $region53: #{lstm_model_backwards_forward.1} parent=1 // pred_fallthru
      _
    // Predicated region
    $region54: #{lstm_model_backwards_forward.1} parent=1 // pred_check
      _
    $region55: #{lstm_model_backwards_forward.1} parent=1 // pred_check_branch
      %2678 = sbr.rel (0) target = $region57
    $region56: #{lstm_model_backwards_forward.1} parent=1 // pred_region
      %2679 = dma.done [#allocation6], 32
    $region57: #{lstm_model_backwards_forward.1} parent=1 // pred_fallthru
      _
    %2680 = vsyncpa [#allocation4], 1
    %2681 = vsyncpa [#allocation6], 1

</llo_original>
